<compile_context>
chip_gen: v5e
topology: v5e:2x2
jax: 0.10.0
libtpu: 0.0.40
codegen_flags: <defaults>
</compile_context>

<pallas_src>
import functools

import jax
import jax.numpy as jnp
from jax.experimental import pallas as pl
from jax.experimental.pallas import tpu as pltpu


def alignment_attention_kernel(img_ref, emb_ref, wf_ref, wd_ref, misc_ref,
                               out_ref, xp_ref, *, tanh_bf16):
    # img_ref : (TB, N, F) f32     emb_ref : (TB, D) f32
    # wf_ref  : (F, A) bf16        wd_ref  : (D, A) bf16
    # misc_ref: (8, A) f32  rows: 0=features_att bias, 1=decoder_att bias, 2=full_att weight
    # xp_ref  : (TB, N_pad, F) bf16 scratch (N_pad % 16 == 0)
    tb, n, f = img_ref.shape
    n_pad = xp_ref.shape[1]
    a = wf_ref.shape[1]

    x = img_ref[...]                                       # (TB, N, F) f32

    # In-kernel cast + pad into the bf16 scratch slab (replaces the wrapper HBM pass).
    xp_ref[:, :n, :] = x.astype(jnp.bfloat16)
    if n_pad > n:
        xp_ref[:, n:, :] = jnp.zeros((tb, n_pad - n, f), jnp.bfloat16)
    x_flat = xp_ref[...].reshape(tb * n_pad, f)            # tile-aligned merge (bf16, 48 % 16 == 0)

    bf = misc_ref[0:1, :]                                  # (1, A)
    bd = misc_ref[1:2, :]                                  # (1, A)
    wfull = misc_ref[2:3, :]                               # (1, A)

    # features_att / decoder_att : 2-D MXU matmuls with f32 accumulation.
    att1 = jnp.dot(x_flat, wf_ref[...],
                   preferred_element_type=jnp.float32) + bf          # (TB*N_pad, A) f32
    att2 = jnp.dot(emb_ref[...].astype(jnp.bfloat16), wd_ref[...],
                   preferred_element_type=jnp.float32) + bd          # (TB, A) f32

    s = att1.reshape(tb, n_pad, a) + att2[:, None, :]                # (TB, N_pad, A) f32
    if tanh_bf16:
        h = jnp.tanh(s.astype(jnp.bfloat16))                         # bf16 EUP (v6e/v7x)
    else:
        h = jnp.tanh(s)                                              # f32 (v4/v5e)

    # Lane-dense per-region scores (full_att bias omitted: softmax-invariant).
    att = jnp.sum(h * wfull, axis=-1)                                # (TB, N_pad) f32

    # Mask padded regions, then the softmax pieces (all on ~2 dense vregs).
    region = jax.lax.broadcasted_iota(jnp.int32, att.shape, 1)
    att = jnp.where(region < n, att, jnp.float32(-1e30))
    m = jnp.max(att, axis=1, keepdims=True)                          # (TB, 1)
    p = jnp.exp(att - m)                                             # (TB, N_pad); padded -> 0
    denom = jnp.sum(p, axis=1, keepdims=True)                        # (TB, 1)

    # Deferred normalization: out = (sum_n x * p) / denom.
    w = p[:, :n, None]                                               # (TB, N, 1) small XLU relayout
    out_unnorm = jnp.sum(x * w, axis=1)                              # (TB, F) f32
    out = out_unnorm * pl.reciprocal(denom, approx=True)             # broadcast over F
    out_ref[...] = out.astype(out_ref.dtype)


def _tanh_in_bf16():
    # bf16 VPU/EUP exists on v6e/v7x; on v4/v5 keep tanh in f32.
    try:
        kind = jax.devices()[0].device_kind.lower()
        return not ("v4" in kind or "v5" in kind)
    except Exception:
        return True


def _choose_block_b(batch):
    # Target ~4 grid steps (>=2 per TC on v7x); cap rows/step so default scoped
    # VMEM limits hold on every generation (v5e: 16 MiB).
    for tb in (64, 32, 16, 8, 4, 2, 1):
        if tb <= max(1, batch // 4) and batch % tb == 0:
            return tb
    return 1


def alignment_attention(image_features, embed_input, params, *, block_b=None):
    B, N, F = image_features.shape
    D = embed_input.shape[-1]
    A = params["wf"].shape[0]                 # PyTorch nn.Linear weight is (out, in)
    if block_b is None:
        block_b = _choose_block_b(B)
    if B % block_b != 0:
        raise ValueError(f"batch {B} must be divisible by block_b {block_b}")

    # Region axis padded (in-kernel) to a multiple of 16 for clean bf16 sublane tiling.
    n_pad = ((N + 15) // 16) * 16

    # Tiny wrapper-side prep: weight transposes/casts (a few KiB) and packing the
    # three 1-row operands into a single (8, A) block.  No pass over image_features.
    wf = params["wf"].T.astype(jnp.bfloat16)                    # (F, A)
    wd = params["wd"].T.astype(jnp.bfloat16)                    # (D, A)
    misc = jnp.zeros((8, A), jnp.float32)
    misc = misc.at[0].set(params["bf"].astype(jnp.float32))
    misc = misc.at[1].set(params["bd"].astype(jnp.float32))
    misc = misc.at[2].set(params["wfull"].reshape(A).astype(jnp.float32))

    kernel = functools.partial(alignment_attention_kernel, tanh_bf16=_tanh_in_bf16())

    cost = pl.CostEstimate(
        flops=2 * B * n_pad * F * A + 2 * B * D * A + 2 * B * n_pad * A + 2 * B * N * F,
        transcendentals=B * n_pad * A,
        bytes_accessed=(B * N * F + B * D + B * F + 8 * A) * 4 + (F * A + D * A) * 2,
    )

    out = pl.pallas_call(
        kernel,
        out_shape=jax.ShapeDtypeStruct((B, F), jnp.float32),
        grid=(B // block_b,),
        in_specs=[
            pl.BlockSpec((block_b, N, F), lambda b: (b, 0, 0)),   # image_features (f32, unpadded)
            pl.BlockSpec((block_b, D), lambda b: (b, 0)),         # embed_input
            pl.BlockSpec((F, A), lambda b: (0, 0)),               # features_att W^T (bf16)
            pl.BlockSpec((D, A), lambda b: (0, 0)),               # decoder_att  W^T (bf16)
            pl.BlockSpec((8, A), lambda b: (0, 0)),               # packed bf / bd / wfull
        ],
        out_specs=pl.BlockSpec((block_b, F), lambda b: (b, 0)),
        scratch_shapes=[pltpu.VMEM((block_b, n_pad, F), jnp.bfloat16)],
        compiler_params=pltpu.CompilerParams(dimension_semantics=("parallel",)),
        cost_estimate=cost,
    )(image_features, embed_input, wf, wd, misc)
    return out


def reference(image_features, embed_input, params):
    att1 = image_features @ params["wf"].T + params["bf"]          # (B, N, A)
    att2 = embed_input @ params["wd"].T + params["bd"]             # (B, A)
    h = jnp.tanh(att1 + att2[:, None, :])                          # (B, N, A)
    att = (h @ params["wfull"].T + params["bfull"])[..., 0]        # (B, N)
    alpha = jax.nn.softmax(att, axis=1)                            # (B, N)
    return jnp.sum(image_features * alpha[..., None], axis=1)      # (B, F)


if __name__ == "__main__":
    # 36 regions per the module; lane-friendly feature/decoder/attention dims; batch
    # large enough to give 4 grid steps (>=2 per v7x TensorCore).
    B, N, F, D, A = 64, 36, 128, 128, 128

    key = jax.random.PRNGKey(0)
    k_img, k_emb, k1, k2, k3, k4, k5, k6 = jax.random.split(key, 8)

    image_features = jax.random.normal(k_img, (B, N, F), dtype=jnp.float32)
    embed_input = jax.random.normal(k_emb, (B, D), dtype=jnp.float32)

    # Deterministic synthetic parameters (PyTorch nn.Linear shapes: (out, in)).
    params = {
        "wf": 0.1 * jax.random.normal(k1, (A, F), dtype=jnp.float32),
        "bf": 0.1 * jax.random.normal(k2, (A,), dtype=jnp.float32),
        "wd": 0.1 * jax.random.normal(k3, (A, D), dtype=jnp.float32),
        "bd": 0.1 * jax.random.normal(k4, (A,), dtype=jnp.float32),
        "wfull": 0.1 * jax.random.normal(k5, (1, A), dtype=jnp.float32),
        "bfull": 0.1 * jax.random.normal(k6, (1,), dtype=jnp.float32),
    }

    out = alignment_attention(image_features, embed_input, params)
    out = jax.block_until_ready(out)

    ref = reference(image_features, embed_input, params)
    assert out.shape == (B, F)
    # bf16 matmul/tanh path + approx reciprocal -> loosened tolerance vs pure-f32 reference.
    assert jnp.allclose(out, ref, atol=5e-2, rtol=5e-2), (
        float(jnp.max(jnp.abs(out - ref))))

    print("KERNEL_OK")
</pallas_src>

<mosaic_0001>
module attributes {stable_mosaic.version = 11 : i64} {
  func.func @alignment_attention_kernel(%arg0: i32, %arg1: memref<16x36x128xf32, #tpu.memory_space<vmem>>, %arg2: memref<16x128xf32, #tpu.memory_space<vmem>>, %arg3: memref<128x128xbf16, #tpu.memory_space<vmem>>, %arg4: memref<128x128xbf16, #tpu.memory_space<vmem>>, %arg5: memref<8x128xf32, #tpu.memory_space<vmem>>, %arg6: memref<16x128xf32, #tpu.memory_space<vmem>>, %arg7: memref<16x48x128xbf16, #tpu.memory_space<vmem>>) attributes {dimension_semantics = [#tpu.dimension_semantics<parallel>], iteration_bounds = array<i64: 4>, scalar_prefetch = 0 : i64, scratch_operands = 1 : i64, tpu.core_type = #tpu.core_type<tc>, window_params = [{transform_indices = @transform_0, window_bounds = array<i64: 16, 36, 128>}, {transform_indices = @transform_1, window_bounds = array<i64: 16, 128>}, {pipeline_mode = #tpu.pipeline_mode<synchronous>, transform_indices = @transform_2, window_bounds = array<i64: 128, 128>}, {pipeline_mode = #tpu.pipeline_mode<synchronous>, transform_indices = @transform_3, window_bounds = array<i64: 128, 128>}, {pipeline_mode = #tpu.pipeline_mode<synchronous>, transform_indices = @transform_4, window_bounds = array<i64: 8, 128>}, {transform_indices = @transform_5, window_bounds = array<i64: 16, 128>}]} {
    %c0 = arith.constant 0 : index
    %c0_0 = arith.constant 0 : index
    %c0_1 = arith.constant 0 : index
    %0 = vector.load %arg1[%c0, %c0_0, %c0_1] : memref<16x36x128xf32, #tpu.memory_space<vmem>>, vector<16x36x128xf32>
    %1 = arith.truncf %0 : vector<16x36x128xf32> to vector<16x36x128xbf16>
    %c0_2 = arith.constant 0 : index
    %c0_3 = arith.constant 0 : index
    %c0_4 = arith.constant 0 : index
    %2 = vector.load %arg7[%c0_2, %c0_3, %c0_4] : memref<16x48x128xbf16, #tpu.memory_space<vmem>>, vector<16x36x128xbf16>
    tpu.vector_store %arg7[%c0_2, %c0_3, %c0_4], %1 {strides = array<i32>} : memref<16x48x128xbf16, #tpu.memory_space<vmem>>, vector<16x36x128xbf16>,
    %cst = arith.constant 0.000000e+00 : bf16
    %3 = vector.broadcast %cst : bf16 to vector<16x12x128xbf16>
    %c0_5 = arith.constant 0 : index
    %c36 = arith.constant 36 : index
    %c0_6 = arith.constant 0 : index
    %4 = vector.load %arg7[%c0_5, %c36, %c0_6] : memref<16x48x128xbf16, #tpu.memory_space<vmem>>, vector<16x12x128xbf16>
    tpu.vector_store %arg7[%c0_5, %c36, %c0_6], %3 {strides = array<i32>} : memref<16x48x128xbf16, #tpu.memory_space<vmem>>, vector<16x12x128xbf16>,
    %c0_7 = arith.constant 0 : index
    %c0_8 = arith.constant 0 : index
    %c0_9 = arith.constant 0 : index
    %5 = vector.load %arg7[%c0_7, %c0_8, %c0_9] : memref<16x48x128xbf16, #tpu.memory_space<vmem>>, vector<16x48x128xbf16>
    %6 = vector.shape_cast %5 : vector<16x48x128xbf16> to vector<768x128xbf16>
    %c0_10 = arith.constant 0 : index
    %c0_11 = arith.constant 0 : index
    %7 = vector.load %arg5[%c0_10, %c0_11] : memref<8x128xf32, #tpu.memory_space<vmem>>, vector<1x128xf32>
    %c1 = arith.constant 1 : index
    %c0_12 = arith.constant 0 : index
    %8 = vector.load %arg5[%c1, %c0_12] : memref<8x128xf32, #tpu.memory_space<vmem>>, vector<1x128xf32>
    %c2 = arith.constant 2 : index
    %c0_13 = arith.constant 0 : index
    %9 = vector.load %arg5[%c2, %c0_13] : memref<8x128xf32, #tpu.memory_space<vmem>>, vector<1x128xf32>
    %c0_14 = arith.constant 0 : index
    %c0_15 = arith.constant 0 : index
    %10 = vector.load %arg3[%c0_14, %c0_15] : memref<128x128xbf16, #tpu.memory_space<vmem>>, vector<128x128xbf16>
    %cst_16 = arith.constant dense<0.000000e+00> : vector<768x128xf32>
    %11 = tpu.matmul %6, %10, %cst_16 {dimension_numbers = #tpu.dot_dimension_numbers<[1], [0], [0], [1], [0, 0, 1, 1], [], []>} : vector<768x128xbf16>, vector<128x128xbf16>, vector<768x128xf32> -> vector<768x128xf32>
    %12 = vector.broadcast %7 : vector<1x128xf32> to vector<768x128xf32>
    %13 = arith.addf %11, %12 : vector<768x128xf32>
    %c0_17 = arith.constant 0 : index
    %c0_18 = arith.constant 0 : index
    %14 = vector.load %arg2[%c0_17, %c0_18] : memref<16x128xf32, #tpu.memory_space<vmem>>, vector<16x128xf32>
    %15 = arith.truncf %14 : vector<16x128xf32> to vector<16x128xbf16>
    %c0_19 = arith.constant 0 : index
    %c0_20 = arith.constant 0 : index
    %16 = vector.load %arg4[%c0_19, %c0_20] : memref<128x128xbf16, #tpu.memory_space<vmem>>, vector<128x128xbf16>
    %cst_21 = arith.constant dense<0.000000e+00> : vector<16x128xf32>
    %17 = tpu.matmul %15, %16, %cst_21 {dimension_numbers = #tpu.dot_dimension_numbers<[1], [0], [0], [1], [0, 0, 1, 1], [], []>} : vector<16x128xbf16>, vector<128x128xbf16>, vector<16x128xf32> -> vector<16x128xf32>
    %18 = vector.broadcast %8 : vector<1x128xf32> to vector<16x128xf32>
    %19 = arith.addf %17, %18 : vector<16x128xf32>
    %20 = vector.shape_cast %13 : vector<768x128xf32> to vector<16x48x128xf32>
    %21 = vector.shape_cast %19 : vector<16x128xf32> to vector<16x1x128xf32>
    %22 = vector.broadcast %21 : vector<16x1x128xf32> to vector<16x48x128xf32>
    %23 = arith.addf %20, %22 : vector<16x48x128xf32>
    %24 = arith.truncf %23 : vector<16x48x128xf32> to vector<16x48x128xbf16>
    %25 = math.tanh %24 : vector<16x48x128xbf16>
    %26 = arith.extf %25 : vector<16x48x128xbf16> to vector<16x48x128xf32>
    %27 = vector.shape_cast %9 : vector<1x128xf32> to vector<1x1x128xf32>
    %28 = vector.broadcast %27 : vector<1x1x128xf32> to vector<16x48x128xf32>
    %29 = arith.mulf %26, %28 : vector<16x48x128xf32>
    %cst_22 = arith.constant dense<0.000000e+00> : vector<16x48xf32>
    %30 = vector.multi_reduction <add>, %29, %cst_22 [2] : vector<16x48x128xf32> to vector<16x48xf32>
    %31 = tpu.iota {dimensions = array<i32: 1>} : vector<16x48xi32>
    %c36_i32 = arith.constant 36 : i32
    %32 = vector.broadcast %c36_i32 : i32 to vector<16x48xi32>
    %33 = arith.cmpi slt, %31, %32 : vector<16x48xi32>
    %cst_23 = arith.constant -1.000000e+30 : f32
    %34 = vector.broadcast %cst_23 : f32 to vector<16x48xf32>
    %35 = arith.select %33, %30, %34 : vector<16x48xi1>, vector<16x48xf32>
    %cst_24 = arith.constant dense<0xFF800000> : vector<16xf32>
    %36 = vector.multi_reduction <maximumf>, %35, %cst_24 [1] : vector<16x48xf32> to vector<16xf32>
    %37 = vector.shape_cast %36 : vector<16xf32> to vector<16x1xf32>
    %38 = vector.broadcast %37 : vector<16x1xf32> to vector<16x48xf32>
    %39 = arith.subf %35, %38 : vector<16x48xf32>
    %40 = math.exp %39 : vector<16x48xf32>
    %cst_25 = arith.constant dense<0.000000e+00> : vector<16xf32>
    %41 = vector.multi_reduction <add>, %40, %cst_25 [1] : vector<16x48xf32> to vector<16xf32>
    %42 = vector.shape_cast %41 : vector<16xf32> to vector<16x1xf32>
    %43 = vector.extract_strided_slice %40 {offsets = [0, 0], sizes = [16, 36], strides = [1, 1]} : vector<16x48xf32> to vector<16x36xf32>
    %44 = vector.shape_cast %43 : vector<16x36xf32> to vector<16x36x1xf32>
    %45 = vector.broadcast %44 : vector<16x36x1xf32> to vector<16x36x128xf32>
    %46 = arith.mulf %0, %45 : vector<16x36x128xf32>
    %cst_26 = arith.constant dense<0.000000e+00> : vector<16x128xf32>
    %47 = vector.multi_reduction <add>, %46, %cst_26 [1] : vector<16x36x128xf32> to vector<16x128xf32>
    %48 = tpu.reciprocal %42 {approx = true} : vector<16x1xf32> -> vector<16x1xf32>
    %49 = vector.broadcast %48 : vector<16x1xf32> to vector<16x128xf32>
    %50 = arith.mulf %47, %49 : vector<16x128xf32>
    %c0_27 = arith.constant 0 : index
    %c0_28 = arith.constant 0 : index
    %51 = vector.load %arg6[%c0_27, %c0_28] : memref<16x128xf32, #tpu.memory_space<vmem>>, vector<16x128xf32>
    tpu.vector_store %arg6[%c0_27, %c0_28], %50 {strides = array<i32>} : memref<16x128xf32, #tpu.memory_space<vmem>>, vector<16x128xf32>,
    return
  }
  func.func @transform_0(%arg0: i32) -> (i32, i32, i32) {
    %c0_i32 = arith.constant 0 : i32
    %c0_i32_0 = arith.constant 0 : i32
    %c0_i32_1 = arith.constant 0 : i32
    return %arg0, %c0_i32, %c0_i32_0 : i32, i32, i32
  }
  func.func @transform_1(%arg0: i32) -> (i32, i32) {
    %c0_i32 = arith.constant 0 : i32
    %c0_i32_0 = arith.constant 0 : i32
    return %arg0, %c0_i32 : i32, i32
  }
  func.func @transform_2(%arg0: i32) -> (i32, i32) {
    %c0_i32 = arith.constant 0 : i32
    %c0_i32_0 = arith.constant 0 : i32
    %c0_i32_1 = arith.constant 0 : i32
    return %c0_i32, %c0_i32_0 : i32, i32
  }
  func.func @transform_3(%arg0: i32) -> (i32, i32) {
    %c0_i32 = arith.constant 0 : i32
    %c0_i32_0 = arith.constant 0 : i32
    %c0_i32_1 = arith.constant 0 : i32
    return %c0_i32, %c0_i32_0 : i32, i32
  }
  func.func @transform_4(%arg0: i32) -> (i32, i32) {
    %c0_i32 = arith.constant 0 : i32
    %c0_i32_0 = arith.constant 0 : i32
    %c0_i32_1 = arith.constant 0 : i32
    return %c0_i32, %c0_i32_0 : i32, i32
  }
  func.func @transform_5(%arg0: i32) -> (i32, i32) {
    %c0_i32 = arith.constant 0 : i32
    %c0_i32_0 = arith.constant 0 : i32
    return %arg0, %c0_i32 : i32, i32
  }
}

</mosaic_0001>

<llo_original>
// kernel: tpu_custom_call.1
$region0: #{tpu_custom_call.1}
  #allocation0 [shape = 'u32[]', space=smem, size = 0x4, offset = 0x4, fixed_abs, tag = 'smem constant byte address 0x4 - core index']
  #allocation1 [shape = 'u32[72,128]{1,0:T(1,128)}', space=vmem, size = 0x9000, scoped, tag = 'internal scratch']
  #allocation2 [shape = 'bf16[16,48,128]{2,1,0:T(8,128)(2,1)}', space=vmem, size = 0x30000, scoped, tag = 'scratch operand']
  %s0 = inlined_call_operand.vmem [shape: f32[64,36,128], index: 0, kind: input, shape index: {}]
  %s1 = inlined_call_operand.vmem [shape: f32[64,128], index: 1, kind: input, shape index: {}]
  %s2 = inlined_call_operand.vmem [shape: bf16[128,128], index: 2, kind: input, shape index: {}]
  %s3 = inlined_call_operand.vmem [shape: bf16[128,128], index: 3, kind: input, shape index: {}]
  %s4 = inlined_call_operand.vmem [shape: f32[8,128], index: 4, kind: input, shape index: {}]
  %s5 = inlined_call_operand.hbm [shape: f32[64,128], index: 5, kind: output, shape index: {}]
  %s6 = sld [smem:[#allocation0]]
  $region53: #{tpu_custom_call.1} parent=0
    _
  %s8 = ssub.s32 1, %s6
  %s9 = scalar_select 0, %s8, %s6
  $region1: #{tpu_custom_call.1} parent=0
    #allocation3 [shape = 'u8[16384]{0}', space=vmem, size = 0x4000, scoped, tag = 'output window, operand 0']
    #allocation4 [shape = 's32[2]{0}', space=sflag, size = 0x8, scoped, tag = 'scoped memory for tpu_custom_call.1']
    %10 = vsyncpa [#allocation4], 0
    %s11 = scalar_lea.sflag [#allocation4], 1
    %12 = vsyncpa %s11, 0
    loop: start=0, step=1, limit=6
    $region2: #{tpu_custom_call.1} parent=1 // loop_pre_header
      _
    $region3: #{tpu_custom_call.1} parent=1 // loop_header
      %s14 = sphi 0, %s18
      %p15 = scmp.ge.s32.totalorder %s14, 6
      %s24 = sphi 0, %s26
      %s27 = sphi 0, %s24
      %s28 = sphi 0, %s27
      %s44 = sphi 0, %s28
      %s50 = sphi 0, %s52
      %s53 = sphi 0, %s50
      %s54 = sphi 0, %s53
      %s70 = sphi 0, %s54
      %s74 = sphi 0, %s74
      %s76 = sphi 0, %s74
      %s77 = sphi 0, %s76
      %s91 = sphi 0, %s77
      %s95 = sphi 0, %s95
      %s97 = sphi 0, %s95
      %s98 = sphi 0, %s97
      %s112 = sphi 0, %s98
      %s116 = sphi 0, %s116
      %s118 = sphi 0, %s116
      %s119 = sphi 0, %s118
      %s133 = sphi 0, %s119
      %s139 = sphi 0, %s141
      %s142 = sphi 0, %s139
      %s143 = sphi 0, %s142
      %s159 = sphi 0, %s143
    $region4: #{tpu_custom_call.1} parent=1 // loop_header_branch
      %17 = sbr.rel (%p15) target = $region8
    $region5: #{tpu_custom_call.1} parent=1 // loop_body
      %s19 = ssub.s32 %s14, 1
      %s20 = ssub.s32 %s14, 2
      %s21 = sadd.s32 %s14, 1
      %s22 = ssub.s32 %s14, %s21
      %p23 = scmp.eq.s32.totalorder %s22, 0
      %s25 = sadd.s32 %s24, 1
      %s26 = scalar_select %p23, %s24, %s25
      %p29 = pneg %p23
      %p30 = scmp.eq.s32.totalorder %s14, 3
      %p31 = por %p29, %p30
      %p32 = scmp.ne.s32.totalorder %s24, %s27
      %p33 = scmp.eq.s32.totalorder %s14, 0
      %p34 = por %p32, %p33
      %p35 = scmp.ne.s32.totalorder %s24, %s27
      %p36 = scmp.eq.s32.totalorder %s19, 3
      %p37 = por %p35, %p36
      %p38 = scmp.ne.s32.totalorder %s27, %s28
      %p39 = scmp.eq.s32.totalorder %s19, 0
      %p40 = por %p38, %p39
      %p41 = scmp.ne.s32.totalorder %s27, %s28
      %p42 = scmp.eq.s32.totalorder %s20, 3
      %p43 = por %p41, %p42
      %p45 = scmp.ne.s32.totalorder %s28, %s44
      %p46 = scmp.eq.s32.totalorder %s20, 0
      %p47 = por %p45, %p46
      %s48 = ssub.s32 %s14, %s21
      %p49 = scmp.eq.s32.totalorder %s48, 0
      %s51 = sadd.s32 %s50, 1
      %s52 = scalar_select %p49, %s50, %s51
      %p55 = pneg %p49
      %p56 = scmp.eq.s32.totalorder %s14, 3
      %p57 = por %p55, %p56
      %p58 = scmp.ne.s32.totalorder %s50, %s53
      %p59 = scmp.eq.s32.totalorder %s14, 0
      %p60 = por %p58, %p59
      %p61 = scmp.ne.s32.totalorder %s50, %s53
      %p62 = scmp.eq.s32.totalorder %s19, 3
      %p63 = por %p61, %p62
      %p64 = scmp.ne.s32.totalorder %s53, %s54
      %p65 = scmp.eq.s32.totalorder %s19, 0
      %p66 = por %p64, %p65
      %p67 = scmp.ne.s32.totalorder %s53, %s54
      %p68 = scmp.eq.s32.totalorder %s20, 3
      %p69 = por %p67, %p68
      %p71 = scmp.ne.s32.totalorder %s54, %s70
      %p72 = scmp.eq.s32.totalorder %s20, 0
      %p73 = por %p71, %p72
      %s75 = sadd.s32 %s74, 1
      %p78 = scmp.eq.s32.totalorder %s14, 3
      %p79 = scmp.ne.s32.totalorder %s74, %s76
      %p80 = scmp.eq.s32.totalorder %s14, 0
      %p81 = por %p79, %p80
      %p82 = scmp.ne.s32.totalorder %s74, %s76
      %p83 = scmp.eq.s32.totalorder %s19, 3
      %p84 = por %p82, %p83
      %p85 = scmp.ne.s32.totalorder %s76, %s77
      %p86 = scmp.eq.s32.totalorder %s19, 0
      %p87 = por %p85, %p86
      %p88 = scmp.ne.s32.totalorder %s76, %s77
      %p89 = scmp.eq.s32.totalorder %s20, 3
      %p90 = por %p88, %p89
      %p92 = scmp.ne.s32.totalorder %s77, %s91
      %p93 = scmp.eq.s32.totalorder %s20, 0
      %p94 = por %p92, %p93
      %s96 = sadd.s32 %s95, 1
      %p99 = scmp.eq.s32.totalorder %s14, 3
      %p100 = scmp.ne.s32.totalorder %s95, %s97
      %p101 = scmp.eq.s32.totalorder %s14, 0
      %p102 = por %p100, %p101
      %p103 = scmp.ne.s32.totalorder %s95, %s97
      %p104 = scmp.eq.s32.totalorder %s19, 3
      %p105 = por %p103, %p104
      %p106 = scmp.ne.s32.totalorder %s97, %s98
      %p107 = scmp.eq.s32.totalorder %s19, 0
      %p108 = por %p106, %p107
      %p109 = scmp.ne.s32.totalorder %s97, %s98
      %p110 = scmp.eq.s32.totalorder %s20, 3
      %p111 = por %p109, %p110
      %p113 = scmp.ne.s32.totalorder %s98, %s112
      %p114 = scmp.eq.s32.totalorder %s20, 0
      %p115 = por %p113, %p114
      %s117 = sadd.s32 %s116, 1
      %p120 = scmp.eq.s32.totalorder %s14, 3
      %p121 = scmp.ne.s32.totalorder %s116, %s118
      %p122 = scmp.eq.s32.totalorder %s14, 0
      %p123 = por %p121, %p122
      %p124 = scmp.ne.s32.totalorder %s116, %s118
      %p125 = scmp.eq.s32.totalorder %s19, 3
      %p126 = por %p124, %p125
      %p127 = scmp.ne.s32.totalorder %s118, %s119
      %p128 = scmp.eq.s32.totalorder %s19, 0
      %p129 = por %p127, %p128
      %p130 = scmp.ne.s32.totalorder %s118, %s119
      %p131 = scmp.eq.s32.totalorder %s20, 3
      %p132 = por %p130, %p131
      %p134 = scmp.ne.s32.totalorder %s119, %s133
      %p135 = scmp.eq.s32.totalorder %s20, 0
      %p136 = por %p134, %p135
      %s137 = ssub.s32 %s14, %s21
      %p138 = scmp.eq.s32.totalorder %s137, 0
      %s140 = sadd.s32 %s139, 1
      %s141 = scalar_select %p138, %s139, %s140
      %p144 = pneg %p138
      %p145 = scmp.eq.s32.totalorder %s14, 3
      %p146 = por %p144, %p145
      %p147 = scmp.ne.s32.totalorder %s139, %s142
      %p148 = scmp.eq.s32.totalorder %s14, 0
      %p149 = por %p147, %p148
      %p150 = scmp.ne.s32.totalorder %s139, %s142
      %p151 = scmp.eq.s32.totalorder %s19, 3
      %p152 = por %p150, %p151
      %p153 = scmp.ne.s32.totalorder %s142, %s143
      %p154 = scmp.eq.s32.totalorder %s19, 0
      %p155 = por %p153, %p154
      %p156 = scmp.ne.s32.totalorder %s142, %s143
      %p157 = scmp.eq.s32.totalorder %s20, 3
      %p158 = por %p156, %p157
      %p160 = scmp.ne.s32.totalorder %s143, %s159
      %p161 = scmp.eq.s32.totalorder %s20, 0
      %p162 = por %p160, %p161
      %p163 = scmp.le.s32.totalorder 1, %s14
      %p164 = scmp.lt.s32.totalorder %s14, 5
      %p165 = pnand %p163, %p164
      %p166 = pneg %p165
      // Predicated region
      $region9: #{tpu_custom_call.1} parent=5 // pred_check
        _
      $region10: #{tpu_custom_call.1} parent=5 // pred_check_branch
        %168 = sbr.rel (%p165) target = $region12
      $region11: #{tpu_custom_call.1} parent=5 // pred_region
        %s169 = ssub.s32 %s14, 1
        // Predicated region
        $region13: #{tpu_custom_call.1} parent=11 // pred_check
          %p170 = pneg %p87
        $region14: #{tpu_custom_call.1} parent=11 // pred_check_branch
          %172 = sbr.rel (%p170) target = $region16
        $region15: #{tpu_custom_call.1} parent=11 // pred_region
          _
        $region16: #{tpu_custom_call.1} parent=11 // pred_fallthru
          _
        // Predicated region
        $region17: #{tpu_custom_call.1} parent=11 // pred_check
          %p173 = pneg %p108
        $region18: #{tpu_custom_call.1} parent=11 // pred_check_branch
          %175 = sbr.rel (%p173) target = $region20
        $region19: #{tpu_custom_call.1} parent=11 // pred_region
          _
        $region20: #{tpu_custom_call.1} parent=11 // pred_fallthru
          _
        // Predicated region
        $region21: #{tpu_custom_call.1} parent=11 // pred_check
          %p176 = pneg %p129
        $region22: #{tpu_custom_call.1} parent=11 // pred_check_branch
          %178 = sbr.rel (%p176) target = $region24
        $region23: #{tpu_custom_call.1} parent=11 // pred_region
          _
        $region24: #{tpu_custom_call.1} parent=11 // pred_fallthru
          _
      $region12: #{tpu_custom_call.1} parent=5 // pred_fallthru
        _
      %p179 = scmp.lt.s32.totalorder %s14, 4
      // Predicated region
      $region25: #{tpu_custom_call.1} parent=5 // pred_check
        %p180 = pneg %p179
      $region26: #{tpu_custom_call.1} parent=5 // pred_check_branch
        %182 = sbr.rel (%p180) target = $region28
      $region27: #{tpu_custom_call.1} parent=5 // pred_region
        // Predicated region
        $region29: #{tpu_custom_call.1} parent=27 // pred_check
          %p183 = pneg %p34
        $region30: #{tpu_custom_call.1} parent=27 // pred_check_branch
          %185 = sbr.rel (%p183) target = $region32
        $region31: #{tpu_custom_call.1} parent=27 // pred_region
          %s186 = smul.u32 16, %s14
          %p187 = scmp.lt.s32.totalorder %s186, 63
          %s188 = scalar_select %p187, %s186, 63
          %s189 = smul.addr %s188, 5
          %s190 = smul.addr %s189, 8
          %s191 = scalar_lea.vmem %s0, %s190
          %s192 = smul.u32 16, %s14
        $region32: #{tpu_custom_call.1} parent=27 // pred_fallthru
          _
        // Predicated region
        $region33: #{tpu_custom_call.1} parent=27 // pred_check
          %p193 = pneg %p60
        $region34: #{tpu_custom_call.1} parent=27 // pred_check_branch
          %195 = sbr.rel (%p193) target = $region36
        $region35: #{tpu_custom_call.1} parent=27 // pred_region
          %s196 = smul.u32 2, %s14
          %p197 = scmp.lt.s32.totalorder %s196, 7
          %s198 = scalar_select %p197, %s196, 7
          %s199 = smul.addr %s198, 8
          %s200 = scalar_lea.vmem %s1, %s199
          %s201 = smul.u32 2, %s14
        $region36: #{tpu_custom_call.1} parent=27 // pred_fallthru
          _
      $region28: #{tpu_custom_call.1} parent=5 // pred_fallthru
        _
      %p202 = scmp.le.s32.totalorder 1, %s14
      %p203 = scmp.lt.s32.totalorder %s14, 5
      %p204 = pnand %p202, %p203
      %p205 = pneg %p204
      // Predicated region
      $region37: #{tpu_custom_call.1} parent=5 // pred_check
        _
      $region38: #{tpu_custom_call.1} parent=5 // pred_check_branch
        %207 = sbr.rel (%p204) target = $region40
      $region39: #{tpu_custom_call.1} parent=5 // pred_region
        %s208 = ssub.s32 %s14, 1
        %s209 = smul.u32 16, %s19
        %p210 = scmp.lt.s32.totalorder %s209, 63
        %s211 = scalar_select %p210, %s209, 63
        %s212 = smul.addr %s211, 5
        %s213 = smul.addr %s212, 8
        %s214 = scalar_lea.vmem %s0, %s213
        %p215 = pneg %p40
        %p216 = pneg %p37
        %s217 = smul.u32 2, %s19
        %p218 = scmp.lt.s32.totalorder %s217, 7
        %s219 = scalar_select %p218, %s217, 7
        %s220 = smul.addr %s219, 8
        %s221 = scalar_lea.vmem %s1, %s220
        %p222 = pneg %p66
        %p223 = pneg %p63
        %p224 = pneg %p87
        %p225 = pneg %p84
        %p226 = pneg %p108
        %p227 = pneg %p105
        %p228 = pneg %p129
        %p229 = pneg %p126
        %p230 = pneg %p155
        %p231 = pneg %p152
        %s232 = sand.u32 %s142, 1
        %s233 = scalar_lea.sflag [#allocation4], %s232
        %s234 = sand.u32 %s142, 1
        %s235 = smul.addr %s234, 16
        %s236 = scalar_lea.vmem [#allocation3], %s235
        %s237 = smul.u32 16, %s19
        %p238 = scmp.lt.s32.totalorder %s237, 63
        %s239 = scalar_select %p238, %s237, 63
        %s240 = smul.addr %s239, 5
        %s241 = smul.addr %s240, 8
        %s242 = scalar_lea.vmem %s0, %s241
        %s243 = smul.u32 16, %s19
        %s244 = smul.u32 2, %s19
        %p245 = scmp.lt.s32.totalorder %s244, 7
        %s246 = scalar_select %p245, %s244, 7
        %s247 = smul.addr %s246, 8
        %s248 = scalar_lea.vmem %s1, %s247
        %s249 = smul.u32 2, %s19
        %s250 = smul.u32 2, %s19
        %v252 = vld [vmem:[%s242] sm:$0xff]
        %v253 = vld [vmem:[%s242 + $0x8] sm:$0xff]
        %v254 = vld [vmem:[%s242 + $0x10] sm:$0xff]
        %v255 = vld [vmem:[%s242 + $0x18] sm:$0xff]
        %v256 = vld [vmem:[%s242 + $0x20] sm:$0xf]
        %v257 = vld [vmem:[%s242 + $0x28] sm:$0xff]
        %v258 = vld [vmem:[%s242 + $0x30] sm:$0xff]
        %v259 = vld [vmem:[%s242 + $0x38] sm:$0xff]
        %v260 = vld [vmem:[%s242 + $0x40] sm:$0xff]
        %v261 = vld [vmem:[%s242 + $0x48] sm:$0xf]
        %v262 = vld [vmem:[%s242 + $0x50] sm:$0xff]
        %v263 = vld [vmem:[%s242 + $0x58] sm:$0xff]
        %v264 = vld [vmem:[%s242 + $0x60] sm:$0xff]
        %v265 = vld [vmem:[%s242 + $0x68] sm:$0xff]
        %v266 = vld [vmem:[%s242 + $0x70] sm:$0xf]
        %v267 = vld [vmem:[%s242 + $0x78] sm:$0xff]
        %v268 = vld [vmem:[%s242 + $0x80] sm:$0xff]
        %v269 = vld [vmem:[%s242 + $0x88] sm:$0xff]
        %v270 = vld [vmem:[%s242 + $0x90] sm:$0xff]
        %v271 = vld [vmem:[%s242 + $0x98] sm:$0xf]
        %v272 = vld [vmem:[%s242 + $0xa0] sm:$0xff]
        %v273 = vld [vmem:[%s242 + $0xa8] sm:$0xff]
        %v274 = vld [vmem:[%s242 + $0xb0] sm:$0xff]
        %v275 = vld [vmem:[%s242 + $0xb8] sm:$0xff]
        %v276 = vld [vmem:[%s242 + $0xc0] sm:$0xf]
        %v277 = vld [vmem:[%s242 + $0xc8] sm:$0xff]
        %v278 = vld [vmem:[%s242 + $0xd0] sm:$0xff]
        %v279 = vld [vmem:[%s242 + $0xd8] sm:$0xff]
        %v280 = vld [vmem:[%s242 + $0xe0] sm:$0xff]
        %v281 = vld [vmem:[%s242 + $0xe8] sm:$0xf]
        %v282 = vld [vmem:[%s242 + $0xf0] sm:$0xff]
        %v283 = vld [vmem:[%s242 + $0xf8] sm:$0xff]
        %v284 = vld [vmem:[%s242 + $0x100] sm:$0xff]
        %v285 = vld [vmem:[%s242 + $0x108] sm:$0xff]
        %v286 = vld [vmem:[%s242 + $0x110] sm:$0xf]
        %v287 = vld [vmem:[%s242 + $0x118] sm:$0xff]
        %v288 = vld [vmem:[%s242 + $0x120] sm:$0xff]
        %v289 = vld [vmem:[%s242 + $0x128] sm:$0xff]
        %v290 = vld [vmem:[%s242 + $0x130] sm:$0xff]
        %v291 = vld [vmem:[%s242 + $0x138] sm:$0xf]
        %v292 = vld [vmem:[%s242 + $0x140] sm:$0xff]
        %v293 = vld [vmem:[%s242 + $0x148] sm:$0xff]
        %v294 = vld [vmem:[%s242 + $0x150] sm:$0xff]
        %v295 = vld [vmem:[%s242 + $0x158] sm:$0xff]
        %v296 = vld [vmem:[%s242 + $0x160] sm:$0xf]
        %v297 = vld [vmem:[%s242 + $0x168] sm:$0xff]
        %v298 = vld [vmem:[%s242 + $0x170] sm:$0xff]
        %v299 = vld [vmem:[%s242 + $0x178] sm:$0xff]
        %v300 = vld [vmem:[%s242 + $0x180] sm:$0xff]
        %v301 = vld [vmem:[%s242 + $0x188] sm:$0xf]
        %v302 = vld [vmem:[%s242 + $0x190] sm:$0xff]
        %v303 = vld [vmem:[%s242 + $0x198] sm:$0xff]
        %v304 = vld [vmem:[%s242 + $0x1a0] sm:$0xff]
        %v305 = vld [vmem:[%s242 + $0x1a8] sm:$0xff]
        %v306 = vld [vmem:[%s242 + $0x1b0] sm:$0xf]
        %v307 = vld [vmem:[%s242 + $0x1b8] sm:$0xff]
        %v308 = vld [vmem:[%s242 + $0x1c0] sm:$0xff]
        %v309 = vld [vmem:[%s242 + $0x1c8] sm:$0xff]
        %v310 = vld [vmem:[%s242 + $0x1d0] sm:$0xff]
        %v311 = vld [vmem:[%s242 + $0x1d8] sm:$0xf]
        %v312 = vld [vmem:[%s242 + $0x1e0] sm:$0xff]
        %v313 = vld [vmem:[%s242 + $0x1e8] sm:$0xff]
        %v314 = vld [vmem:[%s242 + $0x1f0] sm:$0xff]
        %v315 = vld [vmem:[%s242 + $0x1f8] sm:$0xff]
        %v316 = vld [vmem:[%s242 + $0x200] sm:$0xf]
        %v317 = vld [vmem:[%s242 + $0x208] sm:$0xff]
        %v318 = vld [vmem:[%s242 + $0x210] sm:$0xff]
        %v319 = vld [vmem:[%s242 + $0x218] sm:$0xff]
        %v320 = vld [vmem:[%s242 + $0x220] sm:$0xff]
        %v321 = vld [vmem:[%s242 + $0x228] sm:$0xf]
        %v322 = vld [vmem:[%s242 + $0x230] sm:$0xff]
        %v323 = vld [vmem:[%s242 + $0x238] sm:$0xff]
        %v324 = vld [vmem:[%s242 + $0x240] sm:$0xff]
        %v325 = vld [vmem:[%s242 + $0x248] sm:$0xff]
        %v326 = vld [vmem:[%s242 + $0x250] sm:$0xf]
        %v327 = vld [vmem:[%s242 + $0x258] sm:$0xff]
        %v328 = vld [vmem:[%s242 + $0x260] sm:$0xff]
        %v329 = vld [vmem:[%s242 + $0x268] sm:$0xff]
        %v330 = vld [vmem:[%s242 + $0x270] sm:$0xff]
        %v331 = vld [vmem:[%s242 + $0x278] sm:$0xf]
        %v332 = vpack.c.bf16 %v252, %v252
        %v333 = vpack.c.bf16 %v253, %v253
        %v334 = vpack.c.bf16 %v254, %v254
        %v335 = vpack.c.bf16 %v255, %v255
        %v336 = vpack.c.bf16 %v256, %v256
        %v337 = vpack.c.bf16 %v257, %v257
        %v338 = vpack.c.bf16 %v258, %v258
        %v339 = vpack.c.bf16 %v259, %v259
        %v340 = vpack.c.bf16 %v260, %v260
        %v341 = vpack.c.bf16 %v261, %v261
        %v342 = vpack.c.bf16 %v262, %v262
        %v343 = vpack.c.bf16 %v263, %v263
        %v344 = vpack.c.bf16 %v264, %v264
        %v345 = vpack.c.bf16 %v265, %v265
        %v346 = vpack.c.bf16 %v266, %v266
        %v347 = vpack.c.bf16 %v267, %v267
        %v348 = vpack.c.bf16 %v268, %v268
        %v349 = vpack.c.bf16 %v269, %v269
        %v350 = vpack.c.bf16 %v270, %v270
        %v351 = vpack.c.bf16 %v271, %v271
        %v352 = vpack.c.bf16 %v272, %v272
        %v353 = vpack.c.bf16 %v273, %v273
        %v354 = vpack.c.bf16 %v274, %v274
        %v355 = vpack.c.bf16 %v275, %v275
        %v356 = vpack.c.bf16 %v276, %v276
        %v357 = vpack.c.bf16 %v277, %v277
        %v358 = vpack.c.bf16 %v278, %v278
        %v359 = vpack.c.bf16 %v279, %v279
        %v360 = vpack.c.bf16 %v280, %v280
        %v361 = vpack.c.bf16 %v281, %v281
        %v362 = vpack.c.bf16 %v282, %v282
        %v363 = vpack.c.bf16 %v283, %v283
        %v364 = vpack.c.bf16 %v284, %v284
        %v365 = vpack.c.bf16 %v285, %v285
        %v366 = vpack.c.bf16 %v286, %v286
        %v367 = vpack.c.bf16 %v287, %v287
        %v368 = vpack.c.bf16 %v288, %v288
        %v369 = vpack.c.bf16 %v289, %v289
        %v370 = vpack.c.bf16 %v290, %v290
        %v371 = vpack.c.bf16 %v291, %v291
        %v372 = vpack.c.bf16 %v292, %v292
        %v373 = vpack.c.bf16 %v293, %v293
        %v374 = vpack.c.bf16 %v294, %v294
        %v375 = vpack.c.bf16 %v295, %v295
        %v376 = vpack.c.bf16 %v296, %v296
        %v377 = vpack.c.bf16 %v297, %v297
        %v378 = vpack.c.bf16 %v298, %v298
        %v379 = vpack.c.bf16 %v299, %v299
        %v380 = vpack.c.bf16 %v300, %v300
        %v381 = vpack.c.bf16 %v301, %v301
        %v382 = vpack.c.bf16 %v302, %v302
        %v383 = vpack.c.bf16 %v303, %v303
        %v384 = vpack.c.bf16 %v304, %v304
        %v385 = vpack.c.bf16 %v305, %v305
        %v386 = vpack.c.bf16 %v306, %v306
        %v387 = vpack.c.bf16 %v307, %v307
        %v388 = vpack.c.bf16 %v308, %v308
        %v389 = vpack.c.bf16 %v309, %v309
        %v390 = vpack.c.bf16 %v310, %v310
        %v391 = vpack.c.bf16 %v311, %v311
        %v392 = vpack.c.bf16 %v312, %v312
        %v393 = vpack.c.bf16 %v313, %v313
        %v394 = vpack.c.bf16 %v314, %v314
        %v395 = vpack.c.bf16 %v315, %v315
        %v396 = vpack.c.bf16 %v316, %v316
        %v397 = vpack.c.bf16 %v317, %v317
        %v398 = vpack.c.bf16 %v318, %v318
        %v399 = vpack.c.bf16 %v319, %v319
        %v400 = vpack.c.bf16 %v320, %v320
        %v401 = vpack.c.bf16 %v321, %v321
        %v402 = vpack.c.bf16 %v322, %v322
        %v403 = vpack.c.bf16 %v323, %v323
        %v404 = vpack.c.bf16 %v324, %v324
        %v405 = vpack.c.bf16 %v325, %v325
        %v406 = vpack.c.bf16 %v326, %v326
        %v407 = vpack.c.bf16 %v327, %v327
        %v408 = vpack.c.bf16 %v328, %v328
        %v409 = vpack.c.bf16 %v329, %v329
        %v410 = vpack.c.bf16 %v330, %v330
        %v411 = vpack.c.bf16 %v331, %v331
        %412 = vst [vmem:[#allocation2] sm:$0xf] %v332
        %413 = vst [vmem:[#allocation2 + $0x4] sm:$0xf] %v333
        %414 = vst [vmem:[#allocation2 + $0x8] sm:$0xf] %v334
        %415 = vst [vmem:[#allocation2 + $0xc] sm:$0xf] %v335
        %416 = vst [vmem:[#allocation2 + $0x10] sm:$0x3] %v336
        %417 = vst [vmem:[#allocation2 + $0x18] sm:$0xf] %v337
        %418 = vst [vmem:[#allocation2 + $0x1c] sm:$0xf] %v338
        %419 = vst [vmem:[#allocation2 + $0x20] sm:$0xf] %v339
        %420 = vst [vmem:[#allocation2 + $0x24] sm:$0xf] %v340
        %421 = vst [vmem:[#allocation2 + $0x28] sm:$0x3] %v341
        %422 = vst [vmem:[#allocation2 + $0x30] sm:$0xf] %v342
        %423 = vst [vmem:[#allocation2 + $0x34] sm:$0xf] %v343
        %424 = vst [vmem:[#allocation2 + $0x38] sm:$0xf] %v344
        %425 = vst [vmem:[#allocation2 + $0x3c] sm:$0xf] %v345
        %426 = vst [vmem:[#allocation2 + $0x40] sm:$0x3] %v346
        %427 = vst [vmem:[#allocation2 + $0x48] sm:$0xf] %v347
        %428 = vst [vmem:[#allocation2 + $0x4c] sm:$0xf] %v348
        %429 = vst [vmem:[#allocation2 + $0x50] sm:$0xf] %v349
        %430 = vst [vmem:[#allocation2 + $0x54] sm:$0xf] %v350
        %431 = vst [vmem:[#allocation2 + $0x58] sm:$0x3] %v351
        %432 = vst [vmem:[#allocation2 + $0x60] sm:$0xf] %v352
        %433 = vst [vmem:[#allocation2 + $0x64] sm:$0xf] %v353
        %434 = vst [vmem:[#allocation2 + $0x68] sm:$0xf] %v354
        %435 = vst [vmem:[#allocation2 + $0x6c] sm:$0xf] %v355
        %436 = vst [vmem:[#allocation2 + $0x70] sm:$0x3] %v356
        %437 = vst [vmem:[#allocation2 + $0x78] sm:$0xf] %v357
        %438 = vst [vmem:[#allocation2 + $0x7c] sm:$0xf] %v358
        %439 = vst [vmem:[#allocation2 + $0x80] sm:$0xf] %v359
        %440 = vst [vmem:[#allocation2 + $0x84] sm:$0xf] %v360
        %441 = vst [vmem:[#allocation2 + $0x88] sm:$0x3] %v361
        %442 = vst [vmem:[#allocation2 + $0x90] sm:$0xf] %v362
        %443 = vst [vmem:[#allocation2 + $0x94] sm:$0xf] %v363
        %444 = vst [vmem:[#allocation2 + $0x98] sm:$0xf] %v364
        %445 = vst [vmem:[#allocation2 + $0x9c] sm:$0xf] %v365
        %446 = vst [vmem:[#allocation2 + $0xa0] sm:$0x3] %v366
        %447 = vst [vmem:[#allocation2 + $0xa8] sm:$0xf] %v367
        %448 = vst [vmem:[#allocation2 + $0xac] sm:$0xf] %v368
        %449 = vst [vmem:[#allocation2 + $0xb0] sm:$0xf] %v369
        %450 = vst [vmem:[#allocation2 + $0xb4] sm:$0xf] %v370
        %451 = vst [vmem:[#allocation2 + $0xb8] sm:$0x3] %v371
        %452 = vst [vmem:[#allocation2 + $0xc0] sm:$0xf] %v372
        %453 = vst [vmem:[#allocation2 + $0xc4] sm:$0xf] %v373
        %454 = vst [vmem:[#allocation2 + $0xc8] sm:$0xf] %v374
        %455 = vst [vmem:[#allocation2 + $0xcc] sm:$0xf] %v375
        %456 = vst [vmem:[#allocation2 + $0xd0] sm:$0x3] %v376
        %457 = vst [vmem:[#allocation2 + $0xd8] sm:$0xf] %v377
        %458 = vst [vmem:[#allocation2 + $0xdc] sm:$0xf] %v378
        %459 = vst [vmem:[#allocation2 + $0xe0] sm:$0xf] %v379
        %460 = vst [vmem:[#allocation2 + $0xe4] sm:$0xf] %v380
        %461 = vst [vmem:[#allocation2 + $0xe8] sm:$0x3] %v381
        %462 = vst [vmem:[#allocation2 + $0xf0] sm:$0xf] %v382
        %463 = vst [vmem:[#allocation2 + $0xf4] sm:$0xf] %v383
        %464 = vst [vmem:[#allocation2 + $0xf8] sm:$0xf] %v384
        %465 = vst [vmem:[#allocation2 + $0xfc] sm:$0xf] %v385
        %466 = vst [vmem:[#allocation2 + $0x100] sm:$0x3] %v386
        %467 = vst [vmem:[#allocation2 + $0x108] sm:$0xf] %v387
        %468 = vst [vmem:[#allocation2 + $0x10c] sm:$0xf] %v388
        %469 = vst [vmem:[#allocation2 + $0x110] sm:$0xf] %v389
        %470 = vst [vmem:[#allocation2 + $0x114] sm:$0xf] %v390
        %471 = vst [vmem:[#allocation2 + $0x118] sm:$0x3] %v391
        %472 = vst [vmem:[#allocation2 + $0x120] sm:$0xf] %v392
        %473 = vst [vmem:[#allocation2 + $0x124] sm:$0xf] %v393
        %474 = vst [vmem:[#allocation2 + $0x128] sm:$0xf] %v394
        %475 = vst [vmem:[#allocation2 + $0x12c] sm:$0xf] %v395
        %476 = vst [vmem:[#allocation2 + $0x130] sm:$0x3] %v396
        %477 = vst [vmem:[#allocation2 + $0x138] sm:$0xf] %v397
        %478 = vst [vmem:[#allocation2 + $0x13c] sm:$0xf] %v398
        %479 = vst [vmem:[#allocation2 + $0x140] sm:$0xf] %v399
        %480 = vst [vmem:[#allocation2 + $0x144] sm:$0xf] %v400
        %481 = vst [vmem:[#allocation2 + $0x148] sm:$0x3] %v401
        %482 = vst [vmem:[#allocation2 + $0x150] sm:$0xf] %v402
        %483 = vst [vmem:[#allocation2 + $0x154] sm:$0xf] %v403
        %484 = vst [vmem:[#allocation2 + $0x158] sm:$0xf] %v404
        %485 = vst [vmem:[#allocation2 + $0x15c] sm:$0xf] %v405
        %486 = vst [vmem:[#allocation2 + $0x160] sm:$0x3] %v406
        %487 = vst [vmem:[#allocation2 + $0x168] sm:$0xf] %v407
        %488 = vst [vmem:[#allocation2 + $0x16c] sm:$0xf] %v408
        %489 = vst [vmem:[#allocation2 + $0x170] sm:$0xf] %v409
        %490 = vst [vmem:[#allocation2 + $0x174] sm:$0xf] %v410
        %491 = vst [vmem:[#allocation2 + $0x178] sm:$0x3] %v411
        %492 = vst [vmem:[#allocation2 + $0x10] sm:$0xc] 0
        %493 = vst [vmem:[#allocation2 + $0x14] sm:$0xf] 0
        %494 = vst [vmem:[#allocation2 + $0x28] sm:$0xc] 0
        %495 = vst [vmem:[#allocation2 + $0x2c] sm:$0xf] 0
        %496 = vst [vmem:[#allocation2 + $0x40] sm:$0xc] 0
        %497 = vst [vmem:[#allocation2 + $0x44] sm:$0xf] 0
        %498 = vst [vmem:[#allocation2 + $0x58] sm:$0xc] 0
        %499 = vst [vmem:[#allocation2 + $0x5c] sm:$0xf] 0
        %500 = vst [vmem:[#allocation2 + $0x70] sm:$0xc] 0
        %501 = vst [vmem:[#allocation2 + $0x74] sm:$0xf] 0
        %502 = vst [vmem:[#allocation2 + $0x88] sm:$0xc] 0
        %503 = vst [vmem:[#allocation2 + $0x8c] sm:$0xf] 0
        %504 = vst [vmem:[#allocation2 + $0xa0] sm:$0xc] 0
        %505 = vst [vmem:[#allocation2 + $0xa4] sm:$0xf] 0
        %506 = vst [vmem:[#allocation2 + $0xb8] sm:$0xc] 0
        %507 = vst [vmem:[#allocation2 + $0xbc] sm:$0xf] 0
        %508 = vst [vmem:[#allocation2 + $0xd0] sm:$0xc] 0
        %509 = vst [vmem:[#allocation2 + $0xd4] sm:$0xf] 0
        %510 = vst [vmem:[#allocation2 + $0xe8] sm:$0xc] 0
        %511 = vst [vmem:[#allocation2 + $0xec] sm:$0xf] 0
        %512 = vst [vmem:[#allocation2 + $0x100] sm:$0xc] 0
        %513 = vst [vmem:[#allocation2 + $0x104] sm:$0xf] 0
        %514 = vst [vmem:[#allocation2 + $0x118] sm:$0xc] 0
        %515 = vst [vmem:[#allocation2 + $0x11c] sm:$0xf] 0
        %516 = vst [vmem:[#allocation2 + $0x130] sm:$0xc] 0
        %517 = vst [vmem:[#allocation2 + $0x134] sm:$0xf] 0
        %518 = vst [vmem:[#allocation2 + $0x148] sm:$0xc] 0
        %519 = vst [vmem:[#allocation2 + $0x14c] sm:$0xf] 0
        %520 = vst [vmem:[#allocation2 + $0x160] sm:$0xc] 0
        %521 = vst [vmem:[#allocation2 + $0x164] sm:$0xf] 0
        %522 = vst [vmem:[#allocation2 + $0x178] sm:$0xc] 0
        %523 = vst [vmem:[#allocation2 + $0x17c] sm:$0xf] 0
        %v524 = vld [vmem:[#allocation2] sm:$0xf]
        %v525 = vld [vmem:[#allocation2 + $0x4] sm:$0xf]
        %v526 = vld [vmem:[#allocation2 + $0x8] sm:$0xf]
        %v527 = vld [vmem:[#allocation2 + $0xc] sm:$0xf]
        %v528 = vld [vmem:[#allocation2 + $0x10] sm:$0xf]
        %v529 = vld [vmem:[#allocation2 + $0x14] sm:$0xf]
        %v530 = vld [vmem:[#allocation2 + $0x18] sm:$0xf]
        %v531 = vld [vmem:[#allocation2 + $0x1c] sm:$0xf]
        %v532 = vld [vmem:[#allocation2 + $0x20] sm:$0xf]
        %v533 = vld [vmem:[#allocation2 + $0x24] sm:$0xf]
        %v534 = vld [vmem:[#allocation2 + $0x28] sm:$0xf]
        %v535 = vld [vmem:[#allocation2 + $0x2c] sm:$0xf]
        %v536 = vld [vmem:[#allocation2 + $0x30] sm:$0xf]
        %v537 = vld [vmem:[#allocation2 + $0x34] sm:$0xf]
        %v538 = vld [vmem:[#allocation2 + $0x38] sm:$0xf]
        %v539 = vld [vmem:[#allocation2 + $0x3c] sm:$0xf]
        %v540 = vld [vmem:[#allocation2 + $0x40] sm:$0xf]
        %v541 = vld [vmem:[#allocation2 + $0x44] sm:$0xf]
        %v542 = vld [vmem:[#allocation2 + $0x48] sm:$0xf]
        %v543 = vld [vmem:[#allocation2 + $0x4c] sm:$0xf]
        %v544 = vld [vmem:[#allocation2 + $0x50] sm:$0xf]
        %v545 = vld [vmem:[#allocation2 + $0x54] sm:$0xf]
        %v546 = vld [vmem:[#allocation2 + $0x58] sm:$0xf]
        %v547 = vld [vmem:[#allocation2 + $0x5c] sm:$0xf]
        %v548 = vld [vmem:[#allocation2 + $0x60] sm:$0xf]
        %v549 = vld [vmem:[#allocation2 + $0x64] sm:$0xf]
        %v550 = vld [vmem:[#allocation2 + $0x68] sm:$0xf]
        %v551 = vld [vmem:[#allocation2 + $0x6c] sm:$0xf]
        %v552 = vld [vmem:[#allocation2 + $0x70] sm:$0xf]
        %v553 = vld [vmem:[#allocation2 + $0x74] sm:$0xf]
        %v554 = vld [vmem:[#allocation2 + $0x78] sm:$0xf]
        %v555 = vld [vmem:[#allocation2 + $0x7c] sm:$0xf]
        %v556 = vld [vmem:[#allocation2 + $0x80] sm:$0xf]
        %v557 = vld [vmem:[#allocation2 + $0x84] sm:$0xf]
        %v558 = vld [vmem:[#allocation2 + $0x88] sm:$0xf]
        %v559 = vld [vmem:[#allocation2 + $0x8c] sm:$0xf]
        %v560 = vld [vmem:[#allocation2 + $0x90] sm:$0xf]
        %v561 = vld [vmem:[#allocation2 + $0x94] sm:$0xf]
        %v562 = vld [vmem:[#allocation2 + $0x98] sm:$0xf]
        %v563 = vld [vmem:[#allocation2 + $0x9c] sm:$0xf]
        %v564 = vld [vmem:[#allocation2 + $0xa0] sm:$0xf]
        %v565 = vld [vmem:[#allocation2 + $0xa4] sm:$0xf]
        %v566 = vld [vmem:[#allocation2 + $0xa8] sm:$0xf]
        %v567 = vld [vmem:[#allocation2 + $0xac] sm:$0xf]
        %v568 = vld [vmem:[#allocation2 + $0xb0] sm:$0xf]
        %v569 = vld [vmem:[#allocation2 + $0xb4] sm:$0xf]
        %v570 = vld [vmem:[#allocation2 + $0xb8] sm:$0xf]
        %v571 = vld [vmem:[#allocation2 + $0xbc] sm:$0xf]
        %v572 = vld [vmem:[#allocation2 + $0xc0] sm:$0xf]
        %v573 = vld [vmem:[#allocation2 + $0xc4] sm:$0xf]
        %v574 = vld [vmem:[#allocation2 + $0xc8] sm:$0xf]
        %v575 = vld [vmem:[#allocation2 + $0xcc] sm:$0xf]
        %v576 = vld [vmem:[#allocation2 + $0xd0] sm:$0xf]
        %v577 = vld [vmem:[#allocation2 + $0xd4] sm:$0xf]
        %v578 = vld [vmem:[#allocation2 + $0xd8] sm:$0xf]
        %v579 = vld [vmem:[#allocation2 + $0xdc] sm:$0xf]
        %v580 = vld [vmem:[#allocation2 + $0xe0] sm:$0xf]
        %v581 = vld [vmem:[#allocation2 + $0xe4] sm:$0xf]
        %v582 = vld [vmem:[#allocation2 + $0xe8] sm:$0xf]
        %v583 = vld [vmem:[#allocation2 + $0xec] sm:$0xf]
        %v584 = vld [vmem:[#allocation2 + $0xf0] sm:$0xf]
        %v585 = vld [vmem:[#allocation2 + $0xf4] sm:$0xf]
        %v586 = vld [vmem:[#allocation2 + $0xf8] sm:$0xf]
        %v587 = vld [vmem:[#allocation2 + $0xfc] sm:$0xf]
        %v588 = vld [vmem:[#allocation2 + $0x100] sm:$0xf]
        %v589 = vld [vmem:[#allocation2 + $0x104] sm:$0xf]
        %v590 = vld [vmem:[#allocation2 + $0x108] sm:$0xf]
        %v591 = vld [vmem:[#allocation2 + $0x10c] sm:$0xf]
        %v592 = vld [vmem:[#allocation2 + $0x110] sm:$0xf]
        %v593 = vld [vmem:[#allocation2 + $0x114] sm:$0xf]
        %v594 = vld [vmem:[#allocation2 + $0x118] sm:$0xf]
        %v595 = vld [vmem:[#allocation2 + $0x11c] sm:$0xf]
        %v596 = vld [vmem:[#allocation2 + $0x120] sm:$0xf]
        %v597 = vld [vmem:[#allocation2 + $0x124] sm:$0xf]
        %v598 = vld [vmem:[#allocation2 + $0x128] sm:$0xf]
        %v599 = vld [vmem:[#allocation2 + $0x12c] sm:$0xf]
        %v600 = vld [vmem:[#allocation2 + $0x130] sm:$0xf]
        %v601 = vld [vmem:[#allocation2 + $0x134] sm:$0xf]
        %v602 = vld [vmem:[#allocation2 + $0x138] sm:$0xf]
        %v603 = vld [vmem:[#allocation2 + $0x13c] sm:$0xf]
        %v604 = vld [vmem:[#allocation2 + $0x140] sm:$0xf]
        %v605 = vld [vmem:[#allocation2 + $0x144] sm:$0xf]
        %v606 = vld [vmem:[#allocation2 + $0x148] sm:$0xf]
        %v607 = vld [vmem:[#allocation2 + $0x14c] sm:$0xf]
        %v608 = vld [vmem:[#allocation2 + $0x150] sm:$0xf]
        %v609 = vld [vmem:[#allocation2 + $0x154] sm:$0xf]
        %v610 = vld [vmem:[#allocation2 + $0x158] sm:$0xf]
        %v611 = vld [vmem:[#allocation2 + $0x15c] sm:$0xf]
        %v612 = vld [vmem:[#allocation2 + $0x160] sm:$0xf]
        %v613 = vld [vmem:[#allocation2 + $0x164] sm:$0xf]
        %v614 = vld [vmem:[#allocation2 + $0x168] sm:$0xf]
        %v615 = vld [vmem:[#allocation2 + $0x16c] sm:$0xf]
        %v616 = vld [vmem:[#allocation2 + $0x170] sm:$0xf]
        %v617 = vld [vmem:[#allocation2 + $0x174] sm:$0xf]
        %v618 = vld [vmem:[#allocation2 + $0x178] sm:$0xf]
        %v619 = vld [vmem:[#allocation2 + $0x17c] sm:$0xf]
        %v620 = vld [vmem:[%s4] sm:$0x1]
        %v621 = vld [vmem:[%s4 + $0x1] sm:$0x1]
        %v622 = vld [vmem:[%s4 + $0x2] sm:$0x1]
        %v623 = vld [vmem:[%s2] sm:$0xf]
        %v624 = vld [vmem:[%s2 + $0x4] sm:$0xf]
        %v625 = vld [vmem:[%s2 + $0x8] sm:$0xf]
        %v626 = vld [vmem:[%s2 + $0xc] sm:$0xf]
        %v627 = vld [vmem:[%s2 + $0x10] sm:$0xf]
        %v628 = vld [vmem:[%s2 + $0x14] sm:$0xf]
        %v629 = vld [vmem:[%s2 + $0x18] sm:$0xf]
        %v630 = vld [vmem:[%s2 + $0x1c] sm:$0xf]
        %v631 = vld [vmem:[%s2 + $0x20] sm:$0xf]
        %v632 = vld [vmem:[%s2 + $0x24] sm:$0xf]
        %v633 = vld [vmem:[%s2 + $0x28] sm:$0xf]
        %v634 = vld [vmem:[%s2 + $0x2c] sm:$0xf]
        %v635 = vld [vmem:[%s2 + $0x30] sm:$0xf]
        %v636 = vld [vmem:[%s2 + $0x34] sm:$0xf]
        %v637 = vld [vmem:[%s2 + $0x38] sm:$0xf]
        %v638 = vld [vmem:[%s2 + $0x3c] sm:$0xf]
        %v639 = vperm.slane %v620, 0
        %v736 = vunpack.c.l.b16 %v524
        %v737 = vunpack.c.l.b16 %v525
        %v738 = vunpack.c.l.b16 %v526
        %v739 = vunpack.c.l.b16 %v527
        %v740 = vunpack.c.l.b16 %v528
        %v741 = vunpack.c.l.b16 %v529
        %v742 = vunpack.c.l.b16 %v530
        %v743 = vunpack.c.l.b16 %v531
        %v744 = vunpack.c.l.b16 %v532
        %v745 = vunpack.c.l.b16 %v533
        %v746 = vunpack.c.l.b16 %v534
        %v747 = vunpack.c.l.b16 %v535
        %v748 = vunpack.c.l.b16 %v536
        %v749 = vunpack.c.l.b16 %v537
        %v750 = vunpack.c.l.b16 %v538
        %v751 = vunpack.c.l.b16 %v539
        %v752 = vunpack.c.l.b16 %v540
        %v753 = vunpack.c.l.b16 %v541
        %v754 = vunpack.c.l.b16 %v542
        %v755 = vunpack.c.l.b16 %v543
        %v756 = vunpack.c.l.b16 %v544
        %v757 = vunpack.c.l.b16 %v545
        %v758 = vunpack.c.l.b16 %v546
        %v759 = vunpack.c.l.b16 %v547
        %v760 = vunpack.c.l.b16 %v548
        %v761 = vunpack.c.l.b16 %v549
        %v762 = vunpack.c.l.b16 %v550
        %v763 = vunpack.c.l.b16 %v551
        %v764 = vunpack.c.l.b16 %v552
        %v765 = vunpack.c.l.b16 %v553
        %v766 = vunpack.c.l.b16 %v554
        %v767 = vunpack.c.l.b16 %v555
        %v768 = vunpack.c.l.b16 %v556
        %v769 = vunpack.c.l.b16 %v557
        %v770 = vunpack.c.l.b16 %v558
        %v771 = vunpack.c.l.b16 %v559
        %v772 = vunpack.c.l.b16 %v560
        %v773 = vunpack.c.l.b16 %v561
        %v774 = vunpack.c.l.b16 %v562
        %v775 = vunpack.c.l.b16 %v563
        %v776 = vunpack.c.l.b16 %v564
        %v777 = vunpack.c.l.b16 %v565
        %v778 = vunpack.c.l.b16 %v566
        %v779 = vunpack.c.l.b16 %v567
        %v780 = vunpack.c.l.b16 %v568
        %v781 = vunpack.c.l.b16 %v569
        %v782 = vunpack.c.l.b16 %v570
        %v783 = vunpack.c.l.b16 %v571
        %v784 = vunpack.c.l.b16 %v572
        %v785 = vunpack.c.l.b16 %v573
        %v786 = vunpack.c.l.b16 %v574
        %v787 = vunpack.c.l.b16 %v575
        %v788 = vunpack.c.l.b16 %v576
        %v789 = vunpack.c.l.b16 %v577
        %v790 = vunpack.c.l.b16 %v578
        %v791 = vunpack.c.l.b16 %v579
        %v792 = vunpack.c.l.b16 %v580
        %v793 = vunpack.c.l.b16 %v581
        %v794 = vunpack.c.l.b16 %v582
        %v795 = vunpack.c.l.b16 %v583
        %v796 = vunpack.c.l.b16 %v584
        %v797 = vunpack.c.l.b16 %v585
        %v798 = vunpack.c.l.b16 %v586
        %v799 = vunpack.c.l.b16 %v587
        %v800 = vunpack.c.l.b16 %v588
        %v801 = vunpack.c.l.b16 %v589
        %v802 = vunpack.c.l.b16 %v590
        %v803 = vunpack.c.l.b16 %v591
        %v804 = vunpack.c.l.b16 %v592
        %v805 = vunpack.c.l.b16 %v593
        %v806 = vunpack.c.l.b16 %v594
        %v807 = vunpack.c.l.b16 %v595
        %v808 = vunpack.c.l.b16 %v596
        %v809 = vunpack.c.l.b16 %v597
        %v810 = vunpack.c.l.b16 %v598
        %v811 = vunpack.c.l.b16 %v599
        %v812 = vunpack.c.l.b16 %v600
        %v813 = vunpack.c.l.b16 %v601
        %v814 = vunpack.c.l.b16 %v602
        %v815 = vunpack.c.l.b16 %v603
        %v816 = vunpack.c.l.b16 %v604
        %v817 = vunpack.c.l.b16 %v605
        %v818 = vunpack.c.l.b16 %v606
        %v819 = vunpack.c.l.b16 %v607
        %v820 = vunpack.c.l.b16 %v608
        %v821 = vunpack.c.l.b16 %v609
        %v822 = vunpack.c.l.b16 %v610
        %v823 = vunpack.c.l.b16 %v611
        %v824 = vunpack.c.l.b16 %v612
        %v825 = vunpack.c.l.b16 %v613
        %v826 = vunpack.c.l.b16 %v614
        %v827 = vunpack.c.l.b16 %v615
        %v828 = vunpack.c.l.b16 %v616
        %v829 = vunpack.c.l.b16 %v617
        %v830 = vunpack.c.l.b16 %v618
        %v831 = vunpack.c.l.b16 %v619
        %v832 = vpack.c.b16 %v737, %v736
        %v833 = vpack.c.b16 %v739, %v738
        %v834 = vpack.c.b16 %v741, %v740
        %v835 = vpack.c.b16 %v743, %v742
        %v836 = vpack.c.b16 %v745, %v744
        %v837 = vpack.c.b16 %v747, %v746
        %v838 = vpack.c.b16 %v749, %v748
        %v839 = vpack.c.b16 %v751, %v750
        %v840 = vpack.c.b16 %v753, %v752
        %v841 = vpack.c.b16 %v755, %v754
        %v842 = vpack.c.b16 %v757, %v756
        %v843 = vpack.c.b16 %v759, %v758
        %v844 = vpack.c.b16 %v761, %v760
        %v845 = vpack.c.b16 %v763, %v762
        %v846 = vpack.c.b16 %v765, %v764
        %v847 = vpack.c.b16 %v767, %v766
        %v848 = vpack.c.b16 %v769, %v768
        %v849 = vpack.c.b16 %v771, %v770
        %v850 = vpack.c.b16 %v773, %v772
        %v851 = vpack.c.b16 %v775, %v774
        %v852 = vpack.c.b16 %v777, %v776
        %v853 = vpack.c.b16 %v779, %v778
        %v854 = vpack.c.b16 %v781, %v780
        %v855 = vpack.c.b16 %v783, %v782
        %v856 = vpack.c.b16 %v785, %v784
        %v857 = vpack.c.b16 %v787, %v786
        %v858 = vpack.c.b16 %v789, %v788
        %v859 = vpack.c.b16 %v791, %v790
        %v860 = vpack.c.b16 %v793, %v792
        %v861 = vpack.c.b16 %v795, %v794
        %v862 = vpack.c.b16 %v797, %v796
        %v863 = vpack.c.b16 %v799, %v798
        %v864 = vpack.c.b16 %v801, %v800
        %v865 = vpack.c.b16 %v803, %v802
        %v866 = vpack.c.b16 %v805, %v804
        %v867 = vpack.c.b16 %v807, %v806
        %v868 = vpack.c.b16 %v809, %v808
        %v869 = vpack.c.b16 %v811, %v810
        %v870 = vpack.c.b16 %v813, %v812
        %v871 = vpack.c.b16 %v815, %v814
        %v872 = vpack.c.b16 %v817, %v816
        %v873 = vpack.c.b16 %v819, %v818
        %v874 = vpack.c.b16 %v821, %v820
        %v875 = vpack.c.b16 %v823, %v822
        %v876 = vpack.c.b16 %v825, %v824
        %v877 = vpack.c.b16 %v827, %v826
        %v878 = vpack.c.b16 %v829, %v828
        %v879 = vpack.c.b16 %v831, %v830
        %v944 = vunpack.c.l.b16 %v623
        %v945 = vunpack.c.l.b16 %v624
        %v946 = vunpack.c.l.b16 %v625
        %v947 = vunpack.c.l.b16 %v626
        %v948 = vunpack.c.l.b16 %v627
        %v949 = vunpack.c.l.b16 %v628
        %v950 = vunpack.c.l.b16 %v629
        %v951 = vunpack.c.l.b16 %v630
        %v952 = vunpack.c.l.b16 %v631
        %v953 = vunpack.c.l.b16 %v632
        %v954 = vunpack.c.l.b16 %v633
        %v955 = vunpack.c.l.b16 %v634
        %v956 = vunpack.c.l.b16 %v635
        %v957 = vunpack.c.l.b16 %v636
        %v958 = vunpack.c.l.b16 %v637
        %v959 = vunpack.c.l.b16 %v638
        %v960 = vpack.c.b16 %v945, %v944
        %v961 = vpack.c.b16 %v947, %v946
        %v962 = vpack.c.b16 %v949, %v948
        %v963 = vpack.c.b16 %v951, %v950
        %v964 = vpack.c.b16 %v953, %v952
        %v965 = vpack.c.b16 %v955, %v954
        %v966 = vpack.c.b16 %v957, %v956
        %v967 = vpack.c.b16 %v959, %v958
        %976 = vmatpush.bf16.msra.mxu0 %v967
        %977 = vmatpush.bf16.msra.mxu0 %v966
        %978 = vmatpush.bf16.msra.mxu0 %v965
        %979 = vmatpush.bf16.msra.mxu0 %v964
        %980 = vmatpush.bf16.msra.mxu0 %v963
        %981 = vmatpush.bf16.msra.mxu0 %v962
        %982 = vmatpush.bf16.msra.mxu0 %v961
        %983 = vmatpush.bf16.msra.mxu0 %v960
        %984 = vmatmul.bf16.gmra.mxu0 %v832
        %v985 = vpop.f32.mrf.mxu0
        %v986 = vadd.f32 %v639, %v985
        %v987 = vpop.f32.mrf.mxu0
        %v988 = vadd.f32 %v639, %v987
        %989 = vmatmul.bf16.gmra.mxu0 %v833
        %v990 = vpop.f32.mrf.mxu0
        %v991 = vadd.f32 %v639, %v990
        %v992 = vpop.f32.mrf.mxu0
        %v993 = vadd.f32 %v639, %v992
        %994 = vmatmul.bf16.gmra.mxu0 %v834
        %v995 = vpop.f32.mrf.mxu0
        %v996 = vadd.f32 %v639, %v995
        %v997 = vpop.f32.mrf.mxu0
        %v998 = vadd.f32 %v639, %v997
        %999 = vmatmul.bf16.gmra.mxu0 %v835
        %v1000 = vpop.f32.mrf.mxu0
        %v1001 = vadd.f32 %v639, %v1000
        %v1002 = vpop.f32.mrf.mxu0
        %v1003 = vadd.f32 %v639, %v1002
        %1004 = vmatmul.bf16.gmra.mxu0 %v836
        %v1005 = vpop.f32.mrf.mxu0
        %v1006 = vadd.f32 %v639, %v1005
        %v1007 = vpop.f32.mrf.mxu0
        %v1008 = vadd.f32 %v639, %v1007
        %1009 = vmatmul.bf16.gmra.mxu0 %v837
        %v1010 = vpop.f32.mrf.mxu0
        %v1011 = vadd.f32 %v639, %v1010
        %v1012 = vpop.f32.mrf.mxu0
        %v1013 = vadd.f32 %v639, %v1012
        %1014 = vmatmul.bf16.gmra.mxu0 %v838
        %v1015 = vpop.f32.mrf.mxu0
        %v1016 = vadd.f32 %v639, %v1015
        %v1017 = vpop.f32.mrf.mxu0
        %v1018 = vadd.f32 %v639, %v1017
        %1019 = vmatmul.bf16.gmra.mxu0 %v839
        %v1020 = vpop.f32.mrf.mxu0
        %v1021 = vadd.f32 %v639, %v1020
        %v1022 = vpop.f32.mrf.mxu0
        %v1023 = vadd.f32 %v639, %v1022
        %1024 = vmatmul.bf16.gmra.mxu0 %v840
        %v1025 = vpop.f32.mrf.mxu0
        %v1026 = vadd.f32 %v639, %v1025
        %v1027 = vpop.f32.mrf.mxu0
        %v1028 = vadd.f32 %v639, %v1027
        %1029 = vmatmul.bf16.gmra.mxu0 %v841
        %v1030 = vpop.f32.mrf.mxu0
        %v1031 = vadd.f32 %v639, %v1030
        %v1032 = vpop.f32.mrf.mxu0
        %v1033 = vadd.f32 %v639, %v1032
        %1034 = vmatmul.bf16.gmra.mxu0 %v842
        %v1035 = vpop.f32.mrf.mxu0
        %v1036 = vadd.f32 %v639, %v1035
        %v1037 = vpop.f32.mrf.mxu0
        %v1038 = vadd.f32 %v639, %v1037
        %1039 = vmatmul.bf16.gmra.mxu0 %v843
        %v1040 = vpop.f32.mrf.mxu0
        %v1041 = vadd.f32 %v639, %v1040
        %v1042 = vpop.f32.mrf.mxu0
        %v1043 = vadd.f32 %v639, %v1042
        %1044 = vmatmul.bf16.gmra.mxu0 %v844
        %v1045 = vpop.f32.mrf.mxu0
        %v1046 = vadd.f32 %v639, %v1045
        %v1047 = vpop.f32.mrf.mxu0
        %v1048 = vadd.f32 %v639, %v1047
        %1049 = vmatmul.bf16.gmra.mxu0 %v845
        %v1050 = vpop.f32.mrf.mxu0
        %v1051 = vadd.f32 %v639, %v1050
        %v1052 = vpop.f32.mrf.mxu0
        %v1053 = vadd.f32 %v639, %v1052
        %1054 = vmatmul.bf16.gmra.mxu0 %v846
        %v1055 = vpop.f32.mrf.mxu0
        %v1056 = vadd.f32 %v639, %v1055
        %v1057 = vpop.f32.mrf.mxu0
        %v1058 = vadd.f32 %v639, %v1057
        %1059 = vmatmul.bf16.gmra.mxu0 %v847
        %v1060 = vpop.f32.mrf.mxu0
        %v1061 = vadd.f32 %v639, %v1060
        %v1062 = vpop.f32.mrf.mxu0
        %v1063 = vadd.f32 %v639, %v1062
        %1064 = vmatmul.bf16.gmra.mxu0 %v848
        %v1065 = vpop.f32.mrf.mxu0
        %v1066 = vadd.f32 %v639, %v1065
        %v1067 = vpop.f32.mrf.mxu0
        %v1068 = vadd.f32 %v639, %v1067
        %1069 = vmatmul.bf16.gmra.mxu0 %v849
        %v1070 = vpop.f32.mrf.mxu0
        %v1071 = vadd.f32 %v639, %v1070
        %v1072 = vpop.f32.mrf.mxu0
        %v1073 = vadd.f32 %v639, %v1072
        %1074 = vmatmul.bf16.gmra.mxu0 %v850
        %v1075 = vpop.f32.mrf.mxu0
        %v1076 = vadd.f32 %v639, %v1075
        %v1077 = vpop.f32.mrf.mxu0
        %v1078 = vadd.f32 %v639, %v1077
        %1079 = vmatmul.bf16.gmra.mxu0 %v851
        %v1080 = vpop.f32.mrf.mxu0
        %v1081 = vadd.f32 %v639, %v1080
        %v1082 = vpop.f32.mrf.mxu0
        %v1083 = vadd.f32 %v639, %v1082
        %1084 = vmatmul.bf16.gmra.mxu0 %v852
        %v1085 = vpop.f32.mrf.mxu0
        %v1086 = vadd.f32 %v639, %v1085
        %v1087 = vpop.f32.mrf.mxu0
        %v1088 = vadd.f32 %v639, %v1087
        %1089 = vmatmul.bf16.gmra.mxu0 %v853
        %v1090 = vpop.f32.mrf.mxu0
        %v1091 = vadd.f32 %v639, %v1090
        %v1092 = vpop.f32.mrf.mxu0
        %v1093 = vadd.f32 %v639, %v1092
        %1094 = vmatmul.bf16.gmra.mxu0 %v854
        %v1095 = vpop.f32.mrf.mxu0
        %v1096 = vadd.f32 %v639, %v1095
        %v1097 = vpop.f32.mrf.mxu0
        %v1098 = vadd.f32 %v639, %v1097
        %1099 = vmatmul.bf16.gmra.mxu0 %v855
        %v1100 = vpop.f32.mrf.mxu0
        %v1101 = vadd.f32 %v639, %v1100
        %v1102 = vpop.f32.mrf.mxu0
        %v1103 = vadd.f32 %v639, %v1102
        %1104 = vmatmul.bf16.gmra.mxu0 %v856
        %v1105 = vpop.f32.mrf.mxu0
        %v1106 = vadd.f32 %v639, %v1105
        %v1107 = vpop.f32.mrf.mxu0
        %v1108 = vadd.f32 %v639, %v1107
        %1109 = vmatmul.bf16.gmra.mxu0 %v857
        %v1110 = vpop.f32.mrf.mxu0
        %v1111 = vadd.f32 %v639, %v1110
        %v1112 = vpop.f32.mrf.mxu0
        %v1113 = vadd.f32 %v639, %v1112
        %1114 = vmatmul.bf16.gmra.mxu0 %v858
        %v1115 = vpop.f32.mrf.mxu0
        %v1116 = vadd.f32 %v639, %v1115
        %v1117 = vpop.f32.mrf.mxu0
        %v1118 = vadd.f32 %v639, %v1117
        %1119 = vmatmul.bf16.gmra.mxu0 %v859
        %v1120 = vpop.f32.mrf.mxu0
        %v1121 = vadd.f32 %v639, %v1120
        %v1122 = vpop.f32.mrf.mxu0
        %v1123 = vadd.f32 %v639, %v1122
        %1124 = vmatmul.bf16.gmra.mxu0 %v860
        %v1125 = vpop.f32.mrf.mxu0
        %v1126 = vadd.f32 %v639, %v1125
        %v1127 = vpop.f32.mrf.mxu0
        %v1128 = vadd.f32 %v639, %v1127
        %1129 = vmatmul.bf16.gmra.mxu0 %v861
        %v1130 = vpop.f32.mrf.mxu0
        %v1131 = vadd.f32 %v639, %v1130
        %v1132 = vpop.f32.mrf.mxu0
        %v1133 = vadd.f32 %v639, %v1132
        %1134 = vmatmul.bf16.gmra.mxu0 %v862
        %v1135 = vpop.f32.mrf.mxu0
        %v1136 = vadd.f32 %v639, %v1135
        %v1137 = vpop.f32.mrf.mxu0
        %v1138 = vadd.f32 %v639, %v1137
        %1139 = vmatmul.bf16.gmra.mxu0 %v863
        %v1140 = vpop.f32.mrf.mxu0
        %v1141 = vadd.f32 %v639, %v1140
        %v1142 = vpop.f32.mrf.mxu0
        %v1143 = vadd.f32 %v639, %v1142
        %1144 = vmatmul.bf16.gmra.mxu0 %v864
        %v1145 = vpop.f32.mrf.mxu0
        %v1146 = vadd.f32 %v639, %v1145
        %v1147 = vpop.f32.mrf.mxu0
        %v1148 = vadd.f32 %v639, %v1147
        %1149 = vmatmul.bf16.gmra.mxu0 %v865
        %v1150 = vpop.f32.mrf.mxu0
        %v1151 = vadd.f32 %v639, %v1150
        %v1152 = vpop.f32.mrf.mxu0
        %v1153 = vadd.f32 %v639, %v1152
        %1154 = vmatmul.bf16.gmra.mxu0 %v866
        %v1155 = vpop.f32.mrf.mxu0
        %v1156 = vadd.f32 %v639, %v1155
        %v1157 = vpop.f32.mrf.mxu0
        %v1158 = vadd.f32 %v639, %v1157
        %1159 = vmatmul.bf16.gmra.mxu0 %v867
        %v1160 = vpop.f32.mrf.mxu0
        %v1161 = vadd.f32 %v639, %v1160
        %v1162 = vpop.f32.mrf.mxu0
        %v1163 = vadd.f32 %v639, %v1162
        %1164 = vmatmul.bf16.gmra.mxu0 %v868
        %v1165 = vpop.f32.mrf.mxu0
        %v1166 = vadd.f32 %v639, %v1165
        %v1167 = vpop.f32.mrf.mxu0
        %v1168 = vadd.f32 %v639, %v1167
        %1169 = vmatmul.bf16.gmra.mxu0 %v869
        %v1170 = vpop.f32.mrf.mxu0
        %v1171 = vadd.f32 %v639, %v1170
        %v1172 = vpop.f32.mrf.mxu0
        %v1173 = vadd.f32 %v639, %v1172
        %1174 = vmatmul.bf16.gmra.mxu0 %v870
        %v1175 = vpop.f32.mrf.mxu0
        %v1176 = vadd.f32 %v639, %v1175
        %v1177 = vpop.f32.mrf.mxu0
        %v1178 = vadd.f32 %v639, %v1177
        %1179 = vmatmul.bf16.gmra.mxu0 %v871
        %v1180 = vpop.f32.mrf.mxu0
        %v1181 = vadd.f32 %v639, %v1180
        %v1182 = vpop.f32.mrf.mxu0
        %v1183 = vadd.f32 %v639, %v1182
        %1184 = vmatmul.bf16.gmra.mxu0 %v872
        %v1185 = vpop.f32.mrf.mxu0
        %v1186 = vadd.f32 %v639, %v1185
        %v1187 = vpop.f32.mrf.mxu0
        %v1188 = vadd.f32 %v639, %v1187
        %1189 = vmatmul.bf16.gmra.mxu0 %v873
        %v1190 = vpop.f32.mrf.mxu0
        %v1191 = vadd.f32 %v639, %v1190
        %v1192 = vpop.f32.mrf.mxu0
        %v1193 = vadd.f32 %v639, %v1192
        %1194 = vmatmul.bf16.gmra.mxu0 %v874
        %v1195 = vpop.f32.mrf.mxu0
        %v1196 = vadd.f32 %v639, %v1195
        %v1197 = vpop.f32.mrf.mxu0
        %v1198 = vadd.f32 %v639, %v1197
        %1199 = vmatmul.bf16.gmra.mxu0 %v875
        %v1200 = vpop.f32.mrf.mxu0
        %v1201 = vadd.f32 %v639, %v1200
        %v1202 = vpop.f32.mrf.mxu0
        %v1203 = vadd.f32 %v639, %v1202
        %1204 = vmatmul.bf16.gmra.mxu0 %v876
        %v1205 = vpop.f32.mrf.mxu0
        %v1206 = vadd.f32 %v639, %v1205
        %v1207 = vpop.f32.mrf.mxu0
        %v1208 = vadd.f32 %v639, %v1207
        %1209 = vmatmul.bf16.gmra.mxu0 %v877
        %v1210 = vpop.f32.mrf.mxu0
        %v1211 = vadd.f32 %v639, %v1210
        %v1212 = vpop.f32.mrf.mxu0
        %v1213 = vadd.f32 %v639, %v1212
        %1214 = vmatmul.bf16.gmra.mxu0 %v878
        %v1215 = vpop.f32.mrf.mxu0
        %v1216 = vadd.f32 %v639, %v1215
        %v1217 = vpop.f32.mrf.mxu0
        %v1218 = vadd.f32 %v639, %v1217
        %1219 = vmatmul.bf16.gmra.mxu0 %v879
        %v1220 = vpop.f32.mrf.mxu0
        %v1221 = vadd.f32 %v639, %v1220
        %v1222 = vpop.f32.mrf.mxu0
        %v1223 = vadd.f32 %v639, %v1222
        %1224 = vdwg.mxu0
        %v1225 = vld [vmem:[%s248] sm:$0xff]
        %v1226 = vld [vmem:[%s248 + $0x8] sm:$0xff]
        %v1227 = vpack.c.bf16 %v1226, %v1225
        %v1228 = vld [vmem:[%s3] sm:$0xf]
        %v1229 = vld [vmem:[%s3 + $0x4] sm:$0xf]
        %v1230 = vld [vmem:[%s3 + $0x8] sm:$0xf]
        %v1231 = vld [vmem:[%s3 + $0xc] sm:$0xf]
        %v1232 = vld [vmem:[%s3 + $0x10] sm:$0xf]
        %v1233 = vld [vmem:[%s3 + $0x14] sm:$0xf]
        %v1234 = vld [vmem:[%s3 + $0x18] sm:$0xf]
        %v1235 = vld [vmem:[%s3 + $0x1c] sm:$0xf]
        %v1236 = vld [vmem:[%s3 + $0x20] sm:$0xf]
        %v1237 = vld [vmem:[%s3 + $0x24] sm:$0xf]
        %v1238 = vld [vmem:[%s3 + $0x28] sm:$0xf]
        %v1239 = vld [vmem:[%s3 + $0x2c] sm:$0xf]
        %v1240 = vld [vmem:[%s3 + $0x30] sm:$0xf]
        %v1241 = vld [vmem:[%s3 + $0x34] sm:$0xf]
        %v1242 = vld [vmem:[%s3 + $0x38] sm:$0xf]
        %v1243 = vld [vmem:[%s3 + $0x3c] sm:$0xf]
        %v1244 = vperm.slane %v621, 0
        %v1261 = vunpack.c.l.b16 %v1228
        %v1262 = vunpack.c.l.b16 %v1229
        %v1263 = vunpack.c.l.b16 %v1230
        %v1264 = vunpack.c.l.b16 %v1231
        %v1265 = vunpack.c.l.b16 %v1232
        %v1266 = vunpack.c.l.b16 %v1233
        %v1267 = vunpack.c.l.b16 %v1234
        %v1268 = vunpack.c.l.b16 %v1235
        %v1269 = vunpack.c.l.b16 %v1236
        %v1270 = vunpack.c.l.b16 %v1237
        %v1271 = vunpack.c.l.b16 %v1238
        %v1272 = vunpack.c.l.b16 %v1239
        %v1273 = vunpack.c.l.b16 %v1240
        %v1274 = vunpack.c.l.b16 %v1241
        %v1275 = vunpack.c.l.b16 %v1242
        %v1276 = vunpack.c.l.b16 %v1243
        %v1277 = vpack.c.b16 %v1262, %v1261
        %v1278 = vpack.c.b16 %v1264, %v1263
        %v1279 = vpack.c.b16 %v1266, %v1265
        %v1280 = vpack.c.b16 %v1268, %v1267
        %v1281 = vpack.c.b16 %v1270, %v1269
        %v1282 = vpack.c.b16 %v1272, %v1271
        %v1283 = vpack.c.b16 %v1274, %v1273
        %v1284 = vpack.c.b16 %v1276, %v1275
        %1293 = vmatpush.bf16.msra.mxu0 %v1284
        %1294 = vmatpush.bf16.msra.mxu0 %v1283
        %1295 = vmatpush.bf16.msra.mxu0 %v1282
        %1296 = vmatpush.bf16.msra.mxu0 %v1281
        %1297 = vmatpush.bf16.msra.mxu0 %v1280
        %1298 = vmatpush.bf16.msra.mxu0 %v1279
        %1299 = vmatpush.bf16.msra.mxu0 %v1278
        %1300 = vmatpush.bf16.msra.mxu0 %v1277
        %1301 = vmatmul.bf16.gmra.mxu0 %v1227
        %v1302 = vpop.f32.mrf.mxu0
        %v1303 = vadd.f32 %v1244, %v1302
        %v1304 = vpop.f32.mrf.mxu0
        %v1305 = vadd.f32 %v1244, %v1304
        %1306 = vdwg.mxu0
        %v1309 = vrot.slane %v1303, 1
        %v1310 = vrot.slane %v1303, 2
        %v1311 = vrot.slane %v1303, 3
        %v1312 = vrot.slane %v1303, 4
        %v1313 = vrot.slane %v1303, 5
        %v1314 = vrot.slane %v1303, 6
        %v1315 = vrot.slane %v1303, 7
        %v1316 = vrot.slane %v1305, 1
        %v1317 = vrot.slane %v1305, 2
        %v1318 = vrot.slane %v1305, 3
        %v1319 = vrot.slane %v1305, 4
        %v1320 = vrot.slane %v1305, 5
        %v1321 = vrot.slane %v1305, 6
        %v1322 = vrot.slane %v1305, 7
        %v1323 = vperm.slane %v1303, 0
        %v1324 = vperm.slane %v1309, 0
        %v1325 = vperm.slane %v1310, 0
        %v1326 = vperm.slane %v1311, 0
        %v1327 = vperm.slane %v1312, 0
        %v1328 = vperm.slane %v1313, 0
        %v1329 = vperm.slane %v1314, 0
        %v1330 = vperm.slane %v1315, 0
        %v1331 = vperm.slane %v1305, 0
        %v1332 = vperm.slane %v1316, 0
        %v1333 = vperm.slane %v1317, 0
        %v1334 = vperm.slane %v1318, 0
        %v1335 = vperm.slane %v1319, 0
        %v1336 = vperm.slane %v1320, 0
        %v1337 = vperm.slane %v1321, 0
        %v1338 = vperm.slane %v1322, 0
        %v1355 = vadd.f32 %v986, %v1323
        %v1356 = vadd.f32 %v988, %v1323
        %v1357 = vadd.f32 %v991, %v1323
        %v1358 = vadd.f32 %v993, %v1323
        %v1359 = vadd.f32 %v996, %v1323
        %v1360 = vadd.f32 %v998, %v1323
        %v1361 = vadd.f32 %v1001, %v1324
        %v1362 = vadd.f32 %v1003, %v1324
        %v1363 = vadd.f32 %v1006, %v1324
        %v1364 = vadd.f32 %v1008, %v1324
        %v1365 = vadd.f32 %v1011, %v1324
        %v1366 = vadd.f32 %v1013, %v1324
        %v1367 = vadd.f32 %v1016, %v1325
        %v1368 = vadd.f32 %v1018, %v1325
        %v1369 = vadd.f32 %v1021, %v1325
        %v1370 = vadd.f32 %v1023, %v1325
        %v1371 = vadd.f32 %v1026, %v1325
        %v1372 = vadd.f32 %v1028, %v1325
        %v1373 = vadd.f32 %v1031, %v1326
        %v1374 = vadd.f32 %v1033, %v1326
        %v1375 = vadd.f32 %v1036, %v1326
        %v1376 = vadd.f32 %v1038, %v1326
        %v1377 = vadd.f32 %v1041, %v1326
        %v1378 = vadd.f32 %v1043, %v1326
        %v1379 = vadd.f32 %v1046, %v1327
        %v1380 = vadd.f32 %v1048, %v1327
        %v1381 = vadd.f32 %v1051, %v1327
        %v1382 = vadd.f32 %v1053, %v1327
        %v1383 = vadd.f32 %v1056, %v1327
        %v1384 = vadd.f32 %v1058, %v1327
        %v1385 = vadd.f32 %v1061, %v1328
        %v1386 = vadd.f32 %v1063, %v1328
        %v1387 = vadd.f32 %v1066, %v1328
        %v1388 = vadd.f32 %v1068, %v1328
        %v1389 = vadd.f32 %v1071, %v1328
        %v1390 = vadd.f32 %v1073, %v1328
        %v1391 = vadd.f32 %v1076, %v1329
        %v1392 = vadd.f32 %v1078, %v1329
        %v1393 = vadd.f32 %v1081, %v1329
        %v1394 = vadd.f32 %v1083, %v1329
        %v1395 = vadd.f32 %v1086, %v1329
        %v1396 = vadd.f32 %v1088, %v1329
        %v1397 = vadd.f32 %v1091, %v1330
        %v1398 = vadd.f32 %v1093, %v1330
        %v1399 = vadd.f32 %v1096, %v1330
        %v1400 = vadd.f32 %v1098, %v1330
        %v1401 = vadd.f32 %v1101, %v1330
        %v1402 = vadd.f32 %v1103, %v1330
        %v1403 = vadd.f32 %v1106, %v1331
        %v1404 = vadd.f32 %v1108, %v1331
        %v1405 = vadd.f32 %v1111, %v1331
        %v1406 = vadd.f32 %v1113, %v1331
        %v1407 = vadd.f32 %v1116, %v1331
        %v1408 = vadd.f32 %v1118, %v1331
        %v1409 = vadd.f32 %v1121, %v1332
        %v1410 = vadd.f32 %v1123, %v1332
        %v1411 = vadd.f32 %v1126, %v1332
        %v1412 = vadd.f32 %v1128, %v1332
        %v1413 = vadd.f32 %v1131, %v1332
        %v1414 = vadd.f32 %v1133, %v1332
        %v1415 = vadd.f32 %v1136, %v1333
        %v1416 = vadd.f32 %v1138, %v1333
        %v1417 = vadd.f32 %v1141, %v1333
        %v1418 = vadd.f32 %v1143, %v1333
        %v1419 = vadd.f32 %v1146, %v1333
        %v1420 = vadd.f32 %v1148, %v1333
        %v1421 = vadd.f32 %v1151, %v1334
        %v1422 = vadd.f32 %v1153, %v1334
        %v1423 = vadd.f32 %v1156, %v1334
        %v1424 = vadd.f32 %v1158, %v1334
        %v1425 = vadd.f32 %v1161, %v1334
        %v1426 = vadd.f32 %v1163, %v1334
        %v1427 = vadd.f32 %v1166, %v1335
        %v1428 = vadd.f32 %v1168, %v1335
        %v1429 = vadd.f32 %v1171, %v1335
        %v1430 = vadd.f32 %v1173, %v1335
        %v1431 = vadd.f32 %v1176, %v1335
        %v1432 = vadd.f32 %v1178, %v1335
        %v1433 = vadd.f32 %v1181, %v1336
        %v1434 = vadd.f32 %v1183, %v1336
        %v1435 = vadd.f32 %v1186, %v1336
        %v1436 = vadd.f32 %v1188, %v1336
        %v1437 = vadd.f32 %v1191, %v1336
        %v1438 = vadd.f32 %v1193, %v1336
        %v1439 = vadd.f32 %v1196, %v1337
        %v1440 = vadd.f32 %v1198, %v1337
        %v1441 = vadd.f32 %v1201, %v1337
        %v1442 = vadd.f32 %v1203, %v1337
        %v1443 = vadd.f32 %v1206, %v1337
        %v1444 = vadd.f32 %v1208, %v1337
        %v1445 = vadd.f32 %v1211, %v1338
        %v1446 = vadd.f32 %v1213, %v1338
        %v1447 = vadd.f32 %v1216, %v1338
        %v1448 = vadd.f32 %v1218, %v1338
        %v1449 = vadd.f32 %v1221, %v1338
        %v1450 = vadd.f32 %v1223, %v1338
        %v1451 = vpack.c.bf16 %v1355, %v1355
        %v1452 = vpack.c.bf16 %v1356, %v1356
        %v1453 = vpack.c.bf16 %v1357, %v1357
        %v1454 = vpack.c.bf16 %v1358, %v1358
        %v1455 = vpack.c.bf16 %v1359, %v1359
        %v1456 = vpack.c.bf16 %v1360, %v1360
        %v1457 = vpack.c.bf16 %v1361, %v1361
        %v1458 = vpack.c.bf16 %v1362, %v1362
        %v1459 = vpack.c.bf16 %v1363, %v1363
        %v1460 = vpack.c.bf16 %v1364, %v1364
        %v1461 = vpack.c.bf16 %v1365, %v1365
        %v1462 = vpack.c.bf16 %v1366, %v1366
        %v1463 = vpack.c.bf16 %v1367, %v1367
        %v1464 = vpack.c.bf16 %v1368, %v1368
        %v1465 = vpack.c.bf16 %v1369, %v1369
        %v1466 = vpack.c.bf16 %v1370, %v1370
        %v1467 = vpack.c.bf16 %v1371, %v1371
        %v1468 = vpack.c.bf16 %v1372, %v1372
        %v1469 = vpack.c.bf16 %v1373, %v1373
        %v1470 = vpack.c.bf16 %v1374, %v1374
        %v1471 = vpack.c.bf16 %v1375, %v1375
        %v1472 = vpack.c.bf16 %v1376, %v1376
        %v1473 = vpack.c.bf16 %v1377, %v1377
        %v1474 = vpack.c.bf16 %v1378, %v1378
        %v1475 = vpack.c.bf16 %v1379, %v1379
        %v1476 = vpack.c.bf16 %v1380, %v1380
        %v1477 = vpack.c.bf16 %v1381, %v1381
        %v1478 = vpack.c.bf16 %v1382, %v1382
        %v1479 = vpack.c.bf16 %v1383, %v1383
        %v1480 = vpack.c.bf16 %v1384, %v1384
        %v1481 = vpack.c.bf16 %v1385, %v1385
        %v1482 = vpack.c.bf16 %v1386, %v1386
        %v1483 = vpack.c.bf16 %v1387, %v1387
        %v1484 = vpack.c.bf16 %v1388, %v1388
        %v1485 = vpack.c.bf16 %v1389, %v1389
        %v1486 = vpack.c.bf16 %v1390, %v1390
        %v1487 = vpack.c.bf16 %v1391, %v1391
        %v1488 = vpack.c.bf16 %v1392, %v1392
        %v1489 = vpack.c.bf16 %v1393, %v1393
        %v1490 = vpack.c.bf16 %v1394, %v1394
        %v1491 = vpack.c.bf16 %v1395, %v1395
        %v1492 = vpack.c.bf16 %v1396, %v1396
        %v1493 = vpack.c.bf16 %v1397, %v1397
        %v1494 = vpack.c.bf16 %v1398, %v1398
        %v1495 = vpack.c.bf16 %v1399, %v1399
        %v1496 = vpack.c.bf16 %v1400, %v1400
        %v1497 = vpack.c.bf16 %v1401, %v1401
        %v1498 = vpack.c.bf16 %v1402, %v1402
        %v1499 = vpack.c.bf16 %v1403, %v1403
        %v1500 = vpack.c.bf16 %v1404, %v1404
        %v1501 = vpack.c.bf16 %v1405, %v1405
        %v1502 = vpack.c.bf16 %v1406, %v1406
        %v1503 = vpack.c.bf16 %v1407, %v1407
        %v1504 = vpack.c.bf16 %v1408, %v1408
        %v1505 = vpack.c.bf16 %v1409, %v1409
        %v1506 = vpack.c.bf16 %v1410, %v1410
        %v1507 = vpack.c.bf16 %v1411, %v1411
        %v1508 = vpack.c.bf16 %v1412, %v1412
        %v1509 = vpack.c.bf16 %v1413, %v1413
        %v1510 = vpack.c.bf16 %v1414, %v1414
        %v1511 = vpack.c.bf16 %v1415, %v1415
        %v1512 = vpack.c.bf16 %v1416, %v1416
        %v1513 = vpack.c.bf16 %v1417, %v1417
        %v1514 = vpack.c.bf16 %v1418, %v1418
        %v1515 = vpack.c.bf16 %v1419, %v1419
        %v1516 = vpack.c.bf16 %v1420, %v1420
        %v1517 = vpack.c.bf16 %v1421, %v1421
        %v1518 = vpack.c.bf16 %v1422, %v1422
        %v1519 = vpack.c.bf16 %v1423, %v1423
        %v1520 = vpack.c.bf16 %v1424, %v1424
        %v1521 = vpack.c.bf16 %v1425, %v1425
        %v1522 = vpack.c.bf16 %v1426, %v1426
        %v1523 = vpack.c.bf16 %v1427, %v1427
        %v1524 = vpack.c.bf16 %v1428, %v1428
        %v1525 = vpack.c.bf16 %v1429, %v1429
        %v1526 = vpack.c.bf16 %v1430, %v1430
        %v1527 = vpack.c.bf16 %v1431, %v1431
        %v1528 = vpack.c.bf16 %v1432, %v1432
        %v1529 = vpack.c.bf16 %v1433, %v1433
        %v1530 = vpack.c.bf16 %v1434, %v1434
        %v1531 = vpack.c.bf16 %v1435, %v1435
        %v1532 = vpack.c.bf16 %v1436, %v1436
        %v1533 = vpack.c.bf16 %v1437, %v1437
        %v1534 = vpack.c.bf16 %v1438, %v1438
        %v1535 = vpack.c.bf16 %v1439, %v1439
        %v1536 = vpack.c.bf16 %v1440, %v1440
        %v1537 = vpack.c.bf16 %v1441, %v1441
        %v1538 = vpack.c.bf16 %v1442, %v1442
        %v1539 = vpack.c.bf16 %v1443, %v1443
        %v1540 = vpack.c.bf16 %v1444, %v1444
        %v1541 = vpack.c.bf16 %v1445, %v1445
        %v1542 = vpack.c.bf16 %v1446, %v1446
        %v1543 = vpack.c.bf16 %v1447, %v1447
        %v1544 = vpack.c.bf16 %v1448, %v1448
        %v1545 = vpack.c.bf16 %v1449, %v1449
        %v1546 = vpack.c.bf16 %v1450, %v1450
        %v1547 = vunpack.c.l.bf16 %v1451
        %v1548 = vunpack.c.l.bf16 %v1452
        %v1549 = vunpack.c.l.bf16 %v1453
        %v1550 = vunpack.c.l.bf16 %v1454
        %v1551 = vunpack.c.l.bf16 %v1455
        %v1552 = vunpack.c.l.bf16 %v1456
        %v1553 = vunpack.c.l.bf16 %v1457
        %v1554 = vunpack.c.l.bf16 %v1458
        %v1555 = vunpack.c.l.bf16 %v1459
        %v1556 = vunpack.c.l.bf16 %v1460
        %v1557 = vunpack.c.l.bf16 %v1461
        %v1558 = vunpack.c.l.bf16 %v1462
        %v1559 = vunpack.c.l.bf16 %v1463
        %v1560 = vunpack.c.l.bf16 %v1464
        %v1561 = vunpack.c.l.bf16 %v1465
        %v1562 = vunpack.c.l.bf16 %v1466
        %v1563 = vunpack.c.l.bf16 %v1467
        %v1564 = vunpack.c.l.bf16 %v1468
        %v1565 = vunpack.c.l.bf16 %v1469
        %v1566 = vunpack.c.l.bf16 %v1470
        %v1567 = vunpack.c.l.bf16 %v1471
        %v1568 = vunpack.c.l.bf16 %v1472
        %v1569 = vunpack.c.l.bf16 %v1473
        %v1570 = vunpack.c.l.bf16 %v1474
        %v1571 = vunpack.c.l.bf16 %v1475
        %v1572 = vunpack.c.l.bf16 %v1476
        %v1573 = vunpack.c.l.bf16 %v1477
        %v1574 = vunpack.c.l.bf16 %v1478
        %v1575 = vunpack.c.l.bf16 %v1479
        %v1576 = vunpack.c.l.bf16 %v1480
        %v1577 = vunpack.c.l.bf16 %v1481
        %v1578 = vunpack.c.l.bf16 %v1482
        %v1579 = vunpack.c.l.bf16 %v1483
        %v1580 = vunpack.c.l.bf16 %v1484
        %v1581 = vunpack.c.l.bf16 %v1485
        %v1582 = vunpack.c.l.bf16 %v1486
        %v1583 = vunpack.c.l.bf16 %v1487
        %v1584 = vunpack.c.l.bf16 %v1488
        %v1585 = vunpack.c.l.bf16 %v1489
        %v1586 = vunpack.c.l.bf16 %v1490
        %v1587 = vunpack.c.l.bf16 %v1491
        %v1588 = vunpack.c.l.bf16 %v1492
        %v1589 = vunpack.c.l.bf16 %v1493
        %v1590 = vunpack.c.l.bf16 %v1494
        %v1591 = vunpack.c.l.bf16 %v1495
        %v1592 = vunpack.c.l.bf16 %v1496
        %v1593 = vunpack.c.l.bf16 %v1497
        %v1594 = vunpack.c.l.bf16 %v1498
        %v1595 = vunpack.c.l.bf16 %v1499
        %v1596 = vunpack.c.l.bf16 %v1500
        %v1597 = vunpack.c.l.bf16 %v1501
        %v1598 = vunpack.c.l.bf16 %v1502
        %v1599 = vunpack.c.l.bf16 %v1503
        %v1600 = vunpack.c.l.bf16 %v1504
        %v1601 = vunpack.c.l.bf16 %v1505
        %v1602 = vunpack.c.l.bf16 %v1506
        %v1603 = vunpack.c.l.bf16 %v1507
        %v1604 = vunpack.c.l.bf16 %v1508
        %v1605 = vunpack.c.l.bf16 %v1509
        %v1606 = vunpack.c.l.bf16 %v1510
        %v1607 = vunpack.c.l.bf16 %v1511
        %v1608 = vunpack.c.l.bf16 %v1512
        %v1609 = vunpack.c.l.bf16 %v1513
        %v1610 = vunpack.c.l.bf16 %v1514
        %v1611 = vunpack.c.l.bf16 %v1515
        %v1612 = vunpack.c.l.bf16 %v1516
        %v1613 = vunpack.c.l.bf16 %v1517
        %v1614 = vunpack.c.l.bf16 %v1518
        %v1615 = vunpack.c.l.bf16 %v1519
        %v1616 = vunpack.c.l.bf16 %v1520
        %v1617 = vunpack.c.l.bf16 %v1521
        %v1618 = vunpack.c.l.bf16 %v1522
        %v1619 = vunpack.c.l.bf16 %v1523
        %v1620 = vunpack.c.l.bf16 %v1524
        %v1621 = vunpack.c.l.bf16 %v1525
        %v1622 = vunpack.c.l.bf16 %v1526
        %v1623 = vunpack.c.l.bf16 %v1527
        %v1624 = vunpack.c.l.bf16 %v1528
        %v1625 = vunpack.c.l.bf16 %v1529
        %v1626 = vunpack.c.l.bf16 %v1530
        %v1627 = vunpack.c.l.bf16 %v1531
        %v1628 = vunpack.c.l.bf16 %v1532
        %v1629 = vunpack.c.l.bf16 %v1533
        %v1630 = vunpack.c.l.bf16 %v1534
        %v1631 = vunpack.c.l.bf16 %v1535
        %v1632 = vunpack.c.l.bf16 %v1536
        %v1633 = vunpack.c.l.bf16 %v1537
        %v1634 = vunpack.c.l.bf16 %v1538
        %v1635 = vunpack.c.l.bf16 %v1539
        %v1636 = vunpack.c.l.bf16 %v1540
        %v1637 = vunpack.c.l.bf16 %v1541
        %v1638 = vunpack.c.l.bf16 %v1542
        %v1639 = vunpack.c.l.bf16 %v1543
        %v1640 = vunpack.c.l.bf16 %v1544
        %v1641 = vunpack.c.l.bf16 %v1545
        %v1642 = vunpack.c.l.bf16 %v1546
        %v1643 = vtanh.pop %v1547
        %v1644 = vtanh.pop %v1548
        %v1645 = vtanh.pop %v1549
        %v1646 = vtanh.pop %v1550
        %v1647 = vtanh.pop %v1551
        %v1648 = vtanh.pop %v1552
        %v1649 = vtanh.pop %v1553
        %v1650 = vtanh.pop %v1554
        %v1651 = vtanh.pop %v1555
        %v1652 = vtanh.pop %v1556
        %v1653 = vtanh.pop %v1557
        %v1654 = vtanh.pop %v1558
        %v1655 = vtanh.pop %v1559
        %v1656 = vtanh.pop %v1560
        %v1657 = vtanh.pop %v1561
        %v1658 = vtanh.pop %v1562
        %v1659 = vtanh.pop %v1563
        %v1660 = vtanh.pop %v1564
        %v1661 = vtanh.pop %v1565
        %v1662 = vtanh.pop %v1566
        %v1663 = vtanh.pop %v1567
        %v1664 = vtanh.pop %v1568
        %v1665 = vtanh.pop %v1569
        %v1666 = vtanh.pop %v1570
        %v1667 = vtanh.pop %v1571
        %v1668 = vtanh.pop %v1572
        %v1669 = vtanh.pop %v1573
        %v1670 = vtanh.pop %v1574
        %v1671 = vtanh.pop %v1575
        %v1672 = vtanh.pop %v1576
        %v1673 = vtanh.pop %v1577
        %v1674 = vtanh.pop %v1578
        %v1675 = vtanh.pop %v1579
        %v1676 = vtanh.pop %v1580
        %v1677 = vtanh.pop %v1581
        %v1678 = vtanh.pop %v1582
        %v1679 = vtanh.pop %v1583
        %v1680 = vtanh.pop %v1584
        %v1681 = vtanh.pop %v1585
        %v1682 = vtanh.pop %v1586
        %v1683 = vtanh.pop %v1587
        %v1684 = vtanh.pop %v1588
        %v1685 = vtanh.pop %v1589
        %v1686 = vtanh.pop %v1590
        %v1687 = vtanh.pop %v1591
        %v1688 = vtanh.pop %v1592
        %v1689 = vtanh.pop %v1593
        %v1690 = vtanh.pop %v1594
        %v1691 = vtanh.pop %v1595
        %v1692 = vtanh.pop %v1596
        %v1693 = vtanh.pop %v1597
        %v1694 = vtanh.pop %v1598
        %v1695 = vtanh.pop %v1599
        %v1696 = vtanh.pop %v1600
        %v1697 = vtanh.pop %v1601
        %v1698 = vtanh.pop %v1602
        %v1699 = vtanh.pop %v1603
        %v1700 = vtanh.pop %v1604
        %v1701 = vtanh.pop %v1605
        %v1702 = vtanh.pop %v1606
        %v1703 = vtanh.pop %v1607
        %v1704 = vtanh.pop %v1608
        %v1705 = vtanh.pop %v1609
        %v1706 = vtanh.pop %v1610
        %v1707 = vtanh.pop %v1611
        %v1708 = vtanh.pop %v1612
        %v1709 = vtanh.pop %v1613
        %v1710 = vtanh.pop %v1614
        %v1711 = vtanh.pop %v1615
        %v1712 = vtanh.pop %v1616
        %v1713 = vtanh.pop %v1617
        %v1714 = vtanh.pop %v1618
        %v1715 = vtanh.pop %v1619
        %v1716 = vtanh.pop %v1620
        %v1717 = vtanh.pop %v1621
        %v1718 = vtanh.pop %v1622
        %v1719 = vtanh.pop %v1623
        %v1720 = vtanh.pop %v1624
        %v1721 = vtanh.pop %v1625
        %v1722 = vtanh.pop %v1626
        %v1723 = vtanh.pop %v1627
        %v1724 = vtanh.pop %v1628
        %v1725 = vtanh.pop %v1629
        %v1726 = vtanh.pop %v1630
        %v1727 = vtanh.pop %v1631
        %v1728 = vtanh.pop %v1632
        %v1729 = vtanh.pop %v1633
        %v1730 = vtanh.pop %v1634
        %v1731 = vtanh.pop %v1635
        %v1732 = vtanh.pop %v1636
        %v1733 = vtanh.pop %v1637
        %v1734 = vtanh.pop %v1638
        %v1735 = vtanh.pop %v1639
        %v1736 = vtanh.pop %v1640
        %v1737 = vtanh.pop %v1641
        %v1738 = vtanh.pop %v1642
        %v1739 = vpack.c.bf16 %v1643, %v1643
        %v1740 = vpack.c.bf16 %v1644, %v1644
        %v1741 = vpack.c.bf16 %v1645, %v1645
        %v1742 = vpack.c.bf16 %v1646, %v1646
        %v1743 = vpack.c.bf16 %v1647, %v1647
        %v1744 = vpack.c.bf16 %v1648, %v1648
        %v1745 = vpack.c.bf16 %v1649, %v1649
        %v1746 = vpack.c.bf16 %v1650, %v1650
        %v1747 = vpack.c.bf16 %v1651, %v1651
        %v1748 = vpack.c.bf16 %v1652, %v1652
        %v1749 = vpack.c.bf16 %v1653, %v1653
        %v1750 = vpack.c.bf16 %v1654, %v1654
        %v1751 = vpack.c.bf16 %v1655, %v1655
        %v1752 = vpack.c.bf16 %v1656, %v1656
        %v1753 = vpack.c.bf16 %v1657, %v1657
        %v1754 = vpack.c.bf16 %v1658, %v1658
        %v1755 = vpack.c.bf16 %v1659, %v1659
        %v1756 = vpack.c.bf16 %v1660, %v1660
        %v1757 = vpack.c.bf16 %v1661, %v1661
        %v1758 = vpack.c.bf16 %v1662, %v1662
        %v1759 = vpack.c.bf16 %v1663, %v1663
        %v1760 = vpack.c.bf16 %v1664, %v1664
        %v1761 = vpack.c.bf16 %v1665, %v1665
        %v1762 = vpack.c.bf16 %v1666, %v1666
        %v1763 = vpack.c.bf16 %v1667, %v1667
        %v1764 = vpack.c.bf16 %v1668, %v1668
        %v1765 = vpack.c.bf16 %v1669, %v1669
        %v1766 = vpack.c.bf16 %v1670, %v1670
        %v1767 = vpack.c.bf16 %v1671, %v1671
        %v1768 = vpack.c.bf16 %v1672, %v1672
        %v1769 = vpack.c.bf16 %v1673, %v1673
        %v1770 = vpack.c.bf16 %v1674, %v1674
        %v1771 = vpack.c.bf16 %v1675, %v1675
        %v1772 = vpack.c.bf16 %v1676, %v1676
        %v1773 = vpack.c.bf16 %v1677, %v1677
        %v1774 = vpack.c.bf16 %v1678, %v1678
        %v1775 = vpack.c.bf16 %v1679, %v1679
        %v1776 = vpack.c.bf16 %v1680, %v1680
        %v1777 = vpack.c.bf16 %v1681, %v1681
        %v1778 = vpack.c.bf16 %v1682, %v1682
        %v1779 = vpack.c.bf16 %v1683, %v1683
        %v1780 = vpack.c.bf16 %v1684, %v1684
        %v1781 = vpack.c.bf16 %v1685, %v1685
        %v1782 = vpack.c.bf16 %v1686, %v1686
        %v1783 = vpack.c.bf16 %v1687, %v1687
        %v1784 = vpack.c.bf16 %v1688, %v1688
        %v1785 = vpack.c.bf16 %v1689, %v1689
        %v1786 = vpack.c.bf16 %v1690, %v1690
        %v1787 = vpack.c.bf16 %v1691, %v1691
        %v1788 = vpack.c.bf16 %v1692, %v1692
        %v1789 = vpack.c.bf16 %v1693, %v1693
        %v1790 = vpack.c.bf16 %v1694, %v1694
        %v1791 = vpack.c.bf16 %v1695, %v1695
        %v1792 = vpack.c.bf16 %v1696, %v1696
        %v1793 = vpack.c.bf16 %v1697, %v1697
        %v1794 = vpack.c.bf16 %v1698, %v1698
        %v1795 = vpack.c.bf16 %v1699, %v1699
        %v1796 = vpack.c.bf16 %v1700, %v1700
        %v1797 = vpack.c.bf16 %v1701, %v1701
        %v1798 = vpack.c.bf16 %v1702, %v1702
        %v1799 = vpack.c.bf16 %v1703, %v1703
        %v1800 = vpack.c.bf16 %v1704, %v1704
        %v1801 = vpack.c.bf16 %v1705, %v1705
        %v1802 = vpack.c.bf16 %v1706, %v1706
        %v1803 = vpack.c.bf16 %v1707, %v1707
        %v1804 = vpack.c.bf16 %v1708, %v1708
        %v1805 = vpack.c.bf16 %v1709, %v1709
        %v1806 = vpack.c.bf16 %v1710, %v1710
        %v1807 = vpack.c.bf16 %v1711, %v1711
        %v1808 = vpack.c.bf16 %v1712, %v1712
        %v1809 = vpack.c.bf16 %v1713, %v1713
        %v1810 = vpack.c.bf16 %v1714, %v1714
        %v1811 = vpack.c.bf16 %v1715, %v1715
        %v1812 = vpack.c.bf16 %v1716, %v1716
        %v1813 = vpack.c.bf16 %v1717, %v1717
        %v1814 = vpack.c.bf16 %v1718, %v1718
        %v1815 = vpack.c.bf16 %v1719, %v1719
        %v1816 = vpack.c.bf16 %v1720, %v1720
        %v1817 = vpack.c.bf16 %v1721, %v1721
        %v1818 = vpack.c.bf16 %v1722, %v1722
        %v1819 = vpack.c.bf16 %v1723, %v1723
        %v1820 = vpack.c.bf16 %v1724, %v1724
        %v1821 = vpack.c.bf16 %v1725, %v1725
        %v1822 = vpack.c.bf16 %v1726, %v1726
        %v1823 = vpack.c.bf16 %v1727, %v1727
        %v1824 = vpack.c.bf16 %v1728, %v1728
        %v1825 = vpack.c.bf16 %v1729, %v1729
        %v1826 = vpack.c.bf16 %v1730, %v1730
        %v1827 = vpack.c.bf16 %v1731, %v1731
        %v1828 = vpack.c.bf16 %v1732, %v1732
        %v1829 = vpack.c.bf16 %v1733, %v1733
        %v1830 = vpack.c.bf16 %v1734, %v1734
        %v1831 = vpack.c.bf16 %v1735, %v1735
        %v1832 = vpack.c.bf16 %v1736, %v1736
        %v1833 = vpack.c.bf16 %v1737, %v1737
        %v1834 = vpack.c.bf16 %v1738, %v1738
        %v1835 = vunpack.c.l.bf16 %v1739
        %v1836 = vunpack.c.l.bf16 %v1740
        %v1837 = vunpack.c.l.bf16 %v1741
        %v1838 = vunpack.c.l.bf16 %v1742
        %v1839 = vunpack.c.l.bf16 %v1743
        %v1840 = vunpack.c.l.bf16 %v1744
        %v1841 = vunpack.c.l.bf16 %v1745
        %v1842 = vunpack.c.l.bf16 %v1746
        %v1843 = vunpack.c.l.bf16 %v1747
        %v1844 = vunpack.c.l.bf16 %v1748
        %v1845 = vunpack.c.l.bf16 %v1749
        %v1846 = vunpack.c.l.bf16 %v1750
        %v1847 = vunpack.c.l.bf16 %v1751
        %v1848 = vunpack.c.l.bf16 %v1752
        %v1849 = vunpack.c.l.bf16 %v1753
        %v1850 = vunpack.c.l.bf16 %v1754
        %v1851 = vunpack.c.l.bf16 %v1755
        %v1852 = vunpack.c.l.bf16 %v1756
        %v1853 = vunpack.c.l.bf16 %v1757
        %v1854 = vunpack.c.l.bf16 %v1758
        %v1855 = vunpack.c.l.bf16 %v1759
        %v1856 = vunpack.c.l.bf16 %v1760
        %v1857 = vunpack.c.l.bf16 %v1761
        %v1858 = vunpack.c.l.bf16 %v1762
        %v1859 = vunpack.c.l.bf16 %v1763
        %v1860 = vunpack.c.l.bf16 %v1764
        %v1861 = vunpack.c.l.bf16 %v1765
        %v1862 = vunpack.c.l.bf16 %v1766
        %v1863 = vunpack.c.l.bf16 %v1767
        %v1864 = vunpack.c.l.bf16 %v1768
        %v1865 = vunpack.c.l.bf16 %v1769
        %v1866 = vunpack.c.l.bf16 %v1770
        %v1867 = vunpack.c.l.bf16 %v1771
        %v1868 = vunpack.c.l.bf16 %v1772
        %v1869 = vunpack.c.l.bf16 %v1773
        %v1870 = vunpack.c.l.bf16 %v1774
        %v1871 = vunpack.c.l.bf16 %v1775
        %v1872 = vunpack.c.l.bf16 %v1776
        %v1873 = vunpack.c.l.bf16 %v1777
        %v1874 = vunpack.c.l.bf16 %v1778
        %v1875 = vunpack.c.l.bf16 %v1779
        %v1876 = vunpack.c.l.bf16 %v1780
        %v1877 = vunpack.c.l.bf16 %v1781
        %v1878 = vunpack.c.l.bf16 %v1782
        %v1879 = vunpack.c.l.bf16 %v1783
        %v1880 = vunpack.c.l.bf16 %v1784
        %v1881 = vunpack.c.l.bf16 %v1785
        %v1882 = vunpack.c.l.bf16 %v1786
        %v1883 = vunpack.c.l.bf16 %v1787
        %v1884 = vunpack.c.l.bf16 %v1788
        %v1885 = vunpack.c.l.bf16 %v1789
        %v1886 = vunpack.c.l.bf16 %v1790
        %v1887 = vunpack.c.l.bf16 %v1791
        %v1888 = vunpack.c.l.bf16 %v1792
        %v1889 = vunpack.c.l.bf16 %v1793
        %v1890 = vunpack.c.l.bf16 %v1794
        %v1891 = vunpack.c.l.bf16 %v1795
        %v1892 = vunpack.c.l.bf16 %v1796
        %v1893 = vunpack.c.l.bf16 %v1797
        %v1894 = vunpack.c.l.bf16 %v1798
        %v1895 = vunpack.c.l.bf16 %v1799
        %v1896 = vunpack.c.l.bf16 %v1800
        %v1897 = vunpack.c.l.bf16 %v1801
        %v1898 = vunpack.c.l.bf16 %v1802
        %v1899 = vunpack.c.l.bf16 %v1803
        %v1900 = vunpack.c.l.bf16 %v1804
        %v1901 = vunpack.c.l.bf16 %v1805
        %v1902 = vunpack.c.l.bf16 %v1806
        %v1903 = vunpack.c.l.bf16 %v1807
        %v1904 = vunpack.c.l.bf16 %v1808
        %v1905 = vunpack.c.l.bf16 %v1809
        %v1906 = vunpack.c.l.bf16 %v1810
        %v1907 = vunpack.c.l.bf16 %v1811
        %v1908 = vunpack.c.l.bf16 %v1812
        %v1909 = vunpack.c.l.bf16 %v1813
        %v1910 = vunpack.c.l.bf16 %v1814
        %v1911 = vunpack.c.l.bf16 %v1815
        %v1912 = vunpack.c.l.bf16 %v1816
        %v1913 = vunpack.c.l.bf16 %v1817
        %v1914 = vunpack.c.l.bf16 %v1818
        %v1915 = vunpack.c.l.bf16 %v1819
        %v1916 = vunpack.c.l.bf16 %v1820
        %v1917 = vunpack.c.l.bf16 %v1821
        %v1918 = vunpack.c.l.bf16 %v1822
        %v1919 = vunpack.c.l.bf16 %v1823
        %v1920 = vunpack.c.l.bf16 %v1824
        %v1921 = vunpack.c.l.bf16 %v1825
        %v1922 = vunpack.c.l.bf16 %v1826
        %v1923 = vunpack.c.l.bf16 %v1827
        %v1924 = vunpack.c.l.bf16 %v1828
        %v1925 = vunpack.c.l.bf16 %v1829
        %v1926 = vunpack.c.l.bf16 %v1830
        %v1927 = vunpack.c.l.bf16 %v1831
        %v1928 = vunpack.c.l.bf16 %v1832
        %v1929 = vunpack.c.l.bf16 %v1833
        %v1930 = vunpack.c.l.bf16 %v1834
        %v1931 = vperm.slane %v622, 0
        %v1932 = vmul.f32 %v1835, %v1931
        %v1933 = vmul.f32 %v1836, %v1931
        %v1934 = vmul.f32 %v1837, %v1931
        %v1935 = vmul.f32 %v1838, %v1931
        %v1936 = vmul.f32 %v1839, %v1931
        %v1937 = vmul.f32 %v1840, %v1931
        %v1938 = vmul.f32 %v1841, %v1931
        %v1939 = vmul.f32 %v1842, %v1931
        %v1940 = vmul.f32 %v1843, %v1931
        %v1941 = vmul.f32 %v1844, %v1931
        %v1942 = vmul.f32 %v1845, %v1931
        %v1943 = vmul.f32 %v1846, %v1931
        %v1944 = vmul.f32 %v1847, %v1931
        %v1945 = vmul.f32 %v1848, %v1931
        %v1946 = vmul.f32 %v1849, %v1931
        %v1947 = vmul.f32 %v1850, %v1931
        %v1948 = vmul.f32 %v1851, %v1931
        %v1949 = vmul.f32 %v1852, %v1931
        %v1950 = vmul.f32 %v1853, %v1931
        %v1951 = vmul.f32 %v1854, %v1931
        %v1952 = vmul.f32 %v1855, %v1931
        %v1953 = vmul.f32 %v1856, %v1931
        %v1954 = vmul.f32 %v1857, %v1931
        %v1955 = vmul.f32 %v1858, %v1931
        %v1956 = vmul.f32 %v1859, %v1931
        %v1957 = vmul.f32 %v1860, %v1931
        %v1958 = vmul.f32 %v1861, %v1931
        %v1959 = vmul.f32 %v1862, %v1931
        %v1960 = vmul.f32 %v1863, %v1931
        %v1961 = vmul.f32 %v1864, %v1931
        %v1962 = vmul.f32 %v1865, %v1931
        %v1963 = vmul.f32 %v1866, %v1931
        %v1964 = vmul.f32 %v1867, %v1931
        %v1965 = vmul.f32 %v1868, %v1931
        %v1966 = vmul.f32 %v1869, %v1931
        %v1967 = vmul.f32 %v1870, %v1931
        %v1968 = vmul.f32 %v1871, %v1931
        %v1969 = vmul.f32 %v1872, %v1931
        %v1970 = vmul.f32 %v1873, %v1931
        %v1971 = vmul.f32 %v1874, %v1931
        %v1972 = vmul.f32 %v1875, %v1931
        %v1973 = vmul.f32 %v1876, %v1931
        %v1974 = vmul.f32 %v1877, %v1931
        %v1975 = vmul.f32 %v1878, %v1931
        %v1976 = vmul.f32 %v1879, %v1931
        %v1977 = vmul.f32 %v1880, %v1931
        %v1978 = vmul.f32 %v1881, %v1931
        %v1979 = vmul.f32 %v1882, %v1931
        %v1980 = vmul.f32 %v1883, %v1931
        %v1981 = vmul.f32 %v1884, %v1931
        %v1982 = vmul.f32 %v1885, %v1931
        %v1983 = vmul.f32 %v1886, %v1931
        %v1984 = vmul.f32 %v1887, %v1931
        %v1985 = vmul.f32 %v1888, %v1931
        %v1986 = vmul.f32 %v1889, %v1931
        %v1987 = vmul.f32 %v1890, %v1931
        %v1988 = vmul.f32 %v1891, %v1931
        %v1989 = vmul.f32 %v1892, %v1931
        %v1990 = vmul.f32 %v1893, %v1931
        %v1991 = vmul.f32 %v1894, %v1931
        %v1992 = vmul.f32 %v1895, %v1931
        %v1993 = vmul.f32 %v1896, %v1931
        %v1994 = vmul.f32 %v1897, %v1931
        %v1995 = vmul.f32 %v1898, %v1931
        %v1996 = vmul.f32 %v1899, %v1931
        %v1997 = vmul.f32 %v1900, %v1931
        %v1998 = vmul.f32 %v1901, %v1931
        %v1999 = vmul.f32 %v1902, %v1931
        %v2000 = vmul.f32 %v1903, %v1931
        %v2001 = vmul.f32 %v1904, %v1931
        %v2002 = vmul.f32 %v1905, %v1931
        %v2003 = vmul.f32 %v1906, %v1931
        %v2004 = vmul.f32 %v1907, %v1931
        %v2005 = vmul.f32 %v1908, %v1931
        %v2006 = vmul.f32 %v1909, %v1931
        %v2007 = vmul.f32 %v1910, %v1931
        %v2008 = vmul.f32 %v1911, %v1931
        %v2009 = vmul.f32 %v1912, %v1931
        %v2010 = vmul.f32 %v1913, %v1931
        %v2011 = vmul.f32 %v1914, %v1931
        %v2012 = vmul.f32 %v1915, %v1931
        %v2013 = vmul.f32 %v1916, %v1931
        %v2014 = vmul.f32 %v1917, %v1931
        %v2015 = vmul.f32 %v1918, %v1931
        %v2016 = vmul.f32 %v1919, %v1931
        %v2017 = vmul.f32 %v1920, %v1931
        %v2018 = vmul.f32 %v1921, %v1931
        %v2019 = vmul.f32 %v1922, %v1931
        %v2020 = vmul.f32 %v1923, %v1931
        %v2021 = vmul.f32 %v1924, %v1931
        %v2022 = vmul.f32 %v1925, %v1931
        %v2023 = vmul.f32 %v1926, %v1931
        %v2024 = vmul.f32 %v1927, %v1931
        %v2025 = vmul.f32 %v1928, %v1931
        %v2026 = vmul.f32 %v1929, %v1931
        %v2027 = vmul.f32 %v1930, %v1931
        %2028 = vadd.xlane.f32.xlu0 %v1932
        %v2029 = vpop.xlane.xlu0 %2028
        %2030 = vadd.xlane.f32.xlu0 %v1933
        %v2031 = vpop.xlane.xlu0 %2030
        %2032 = vadd.xlane.f32.xlu0 %v1934
        %v2033 = vpop.xlane.xlu0 %2032
        %2034 = vadd.xlane.f32.xlu0 %v1935
        %v2035 = vpop.xlane.xlu0 %2034
        %2036 = vadd.xlane.f32.xlu0 %v1936
        %v2037 = vpop.xlane.xlu0 %2036
        %2038 = vadd.xlane.f32.xlu0 %v1937
        %v2039 = vpop.xlane.xlu0 %2038
        %2040 = vadd.xlane.f32.xlu0 %v1938
        %v2041 = vpop.xlane.xlu0 %2040
        %2042 = vadd.xlane.f32.xlu0 %v1939
        %v2043 = vpop.xlane.xlu0 %2042
        %2044 = vadd.xlane.f32.xlu0 %v1940
        %v2045 = vpop.xlane.xlu0 %2044
        %2046 = vadd.xlane.f32.xlu0 %v1941
        %v2047 = vpop.xlane.xlu0 %2046
        %2048 = vadd.xlane.f32.xlu0 %v1942
        %v2049 = vpop.xlane.xlu0 %2048
        %2050 = vadd.xlane.f32.xlu0 %v1943
        %v2051 = vpop.xlane.xlu0 %2050
        %2052 = vadd.xlane.f32.xlu0 %v1944
        %v2053 = vpop.xlane.xlu0 %2052
        %2054 = vadd.xlane.f32.xlu0 %v1945
        %v2055 = vpop.xlane.xlu0 %2054
        %2056 = vadd.xlane.f32.xlu0 %v1946
        %v2057 = vpop.xlane.xlu0 %2056
        %2058 = vadd.xlane.f32.xlu0 %v1947
        %v2059 = vpop.xlane.xlu0 %2058
        %2060 = vadd.xlane.f32.xlu0 %v1948
        %v2061 = vpop.xlane.xlu0 %2060
        %2062 = vadd.xlane.f32.xlu0 %v1949
        %v2063 = vpop.xlane.xlu0 %2062
        %2064 = vadd.xlane.f32.xlu0 %v1950
        %v2065 = vpop.xlane.xlu0 %2064
        %2066 = vadd.xlane.f32.xlu0 %v1951
        %v2067 = vpop.xlane.xlu0 %2066
        %2068 = vadd.xlane.f32.xlu0 %v1952
        %v2069 = vpop.xlane.xlu0 %2068
        %2070 = vadd.xlane.f32.xlu0 %v1953
        %v2071 = vpop.xlane.xlu0 %2070
        %2072 = vadd.xlane.f32.xlu0 %v1954
        %v2073 = vpop.xlane.xlu0 %2072
        %2074 = vadd.xlane.f32.xlu0 %v1955
        %v2075 = vpop.xlane.xlu0 %2074
        %2076 = vadd.xlane.f32.xlu0 %v1956
        %v2077 = vpop.xlane.xlu0 %2076
        %2078 = vadd.xlane.f32.xlu0 %v1957
        %v2079 = vpop.xlane.xlu0 %2078
        %2080 = vadd.xlane.f32.xlu0 %v1958
        %v2081 = vpop.xlane.xlu0 %2080
        %2082 = vadd.xlane.f32.xlu0 %v1959
        %v2083 = vpop.xlane.xlu0 %2082
        %2084 = vadd.xlane.f32.xlu0 %v1960
        %v2085 = vpop.xlane.xlu0 %2084
        %2086 = vadd.xlane.f32.xlu0 %v1961
        %v2087 = vpop.xlane.xlu0 %2086
        %2088 = vadd.xlane.f32.xlu0 %v1962
        %v2089 = vpop.xlane.xlu0 %2088
        %2090 = vadd.xlane.f32.xlu0 %v1963
        %v2091 = vpop.xlane.xlu0 %2090
        %2092 = vadd.xlane.f32.xlu0 %v1964
        %v2093 = vpop.xlane.xlu0 %2092
        %2094 = vadd.xlane.f32.xlu0 %v1965
        %v2095 = vpop.xlane.xlu0 %2094
        %2096 = vadd.xlane.f32.xlu0 %v1966
        %v2097 = vpop.xlane.xlu0 %2096
        %2098 = vadd.xlane.f32.xlu0 %v1967
        %v2099 = vpop.xlane.xlu0 %2098
        %2100 = vadd.xlane.f32.xlu0 %v1968
        %v2101 = vpop.xlane.xlu0 %2100
        %2102 = vadd.xlane.f32.xlu0 %v1969
        %v2103 = vpop.xlane.xlu0 %2102
        %2104 = vadd.xlane.f32.xlu0 %v1970
        %v2105 = vpop.xlane.xlu0 %2104
        %2106 = vadd.xlane.f32.xlu0 %v1971
        %v2107 = vpop.xlane.xlu0 %2106
        %2108 = vadd.xlane.f32.xlu0 %v1972
        %v2109 = vpop.xlane.xlu0 %2108
        %2110 = vadd.xlane.f32.xlu0 %v1973
        %v2111 = vpop.xlane.xlu0 %2110
        %2112 = vadd.xlane.f32.xlu0 %v1974
        %v2113 = vpop.xlane.xlu0 %2112
        %2114 = vadd.xlane.f32.xlu0 %v1975
        %v2115 = vpop.xlane.xlu0 %2114
        %2116 = vadd.xlane.f32.xlu0 %v1976
        %v2117 = vpop.xlane.xlu0 %2116
        %2118 = vadd.xlane.f32.xlu0 %v1977
        %v2119 = vpop.xlane.xlu0 %2118
        %2120 = vadd.xlane.f32.xlu0 %v1978
        %v2121 = vpop.xlane.xlu0 %2120
        %2122 = vadd.xlane.f32.xlu0 %v1979
        %v2123 = vpop.xlane.xlu0 %2122
        %2124 = vadd.xlane.f32.xlu0 %v1980
        %v2125 = vpop.xlane.xlu0 %2124
        %2126 = vadd.xlane.f32.xlu0 %v1981
        %v2127 = vpop.xlane.xlu0 %2126
        %2128 = vadd.xlane.f32.xlu0 %v1982
        %v2129 = vpop.xlane.xlu0 %2128
        %2130 = vadd.xlane.f32.xlu0 %v1983
        %v2131 = vpop.xlane.xlu0 %2130
        %2132 = vadd.xlane.f32.xlu0 %v1984
        %v2133 = vpop.xlane.xlu0 %2132
        %2134 = vadd.xlane.f32.xlu0 %v1985
        %v2135 = vpop.xlane.xlu0 %2134
        %2136 = vadd.xlane.f32.xlu0 %v1986
        %v2137 = vpop.xlane.xlu0 %2136
        %2138 = vadd.xlane.f32.xlu0 %v1987
        %v2139 = vpop.xlane.xlu0 %2138
        %2140 = vadd.xlane.f32.xlu0 %v1988
        %v2141 = vpop.xlane.xlu0 %2140
        %2142 = vadd.xlane.f32.xlu0 %v1989
        %v2143 = vpop.xlane.xlu0 %2142
        %2144 = vadd.xlane.f32.xlu0 %v1990
        %v2145 = vpop.xlane.xlu0 %2144
        %2146 = vadd.xlane.f32.xlu0 %v1991
        %v2147 = vpop.xlane.xlu0 %2146
        %2148 = vadd.xlane.f32.xlu0 %v1992
        %v2149 = vpop.xlane.xlu0 %2148
        %2150 = vadd.xlane.f32.xlu0 %v1993
        %v2151 = vpop.xlane.xlu0 %2150
        %2152 = vadd.xlane.f32.xlu0 %v1994
        %v2153 = vpop.xlane.xlu0 %2152
        %2154 = vadd.xlane.f32.xlu0 %v1995
        %v2155 = vpop.xlane.xlu0 %2154
        %2156 = vadd.xlane.f32.xlu0 %v1996
        %v2157 = vpop.xlane.xlu0 %2156
        %2158 = vadd.xlane.f32.xlu0 %v1997
        %v2159 = vpop.xlane.xlu0 %2158
        %2160 = vadd.xlane.f32.xlu0 %v1998
        %v2161 = vpop.xlane.xlu0 %2160
        %2162 = vadd.xlane.f32.xlu0 %v1999
        %v2163 = vpop.xlane.xlu0 %2162
        %2164 = vadd.xlane.f32.xlu0 %v2000
        %v2165 = vpop.xlane.xlu0 %2164
        %2166 = vadd.xlane.f32.xlu0 %v2001
        %v2167 = vpop.xlane.xlu0 %2166
        %2168 = vadd.xlane.f32.xlu0 %v2002
        %v2169 = vpop.xlane.xlu0 %2168
        %2170 = vadd.xlane.f32.xlu0 %v2003
        %v2171 = vpop.xlane.xlu0 %2170
        %2172 = vadd.xlane.f32.xlu0 %v2004
        %v2173 = vpop.xlane.xlu0 %2172
        %2174 = vadd.xlane.f32.xlu0 %v2005
        %v2175 = vpop.xlane.xlu0 %2174
        %2176 = vadd.xlane.f32.xlu0 %v2006
        %v2177 = vpop.xlane.xlu0 %2176
        %2178 = vadd.xlane.f32.xlu0 %v2007
        %v2179 = vpop.xlane.xlu0 %2178
        %2180 = vadd.xlane.f32.xlu0 %v2008
        %v2181 = vpop.xlane.xlu0 %2180
        %2182 = vadd.xlane.f32.xlu0 %v2009
        %v2183 = vpop.xlane.xlu0 %2182
        %2184 = vadd.xlane.f32.xlu0 %v2010
        %v2185 = vpop.xlane.xlu0 %2184
        %2186 = vadd.xlane.f32.xlu0 %v2011
        %v2187 = vpop.xlane.xlu0 %2186
        %2188 = vadd.xlane.f32.xlu0 %v2012
        %v2189 = vpop.xlane.xlu0 %2188
        %2190 = vadd.xlane.f32.xlu0 %v2013
        %v2191 = vpop.xlane.xlu0 %2190
        %2192 = vadd.xlane.f32.xlu0 %v2014
        %v2193 = vpop.xlane.xlu0 %2192
        %2194 = vadd.xlane.f32.xlu0 %v2015
        %v2195 = vpop.xlane.xlu0 %2194
        %2196 = vadd.xlane.f32.xlu0 %v2016
        %v2197 = vpop.xlane.xlu0 %2196
        %2198 = vadd.xlane.f32.xlu0 %v2017
        %v2199 = vpop.xlane.xlu0 %2198
        %2200 = vadd.xlane.f32.xlu0 %v2018
        %v2201 = vpop.xlane.xlu0 %2200
        %2202 = vadd.xlane.f32.xlu0 %v2019
        %v2203 = vpop.xlane.xlu0 %2202
        %2204 = vadd.xlane.f32.xlu0 %v2020
        %v2205 = vpop.xlane.xlu0 %2204
        %2206 = vadd.xlane.f32.xlu0 %v2021
        %v2207 = vpop.xlane.xlu0 %2206
        %2208 = vadd.xlane.f32.xlu0 %v2022
        %v2209 = vpop.xlane.xlu0 %2208
        %2210 = vadd.xlane.f32.xlu0 %v2023
        %v2211 = vpop.xlane.xlu0 %2210
        %2212 = vadd.xlane.f32.xlu0 %v2024
        %v2213 = vpop.xlane.xlu0 %2212
        %2214 = vadd.xlane.f32.xlu0 %v2025
        %v2215 = vpop.xlane.xlu0 %2214
        %2216 = vadd.xlane.f32.xlu0 %v2026
        %v2217 = vpop.xlane.xlu0 %2216
        %2218 = vadd.xlane.f32.xlu0 %v2027
        %v2219 = vpop.xlane.xlu0 %2218
        %v2220 = vlaneseq
        %v2221 = vand.u32 %v2220, 127
        %vm2222 = vcmp.lt.s32.totalorder %v2221, 36
        %v2319 = vperm.slane %v2029, %v2221
        %v2320 = vadd.s32 %v2221, 4294967288
        %v2321 = vperm.slane %v2031, %v2320
        %vm2322 = vcmask 130112
        %v2323 = vsel %vm2322, %v2321, %v2319
        %v2324 = vadd.s32 %v2221, 4294967280
        %v2325 = vperm.slane %v2033, %v2324
        %vm2326 = vcmask 195712
        %v2327 = vsel %vm2326, %v2325, %v2323
        %v2328 = vadd.s32 %v2221, 4294967272
        %v2329 = vperm.slane %v2035, %v2328
        %vm2330 = vcmask 261312
        %v2331 = vsel %vm2330, %v2329, %v2327
        %v2332 = vadd.s32 %v2221, 4294967264
        %v2333 = vperm.slane %v2037, %v2332
        %vm2334 = vcmask 326912
        %v2335 = vsel %vm2334, %v2333, %v2331
        %v2336 = vadd.s32 %v2221, 4294967256
        %v2337 = vperm.slane %v2039, %v2336
        %vm2338 = vcmask 392512
        %v2339 = vsel %vm2338, %v2337, %v2335
        %v2340 = vperm.slane %v2041, %v2221
        %v2341 = vperm.slane %v2043, %v2320
        %v2342 = vsel %vm2322, %v2341, %v2340
        %v2343 = vperm.slane %v2045, %v2324
        %v2344 = vsel %vm2326, %v2343, %v2342
        %v2345 = vperm.slane %v2047, %v2328
        %v2346 = vsel %vm2330, %v2345, %v2344
        %v2347 = vperm.slane %v2049, %v2332
        %v2348 = vsel %vm2334, %v2347, %v2346
        %v2349 = vperm.slane %v2051, %v2336
        %v2350 = vsel %vm2338, %v2349, %v2348
        %v2351 = vperm.slane %v2053, %v2221
        %v2352 = vperm.slane %v2055, %v2320
        %v2353 = vsel %vm2322, %v2352, %v2351
        %v2354 = vperm.slane %v2057, %v2324
        %v2355 = vsel %vm2326, %v2354, %v2353
        %v2356 = vperm.slane %v2059, %v2328
        %v2357 = vsel %vm2330, %v2356, %v2355
        %v2358 = vperm.slane %v2061, %v2332
        %v2359 = vsel %vm2334, %v2358, %v2357
        %v2360 = vperm.slane %v2063, %v2336
        %v2361 = vsel %vm2338, %v2360, %v2359
        %v2362 = vperm.slane %v2065, %v2221
        %v2363 = vperm.slane %v2067, %v2320
        %v2364 = vsel %vm2322, %v2363, %v2362
        %v2365 = vperm.slane %v2069, %v2324
        %v2366 = vsel %vm2326, %v2365, %v2364
        %v2367 = vperm.slane %v2071, %v2328
        %v2368 = vsel %vm2330, %v2367, %v2366
        %v2369 = vperm.slane %v2073, %v2332
        %v2370 = vsel %vm2334, %v2369, %v2368
        %v2371 = vperm.slane %v2075, %v2336
        %v2372 = vsel %vm2338, %v2371, %v2370
        %v2373 = vperm.slane %v2077, %v2221
        %v2374 = vperm.slane %v2079, %v2320
        %v2375 = vsel %vm2322, %v2374, %v2373
        %v2376 = vperm.slane %v2081, %v2324
        %v2377 = vsel %vm2326, %v2376, %v2375
        %v2378 = vperm.slane %v2083, %v2328
        %v2379 = vsel %vm2330, %v2378, %v2377
        %v2380 = vperm.slane %v2085, %v2332
        %v2381 = vsel %vm2334, %v2380, %v2379
        %v2382 = vperm.slane %v2087, %v2336
        %v2383 = vsel %vm2338, %v2382, %v2381
        %v2384 = vperm.slane %v2089, %v2221
        %v2385 = vperm.slane %v2091, %v2320
        %v2386 = vsel %vm2322, %v2385, %v2384
        %v2387 = vperm.slane %v2093, %v2324
        %v2388 = vsel %vm2326, %v2387, %v2386
        %v2389 = vperm.slane %v2095, %v2328
        %v2390 = vsel %vm2330, %v2389, %v2388
        %v2391 = vperm.slane %v2097, %v2332
        %v2392 = vsel %vm2334, %v2391, %v2390
        %v2393 = vperm.slane %v2099, %v2336
        %v2394 = vsel %vm2338, %v2393, %v2392
        %v2395 = vperm.slane %v2101, %v2221
        %v2396 = vperm.slane %v2103, %v2320
        %v2397 = vsel %vm2322, %v2396, %v2395
        %v2398 = vperm.slane %v2105, %v2324
        %v2399 = vsel %vm2326, %v2398, %v2397
        %v2400 = vperm.slane %v2107, %v2328
        %v2401 = vsel %vm2330, %v2400, %v2399
        %v2402 = vperm.slane %v2109, %v2332
        %v2403 = vsel %vm2334, %v2402, %v2401
        %v2404 = vperm.slane %v2111, %v2336
        %v2405 = vsel %vm2338, %v2404, %v2403
        %v2406 = vperm.slane %v2113, %v2221
        %v2407 = vperm.slane %v2115, %v2320
        %v2408 = vsel %vm2322, %v2407, %v2406
        %v2409 = vperm.slane %v2117, %v2324
        %v2410 = vsel %vm2326, %v2409, %v2408
        %v2411 = vperm.slane %v2119, %v2328
        %v2412 = vsel %vm2330, %v2411, %v2410
        %v2413 = vperm.slane %v2121, %v2332
        %v2414 = vsel %vm2334, %v2413, %v2412
        %v2415 = vperm.slane %v2123, %v2336
        %v2416 = vsel %vm2338, %v2415, %v2414
        %v2417 = vperm.slane %v2125, %v2221
        %v2418 = vperm.slane %v2127, %v2320
        %v2419 = vsel %vm2322, %v2418, %v2417
        %v2420 = vperm.slane %v2129, %v2324
        %v2421 = vsel %vm2326, %v2420, %v2419
        %v2422 = vperm.slane %v2131, %v2328
        %v2423 = vsel %vm2330, %v2422, %v2421
        %v2424 = vperm.slane %v2133, %v2332
        %v2425 = vsel %vm2334, %v2424, %v2423
        %v2426 = vperm.slane %v2135, %v2336
        %v2427 = vsel %vm2338, %v2426, %v2425
        %v2428 = vperm.slane %v2137, %v2221
        %v2429 = vperm.slane %v2139, %v2320
        %v2430 = vsel %vm2322, %v2429, %v2428
        %v2431 = vperm.slane %v2141, %v2324
        %v2432 = vsel %vm2326, %v2431, %v2430
        %v2433 = vperm.slane %v2143, %v2328
        %v2434 = vsel %vm2330, %v2433, %v2432
        %v2435 = vperm.slane %v2145, %v2332
        %v2436 = vsel %vm2334, %v2435, %v2434
        %v2437 = vperm.slane %v2147, %v2336
        %v2438 = vsel %vm2338, %v2437, %v2436
        %v2439 = vperm.slane %v2149, %v2221
        %v2440 = vperm.slane %v2151, %v2320
        %v2441 = vsel %vm2322, %v2440, %v2439
        %v2442 = vperm.slane %v2153, %v2324
        %v2443 = vsel %vm2326, %v2442, %v2441
        %v2444 = vperm.slane %v2155, %v2328
        %v2445 = vsel %vm2330, %v2444, %v2443
        %v2446 = vperm.slane %v2157, %v2332
        %v2447 = vsel %vm2334, %v2446, %v2445
        %v2448 = vperm.slane %v2159, %v2336
        %v2449 = vsel %vm2338, %v2448, %v2447
        %v2450 = vperm.slane %v2161, %v2221
        %v2451 = vperm.slane %v2163, %v2320
        %v2452 = vsel %vm2322, %v2451, %v2450
        %v2453 = vperm.slane %v2165, %v2324
        %v2454 = vsel %vm2326, %v2453, %v2452
        %v2455 = vperm.slane %v2167, %v2328
        %v2456 = vsel %vm2330, %v2455, %v2454
        %v2457 = vperm.slane %v2169, %v2332
        %v2458 = vsel %vm2334, %v2457, %v2456
        %v2459 = vperm.slane %v2171, %v2336
        %v2460 = vsel %vm2338, %v2459, %v2458
        %v2461 = vperm.slane %v2173, %v2221
        %v2462 = vperm.slane %v2175, %v2320
        %v2463 = vsel %vm2322, %v2462, %v2461
        %v2464 = vperm.slane %v2177, %v2324
        %v2465 = vsel %vm2326, %v2464, %v2463
        %v2466 = vperm.slane %v2179, %v2328
        %v2467 = vsel %vm2330, %v2466, %v2465
        %v2468 = vperm.slane %v2181, %v2332
        %v2469 = vsel %vm2334, %v2468, %v2467
        %v2470 = vperm.slane %v2183, %v2336
        %v2471 = vsel %vm2338, %v2470, %v2469
        %v2472 = vperm.slane %v2185, %v2221
        %v2473 = vperm.slane %v2187, %v2320
        %v2474 = vsel %vm2322, %v2473, %v2472
        %v2475 = vperm.slane %v2189, %v2324
        %v2476 = vsel %vm2326, %v2475, %v2474
        %v2477 = vperm.slane %v2191, %v2328
        %v2478 = vsel %vm2330, %v2477, %v2476
        %v2479 = vperm.slane %v2193, %v2332
        %v2480 = vsel %vm2334, %v2479, %v2478
        %v2481 = vperm.slane %v2195, %v2336
        %v2482 = vsel %vm2338, %v2481, %v2480
        %v2483 = vperm.slane %v2197, %v2221
        %v2484 = vperm.slane %v2199, %v2320
        %v2485 = vsel %vm2322, %v2484, %v2483
        %v2486 = vperm.slane %v2201, %v2324
        %v2487 = vsel %vm2326, %v2486, %v2485
        %v2488 = vperm.slane %v2203, %v2328
        %v2489 = vsel %vm2330, %v2488, %v2487
        %v2490 = vperm.slane %v2205, %v2332
        %v2491 = vsel %vm2334, %v2490, %v2489
        %v2492 = vperm.slane %v2207, %v2336
        %v2493 = vsel %vm2338, %v2492, %v2491
        %v2494 = vperm.slane %v2209, %v2221
        %v2495 = vperm.slane %v2211, %v2320
        %v2496 = vsel %vm2322, %v2495, %v2494
        %v2497 = vperm.slane %v2213, %v2324
        %v2498 = vsel %vm2326, %v2497, %v2496
        %v2499 = vperm.slane %v2215, %v2328
        %v2500 = vsel %vm2330, %v2499, %v2498
        %v2501 = vperm.slane %v2217, %v2332
        %v2502 = vsel %vm2334, %v2501, %v2500
        %v2503 = vperm.slane %v2219, %v2336
        %v2504 = vsel %vm2338, %v2503, %v2502
        %vm2505 = vcmask 1041409
        %v2506 = vsel %vm2505, %v2350, %v2339
        %vm2507 = vcmask 1042434
        %v2508 = vsel %vm2507, %v2361, %v2506
        %vm2509 = vcmask 1043459
        %v2510 = vsel %vm2509, %v2372, %v2508
        %vm2511 = vcmask 1044484
        %v2512 = vsel %vm2511, %v2383, %v2510
        %vm2513 = vcmask 1045509
        %v2514 = vsel %vm2513, %v2394, %v2512
        %vm2515 = vcmask 1046534
        %v2516 = vsel %vm2515, %v2405, %v2514
        %vm2517 = vcmask 1047559
        %v2518 = vsel %vm2517, %v2416, %v2516
        %v2519 = vsel %vm2505, %v2438, %v2427
        %v2520 = vsel %vm2507, %v2449, %v2519
        %v2521 = vsel %vm2509, %v2460, %v2520
        %v2522 = vsel %vm2511, %v2471, %v2521
        %v2523 = vsel %vm2513, %v2482, %v2522
        %v2524 = vsel %vm2515, %v2493, %v2523
        %v2525 = vsel %vm2517, %v2504, %v2524
        %v2528 = vsel %vm2222, %v2518, -1e+30
        %v2529 = vsel %vm2222, %v2525, -1e+30
        %vm2530 = vcmask 392192
        %v2531 = vsel %vm2530, %v2528, -inf
        %2532 = vmax.xlane.f32.xlu0 %v2531
        %v2533 = vpop.xlane.xlu0 %2532
        %v2534 = vsel %vm2530, %v2529, -inf
        %2535 = vmax.xlane.f32.xlu0 %v2534
        %v2536 = vpop.xlane.xlu0 %2535
        %v2537 = vsub.f32 %v2528, %v2533
        %v2538 = vsub.f32 %v2529, %v2536
        %v2539 = vmul.f32 %v2537, 1.442695
        %v2540 = vpow.pop %v2539
        %v2541 = vmul.f32 %v2538, 1.442695
        %v2542 = vpow.pop %v2541
        %v2543 = vsel %vm2530, %v2540, 0.0
        %2544 = vadd.xlane.f32.xlu0 %v2543
        %v2545 = vpop.xlane.xlu0 %2544
        %v2546 = vsel %vm2530, %v2542, 0.0
        %2547 = vadd.xlane.f32.xlu0 %v2546
        %v2548 = vpop.xlane.xlu0 %2547
        %v2549 = vperm.slane %v2540, 0
        %v2550 = vlaneseq
        %v2551 = vshrl.u32 %v2550, 7
        %2553 = vset.pattern.permute.xlu0 %v2551
        %2554 = vperm.xlu0 %2553, %v2549
        %v2555 = vpop.permute.xlu0 %2554
        %v2556 = vlaneseq
        %v2557 = vshrl.u32 %v2556, 7
        %v2558 = vadd.s32 %v2557, 8
        %2559 = vset.pattern.permute.xlu0 %v2558
        %2560 = vperm.xlu0 %2559, %v2549
        %v2561 = vpop.permute.xlu0 %2560
        %v2562 = vlaneseq
        %v2563 = vshrl.u32 %v2562, 7
        %v2564 = vadd.s32 %v2563, 16
        %2565 = vset.pattern.permute.xlu0 %v2564
        %2566 = vperm.xlu0 %2565, %v2549
        %v2567 = vpop.permute.xlu0 %2566
        %v2568 = vlaneseq
        %v2569 = vshrl.u32 %v2568, 7
        %v2570 = vadd.s32 %v2569, 24
        %2571 = vset.pattern.permute.xlu0 %v2570
        %2572 = vperm.xlu0 %2571, %v2549
        %v2573 = vpop.permute.xlu0 %2572
        %v2574 = vlaneseq
        %v2575 = vshrl.u32 %v2574, 7
        %v2576 = vadd.s32 %v2575, 32
        %2577 = vset.pattern.permute.xlu0 %v2576
        %2578 = vperm.xlu0 %2577, %v2549
        %v2579 = vpop.permute.xlu0 %2578
        %v2580 = vperm.slane %v2540, 1
        %v2581 = vlaneseq
        %v2582 = vshrl.u32 %v2581, 7
        %2584 = vset.pattern.permute.xlu0 %v2582
        %2585 = vperm.xlu0 %2584, %v2580
        %v2586 = vpop.permute.xlu0 %2585
        %v2587 = vlaneseq
        %v2588 = vshrl.u32 %v2587, 7
        %v2589 = vadd.s32 %v2588, 8
        %2590 = vset.pattern.permute.xlu0 %v2589
        %2591 = vperm.xlu0 %2590, %v2580
        %v2592 = vpop.permute.xlu0 %2591
        %v2593 = vlaneseq
        %v2594 = vshrl.u32 %v2593, 7
        %v2595 = vadd.s32 %v2594, 16
        %2596 = vset.pattern.permute.xlu0 %v2595
        %2597 = vperm.xlu0 %2596, %v2580
        %v2598 = vpop.permute.xlu0 %2597
        %v2599 = vlaneseq
        %v2600 = vshrl.u32 %v2599, 7
        %v2601 = vadd.s32 %v2600, 24
        %2602 = vset.pattern.permute.xlu0 %v2601
        %2603 = vperm.xlu0 %2602, %v2580
        %v2604 = vpop.permute.xlu0 %2603
        %v2605 = vlaneseq
        %v2606 = vshrl.u32 %v2605, 7
        %v2607 = vadd.s32 %v2606, 32
        %2608 = vset.pattern.permute.xlu0 %v2607
        %2609 = vperm.xlu0 %2608, %v2580
        %v2610 = vpop.permute.xlu0 %2609
        %v2611 = vperm.slane %v2540, 2
        %v2612 = vlaneseq
        %v2613 = vshrl.u32 %v2612, 7
        %2615 = vset.pattern.permute.xlu0 %v2613
        %2616 = vperm.xlu0 %2615, %v2611
        %v2617 = vpop.permute.xlu0 %2616
        %v2618 = vlaneseq
        %v2619 = vshrl.u32 %v2618, 7
        %v2620 = vadd.s32 %v2619, 8
        %2621 = vset.pattern.permute.xlu0 %v2620
        %2622 = vperm.xlu0 %2621, %v2611
        %v2623 = vpop.permute.xlu0 %2622
        %v2624 = vlaneseq
        %v2625 = vshrl.u32 %v2624, 7
        %v2626 = vadd.s32 %v2625, 16
        %2627 = vset.pattern.permute.xlu0 %v2626
        %2628 = vperm.xlu0 %2627, %v2611
        %v2629 = vpop.permute.xlu0 %2628
        %v2630 = vlaneseq
        %v2631 = vshrl.u32 %v2630, 7
        %v2632 = vadd.s32 %v2631, 24
        %2633 = vset.pattern.permute.xlu0 %v2632
        %2634 = vperm.xlu0 %2633, %v2611
        %v2635 = vpop.permute.xlu0 %2634
        %v2636 = vlaneseq
        %v2637 = vshrl.u32 %v2636, 7
        %v2638 = vadd.s32 %v2637, 32
        %2639 = vset.pattern.permute.xlu0 %v2638
        %2640 = vperm.xlu0 %2639, %v2611
        %v2641 = vpop.permute.xlu0 %2640
        %v2642 = vperm.slane %v2540, 3
        %v2643 = vlaneseq
        %v2644 = vshrl.u32 %v2643, 7
        %2646 = vset.pattern.permute.xlu0 %v2644
        %2647 = vperm.xlu0 %2646, %v2642
        %v2648 = vpop.permute.xlu0 %2647
        %v2649 = vlaneseq
        %v2650 = vshrl.u32 %v2649, 7
        %v2651 = vadd.s32 %v2650, 8
        %2652 = vset.pattern.permute.xlu0 %v2651
        %2653 = vperm.xlu0 %2652, %v2642
        %v2654 = vpop.permute.xlu0 %2653
        %v2655 = vlaneseq
        %v2656 = vshrl.u32 %v2655, 7
        %v2657 = vadd.s32 %v2656, 16
        %2658 = vset.pattern.permute.xlu0 %v2657
        %2659 = vperm.xlu0 %2658, %v2642
        %v2660 = vpop.permute.xlu0 %2659
        %v2661 = vlaneseq
        %v2662 = vshrl.u32 %v2661, 7
        %v2663 = vadd.s32 %v2662, 24
        %2664 = vset.pattern.permute.xlu0 %v2663
        %2665 = vperm.xlu0 %2664, %v2642
        %v2666 = vpop.permute.xlu0 %2665
        %v2667 = vlaneseq
        %v2668 = vshrl.u32 %v2667, 7
        %v2669 = vadd.s32 %v2668, 32
        %2670 = vset.pattern.permute.xlu0 %v2669
        %2671 = vperm.xlu0 %2670, %v2642
        %v2672 = vpop.permute.xlu0 %2671
        %v2673 = vperm.slane %v2540, 4
        %v2674 = vlaneseq
        %v2675 = vshrl.u32 %v2674, 7
        %2677 = vset.pattern.permute.xlu0 %v2675
        %2678 = vperm.xlu0 %2677, %v2673
        %v2679 = vpop.permute.xlu0 %2678
        %v2680 = vlaneseq
        %v2681 = vshrl.u32 %v2680, 7
        %v2682 = vadd.s32 %v2681, 8
        %2683 = vset.pattern.permute.xlu0 %v2682
        %2684 = vperm.xlu0 %2683, %v2673
        %v2685 = vpop.permute.xlu0 %2684
        %v2686 = vlaneseq
        %v2687 = vshrl.u32 %v2686, 7
        %v2688 = vadd.s32 %v2687, 16
        %2689 = vset.pattern.permute.xlu0 %v2688
        %2690 = vperm.xlu0 %2689, %v2673
        %v2691 = vpop.permute.xlu0 %2690
        %v2692 = vlaneseq
        %v2693 = vshrl.u32 %v2692, 7
        %v2694 = vadd.s32 %v2693, 24
        %2695 = vset.pattern.permute.xlu0 %v2694
        %2696 = vperm.xlu0 %2695, %v2673
        %v2697 = vpop.permute.xlu0 %2696
        %v2698 = vlaneseq
        %v2699 = vshrl.u32 %v2698, 7
        %v2700 = vadd.s32 %v2699, 32
        %2701 = vset.pattern.permute.xlu0 %v2700
        %2702 = vperm.xlu0 %2701, %v2673
        %v2703 = vpop.permute.xlu0 %2702
        %v2704 = vperm.slane %v2540, 5
        %v2705 = vlaneseq
        %v2706 = vshrl.u32 %v2705, 7
        %2708 = vset.pattern.permute.xlu0 %v2706
        %2709 = vperm.xlu0 %2708, %v2704
        %v2710 = vpop.permute.xlu0 %2709
        %v2711 = vlaneseq
        %v2712 = vshrl.u32 %v2711, 7
        %v2713 = vadd.s32 %v2712, 8
        %2714 = vset.pattern.permute.xlu0 %v2713
        %2715 = vperm.xlu0 %2714, %v2704
        %v2716 = vpop.permute.xlu0 %2715
        %v2717 = vlaneseq
        %v2718 = vshrl.u32 %v2717, 7
        %v2719 = vadd.s32 %v2718, 16
        %2720 = vset.pattern.permute.xlu0 %v2719
        %2721 = vperm.xlu0 %2720, %v2704
        %v2722 = vpop.permute.xlu0 %2721
        %v2723 = vlaneseq
        %v2724 = vshrl.u32 %v2723, 7
        %v2725 = vadd.s32 %v2724, 24
        %2726 = vset.pattern.permute.xlu0 %v2725
        %2727 = vperm.xlu0 %2726, %v2704
        %v2728 = vpop.permute.xlu0 %2727
        %v2729 = vlaneseq
        %v2730 = vshrl.u32 %v2729, 7
        %v2731 = vadd.s32 %v2730, 32
        %2732 = vset.pattern.permute.xlu0 %v2731
        %2733 = vperm.xlu0 %2732, %v2704
        %v2734 = vpop.permute.xlu0 %2733
        %v2735 = vperm.slane %v2540, 6
        %v2736 = vlaneseq
        %v2737 = vshrl.u32 %v2736, 7
        %2739 = vset.pattern.permute.xlu0 %v2737
        %2740 = vperm.xlu0 %2739, %v2735
        %v2741 = vpop.permute.xlu0 %2740
        %v2742 = vlaneseq
        %v2743 = vshrl.u32 %v2742, 7
        %v2744 = vadd.s32 %v2743, 8
        %2745 = vset.pattern.permute.xlu0 %v2744
        %2746 = vperm.xlu0 %2745, %v2735
        %v2747 = vpop.permute.xlu0 %2746
        %v2748 = vlaneseq
        %v2749 = vshrl.u32 %v2748, 7
        %v2750 = vadd.s32 %v2749, 16
        %2751 = vset.pattern.permute.xlu0 %v2750
        %2752 = vperm.xlu0 %2751, %v2735
        %v2753 = vpop.permute.xlu0 %2752
        %v2754 = vlaneseq
        %v2755 = vshrl.u32 %v2754, 7
        %v2756 = vadd.s32 %v2755, 24
        %2757 = vset.pattern.permute.xlu0 %v2756
        %2758 = vperm.xlu0 %2757, %v2735
        %v2759 = vpop.permute.xlu0 %2758
        %v2760 = vlaneseq
        %v2761 = vshrl.u32 %v2760, 7
        %v2762 = vadd.s32 %v2761, 32
        %2763 = vset.pattern.permute.xlu0 %v2762
        %2764 = vperm.xlu0 %2763, %v2735
        %v2765 = vpop.permute.xlu0 %2764
        %v2766 = vperm.slane %v2540, 7
        %v2767 = vlaneseq
        %v2768 = vshrl.u32 %v2767, 7
        %2770 = vset.pattern.permute.xlu0 %v2768
        %2771 = vperm.xlu0 %2770, %v2766
        %v2772 = vpop.permute.xlu0 %2771
        %v2773 = vlaneseq
        %v2774 = vshrl.u32 %v2773, 7
        %v2775 = vadd.s32 %v2774, 8
        %2776 = vset.pattern.permute.xlu0 %v2775
        %2777 = vperm.xlu0 %2776, %v2766
        %v2778 = vpop.permute.xlu0 %2777
        %v2779 = vlaneseq
        %v2780 = vshrl.u32 %v2779, 7
        %v2781 = vadd.s32 %v2780, 16
        %2782 = vset.pattern.permute.xlu0 %v2781
        %2783 = vperm.xlu0 %2782, %v2766
        %v2784 = vpop.permute.xlu0 %2783
        %v2785 = vlaneseq
        %v2786 = vshrl.u32 %v2785, 7
        %v2787 = vadd.s32 %v2786, 24
        %2788 = vset.pattern.permute.xlu0 %v2787
        %2789 = vperm.xlu0 %2788, %v2766
        %v2790 = vpop.permute.xlu0 %2789
        %v2791 = vlaneseq
        %v2792 = vshrl.u32 %v2791, 7
        %v2793 = vadd.s32 %v2792, 32
        %2794 = vset.pattern.permute.xlu0 %v2793
        %2795 = vperm.xlu0 %2794, %v2766
        %v2796 = vpop.permute.xlu0 %2795
        %v2797 = vperm.slane %v2542, 0
        %v2798 = vlaneseq
        %v2799 = vshrl.u32 %v2798, 7
        %2801 = vset.pattern.permute.xlu0 %v2799
        %2802 = vperm.xlu0 %2801, %v2797
        %v2803 = vpop.permute.xlu0 %2802
        %v2804 = vlaneseq
        %v2805 = vshrl.u32 %v2804, 7
        %v2806 = vadd.s32 %v2805, 8
        %2807 = vset.pattern.permute.xlu0 %v2806
        %2808 = vperm.xlu0 %2807, %v2797
        %v2809 = vpop.permute.xlu0 %2808
        %v2810 = vlaneseq
        %v2811 = vshrl.u32 %v2810, 7
        %v2812 = vadd.s32 %v2811, 16
        %2813 = vset.pattern.permute.xlu0 %v2812
        %2814 = vperm.xlu0 %2813, %v2797
        %v2815 = vpop.permute.xlu0 %2814
        %v2816 = vlaneseq
        %v2817 = vshrl.u32 %v2816, 7
        %v2818 = vadd.s32 %v2817, 24
        %2819 = vset.pattern.permute.xlu0 %v2818
        %2820 = vperm.xlu0 %2819, %v2797
        %v2821 = vpop.permute.xlu0 %2820
        %v2822 = vlaneseq
        %v2823 = vshrl.u32 %v2822, 7
        %v2824 = vadd.s32 %v2823, 32
        %2825 = vset.pattern.permute.xlu0 %v2824
        %2826 = vperm.xlu0 %2825, %v2797
        %v2827 = vpop.permute.xlu0 %2826
        %v2828 = vperm.slane %v2542, 1
        %v2829 = vlaneseq
        %v2830 = vshrl.u32 %v2829, 7
        %2832 = vset.pattern.permute.xlu0 %v2830
        %2833 = vperm.xlu0 %2832, %v2828
        %v2834 = vpop.permute.xlu0 %2833
        %v2835 = vlaneseq
        %v2836 = vshrl.u32 %v2835, 7
        %v2837 = vadd.s32 %v2836, 8
        %2838 = vset.pattern.permute.xlu0 %v2837
        %2839 = vperm.xlu0 %2838, %v2828
        %v2840 = vpop.permute.xlu0 %2839
        %v2841 = vlaneseq
        %v2842 = vshrl.u32 %v2841, 7
        %v2843 = vadd.s32 %v2842, 16
        %2844 = vset.pattern.permute.xlu0 %v2843
        %2845 = vperm.xlu0 %2844, %v2828
        %v2846 = vpop.permute.xlu0 %2845
        %v2847 = vlaneseq
        %v2848 = vshrl.u32 %v2847, 7
        %v2849 = vadd.s32 %v2848, 24
        %2850 = vset.pattern.permute.xlu0 %v2849
        %2851 = vperm.xlu0 %2850, %v2828
        %v2852 = vpop.permute.xlu0 %2851
        %v2853 = vlaneseq
        %v2854 = vshrl.u32 %v2853, 7
        %v2855 = vadd.s32 %v2854, 32
        %2856 = vset.pattern.permute.xlu0 %v2855
        %2857 = vperm.xlu0 %2856, %v2828
        %v2858 = vpop.permute.xlu0 %2857
        %v2859 = vperm.slane %v2542, 2
        %v2860 = vlaneseq
        %v2861 = vshrl.u32 %v2860, 7
        %2863 = vset.pattern.permute.xlu0 %v2861
        %2864 = vperm.xlu0 %2863, %v2859
        %v2865 = vpop.permute.xlu0 %2864
        %v2866 = vlaneseq
        %v2867 = vshrl.u32 %v2866, 7
        %v2868 = vadd.s32 %v2867, 8
        %2869 = vset.pattern.permute.xlu0 %v2868
        %2870 = vperm.xlu0 %2869, %v2859
        %v2871 = vpop.permute.xlu0 %2870
        %v2872 = vlaneseq
        %v2873 = vshrl.u32 %v2872, 7
        %v2874 = vadd.s32 %v2873, 16
        %2875 = vset.pattern.permute.xlu0 %v2874
        %2876 = vperm.xlu0 %2875, %v2859
        %v2877 = vpop.permute.xlu0 %2876
        %v2878 = vlaneseq
        %v2879 = vshrl.u32 %v2878, 7
        %v2880 = vadd.s32 %v2879, 24
        %2881 = vset.pattern.permute.xlu0 %v2880
        %2882 = vperm.xlu0 %2881, %v2859
        %v2883 = vpop.permute.xlu0 %2882
        %v2884 = vlaneseq
        %v2885 = vshrl.u32 %v2884, 7
        %v2886 = vadd.s32 %v2885, 32
        %2887 = vset.pattern.permute.xlu0 %v2886
        %2888 = vperm.xlu0 %2887, %v2859
        %v2889 = vpop.permute.xlu0 %2888
        %v2890 = vperm.slane %v2542, 3
        %v2891 = vlaneseq
        %v2892 = vshrl.u32 %v2891, 7
        %2894 = vset.pattern.permute.xlu0 %v2892
        %2895 = vperm.xlu0 %2894, %v2890
        %v2896 = vpop.permute.xlu0 %2895
        %v2897 = vlaneseq
        %v2898 = vshrl.u32 %v2897, 7
        %v2899 = vadd.s32 %v2898, 8
        %2900 = vset.pattern.permute.xlu0 %v2899
        %2901 = vperm.xlu0 %2900, %v2890
        %v2902 = vpop.permute.xlu0 %2901
        %v2903 = vlaneseq
        %v2904 = vshrl.u32 %v2903, 7
        %v2905 = vadd.s32 %v2904, 16
        %2906 = vset.pattern.permute.xlu0 %v2905
        %2907 = vperm.xlu0 %2906, %v2890
        %v2908 = vpop.permute.xlu0 %2907
        %v2909 = vlaneseq
        %v2910 = vshrl.u32 %v2909, 7
        %v2911 = vadd.s32 %v2910, 24
        %2912 = vset.pattern.permute.xlu0 %v2911
        %2913 = vperm.xlu0 %2912, %v2890
        %v2914 = vpop.permute.xlu0 %2913
        %v2915 = vlaneseq
        %v2916 = vshrl.u32 %v2915, 7
        %v2917 = vadd.s32 %v2916, 32
        %2918 = vset.pattern.permute.xlu0 %v2917
        %2919 = vperm.xlu0 %2918, %v2890
        %v2920 = vpop.permute.xlu0 %2919
        %v2921 = vperm.slane %v2542, 4
        %v2922 = vlaneseq
        %v2923 = vshrl.u32 %v2922, 7
        %2925 = vset.pattern.permute.xlu0 %v2923
        %2926 = vperm.xlu0 %2925, %v2921
        %v2927 = vpop.permute.xlu0 %2926
        %v2928 = vlaneseq
        %v2929 = vshrl.u32 %v2928, 7
        %v2930 = vadd.s32 %v2929, 8
        %2931 = vset.pattern.permute.xlu0 %v2930
        %2932 = vperm.xlu0 %2931, %v2921
        %v2933 = vpop.permute.xlu0 %2932
        %v2934 = vlaneseq
        %v2935 = vshrl.u32 %v2934, 7
        %v2936 = vadd.s32 %v2935, 16
        %2937 = vset.pattern.permute.xlu0 %v2936
        %2938 = vperm.xlu0 %2937, %v2921
        %v2939 = vpop.permute.xlu0 %2938
        %v2940 = vlaneseq
        %v2941 = vshrl.u32 %v2940, 7
        %v2942 = vadd.s32 %v2941, 24
        %2943 = vset.pattern.permute.xlu0 %v2942
        %2944 = vperm.xlu0 %2943, %v2921
        %v2945 = vpop.permute.xlu0 %2944
        %v2946 = vlaneseq
        %v2947 = vshrl.u32 %v2946, 7
        %v2948 = vadd.s32 %v2947, 32
        %2949 = vset.pattern.permute.xlu0 %v2948
        %2950 = vperm.xlu0 %2949, %v2921
        %v2951 = vpop.permute.xlu0 %2950
        %v2952 = vperm.slane %v2542, 5
        %v2953 = vlaneseq
        %v2954 = vshrl.u32 %v2953, 7
        %2956 = vset.pattern.permute.xlu0 %v2954
        %2957 = vperm.xlu0 %2956, %v2952
        %v2958 = vpop.permute.xlu0 %2957
        %v2959 = vlaneseq
        %v2960 = vshrl.u32 %v2959, 7
        %v2961 = vadd.s32 %v2960, 8
        %2962 = vset.pattern.permute.xlu0 %v2961
        %2963 = vperm.xlu0 %2962, %v2952
        %v2964 = vpop.permute.xlu0 %2963
        %v2965 = vlaneseq
        %v2966 = vshrl.u32 %v2965, 7
        %v2967 = vadd.s32 %v2966, 16
        %2968 = vset.pattern.permute.xlu0 %v2967
        %2969 = vperm.xlu0 %2968, %v2952
        %v2970 = vpop.permute.xlu0 %2969
        %v2971 = vlaneseq
        %v2972 = vshrl.u32 %v2971, 7
        %v2973 = vadd.s32 %v2972, 24
        %2974 = vset.pattern.permute.xlu0 %v2973
        %2975 = vperm.xlu0 %2974, %v2952
        %v2976 = vpop.permute.xlu0 %2975
        %v2977 = vlaneseq
        %v2978 = vshrl.u32 %v2977, 7
        %v2979 = vadd.s32 %v2978, 32
        %2980 = vset.pattern.permute.xlu0 %v2979
        %2981 = vperm.xlu0 %2980, %v2952
        %v2982 = vpop.permute.xlu0 %2981
        %v2983 = vperm.slane %v2542, 6
        %v2984 = vlaneseq
        %v2985 = vshrl.u32 %v2984, 7
        %2987 = vset.pattern.permute.xlu0 %v2985
        %2988 = vperm.xlu0 %2987, %v2983
        %v2989 = vpop.permute.xlu0 %2988
        %v2990 = vlaneseq
        %v2991 = vshrl.u32 %v2990, 7
        %v2992 = vadd.s32 %v2991, 8
        %2993 = vset.pattern.permute.xlu0 %v2992
        %2994 = vperm.xlu0 %2993, %v2983
        %v2995 = vpop.permute.xlu0 %2994
        %v2996 = vlaneseq
        %v2997 = vshrl.u32 %v2996, 7
        %v2998 = vadd.s32 %v2997, 16
        %2999 = vset.pattern.permute.xlu0 %v2998
        %3000 = vperm.xlu0 %2999, %v2983
        %v3001 = vpop.permute.xlu0 %3000
        %v3002 = vlaneseq
        %v3003 = vshrl.u32 %v3002, 7
        %v3004 = vadd.s32 %v3003, 24
        %3005 = vset.pattern.permute.xlu0 %v3004
        %3006 = vperm.xlu0 %3005, %v2983
        %v3007 = vpop.permute.xlu0 %3006
        %v3008 = vlaneseq
        %v3009 = vshrl.u32 %v3008, 7
        %v3010 = vadd.s32 %v3009, 32
        %3011 = vset.pattern.permute.xlu0 %v3010
        %3012 = vperm.xlu0 %3011, %v2983
        %v3013 = vpop.permute.xlu0 %3012
        %v3014 = vperm.slane %v2542, 7
        %v3015 = vlaneseq
        %v3016 = vshrl.u32 %v3015, 7
        %3018 = vset.pattern.permute.xlu0 %v3016
        %3019 = vperm.xlu0 %3018, %v3014
        %v3020 = vpop.permute.xlu0 %3019
        %v3021 = vlaneseq
        %v3022 = vshrl.u32 %v3021, 7
        %v3023 = vadd.s32 %v3022, 8
        %3024 = vset.pattern.permute.xlu0 %v3023
        %3025 = vperm.xlu0 %3024, %v3014
        %v3026 = vpop.permute.xlu0 %3025
        %v3027 = vlaneseq
        %v3028 = vshrl.u32 %v3027, 7
        %v3029 = vadd.s32 %v3028, 16
        %3030 = vset.pattern.permute.xlu0 %v3029
        %3031 = vperm.xlu0 %3030, %v3014
        %v3032 = vpop.permute.xlu0 %3031
        %v3033 = vlaneseq
        %v3034 = vshrl.u32 %v3033, 7
        %v3035 = vadd.s32 %v3034, 24
        %3036 = vset.pattern.permute.xlu0 %v3035
        %3037 = vperm.xlu0 %3036, %v3014
        %v3038 = vpop.permute.xlu0 %3037
        %v3039 = vlaneseq
        %v3040 = vshrl.u32 %v3039, 7
        %v3041 = vadd.s32 %v3040, 32
        %3042 = vset.pattern.permute.xlu0 %v3041
        %3043 = vperm.xlu0 %3042, %v3014
        %v3044 = vpop.permute.xlu0 %3043
        %v3045 = vmul.f32 %v252, %v2555
        %v3046 = vmul.f32 %v253, %v2561
        %v3047 = vmul.f32 %v254, %v2567
        %v3048 = vmul.f32 %v255, %v2573
        %v3049 = vmul.f32 %v256, %v2579
        %v3050 = vmul.f32 %v257, %v2586
        %v3051 = vmul.f32 %v258, %v2592
        %v3052 = vmul.f32 %v259, %v2598
        %v3053 = vmul.f32 %v260, %v2604
        %v3054 = vmul.f32 %v261, %v2610
        %v3055 = vmul.f32 %v262, %v2617
        %v3056 = vmul.f32 %v263, %v2623
        %v3057 = vmul.f32 %v264, %v2629
        %v3058 = vmul.f32 %v265, %v2635
        %v3059 = vmul.f32 %v266, %v2641
        %v3060 = vmul.f32 %v267, %v2648
        %v3061 = vmul.f32 %v268, %v2654
        %v3062 = vmul.f32 %v269, %v2660
        %v3063 = vmul.f32 %v270, %v2666
        %v3064 = vmul.f32 %v271, %v2672
        %v3065 = vmul.f32 %v272, %v2679
        %v3066 = vmul.f32 %v273, %v2685
        %v3067 = vmul.f32 %v274, %v2691
        %v3068 = vmul.f32 %v275, %v2697
        %v3069 = vmul.f32 %v276, %v2703
        %v3070 = vmul.f32 %v277, %v2710
        %v3071 = vmul.f32 %v278, %v2716
        %v3072 = vmul.f32 %v279, %v2722
        %v3073 = vmul.f32 %v280, %v2728
        %v3074 = vmul.f32 %v281, %v2734
        %v3075 = vmul.f32 %v282, %v2741
        %v3076 = vmul.f32 %v283, %v2747
        %v3077 = vmul.f32 %v284, %v2753
        %v3078 = vmul.f32 %v285, %v2759
        %v3079 = vmul.f32 %v286, %v2765
        %v3080 = vmul.f32 %v287, %v2772
        %v3081 = vmul.f32 %v288, %v2778
        %v3082 = vmul.f32 %v289, %v2784
        %v3083 = vmul.f32 %v290, %v2790
        %v3084 = vmul.f32 %v291, %v2796
        %v3085 = vmul.f32 %v292, %v2803
        %v3086 = vmul.f32 %v293, %v2809
        %v3087 = vmul.f32 %v294, %v2815
        %v3088 = vmul.f32 %v295, %v2821
        %v3089 = vmul.f32 %v296, %v2827
        %v3090 = vmul.f32 %v297, %v2834
        %v3091 = vmul.f32 %v298, %v2840
        %v3092 = vmul.f32 %v299, %v2846
        %v3093 = vmul.f32 %v300, %v2852
        %v3094 = vmul.f32 %v301, %v2858
        %v3095 = vmul.f32 %v302, %v2865
        %v3096 = vmul.f32 %v303, %v2871
        %v3097 = vmul.f32 %v304, %v2877
        %v3098 = vmul.f32 %v305, %v2883
        %v3099 = vmul.f32 %v306, %v2889
        %v3100 = vmul.f32 %v307, %v2896
        %v3101 = vmul.f32 %v308, %v2902
        %v3102 = vmul.f32 %v309, %v2908
        %v3103 = vmul.f32 %v310, %v2914
        %v3104 = vmul.f32 %v311, %v2920
        %v3105 = vmul.f32 %v312, %v2927
        %v3106 = vmul.f32 %v313, %v2933
        %v3107 = vmul.f32 %v314, %v2939
        %v3108 = vmul.f32 %v315, %v2945
        %v3109 = vmul.f32 %v316, %v2951
        %v3110 = vmul.f32 %v317, %v2958
        %v3111 = vmul.f32 %v318, %v2964
        %v3112 = vmul.f32 %v319, %v2970
        %v3113 = vmul.f32 %v320, %v2976
        %v3114 = vmul.f32 %v321, %v2982
        %v3115 = vmul.f32 %v322, %v2989
        %v3116 = vmul.f32 %v323, %v2995
        %v3117 = vmul.f32 %v324, %v3001
        %v3118 = vmul.f32 %v325, %v3007
        %v3119 = vmul.f32 %v326, %v3013
        %v3120 = vmul.f32 %v327, %v3020
        %v3121 = vmul.f32 %v328, %v3026
        %v3122 = vmul.f32 %v329, %v3032
        %v3123 = vmul.f32 %v330, %v3038
        %v3124 = vmul.f32 %v331, %v3044
        %v3125 = vadd.f32 %v3045, %v3046
        %v3126 = vadd.f32 %v3125, %v3047
        %v3127 = vadd.f32 %v3126, %v3048
        %vm3128 = vcmask 1043456
        %v3129 = vsel %vm3128, %v3049, 0.0
        %v3130 = vadd.f32 %v3127, %v3129
        %v3131 = vrot.slane %v3130, 4
        %v3132 = vadd.f32 %v3130, %v3131
        %v3133 = vrot.slane %v3132, 2
        %v3134 = vadd.f32 %v3132, %v3133
        %v3135 = vrot.slane %v3134, 1
        %v3136 = vadd.f32 %v3134, %v3135
        %v3137 = vadd.f32 %v3050, %v3051
        %v3138 = vadd.f32 %v3137, %v3052
        %v3139 = vadd.f32 %v3138, %v3053
        %v3140 = vsel %vm3128, %v3054, 0.0
        %v3141 = vadd.f32 %v3139, %v3140
        %v3142 = vrot.slane %v3141, 4
        %v3143 = vadd.f32 %v3141, %v3142
        %v3144 = vrot.slane %v3143, 2
        %v3145 = vadd.f32 %v3143, %v3144
        %v3146 = vrot.slane %v3145, 1
        %v3147 = vadd.f32 %v3145, %v3146
        %v3148 = vadd.f32 %v3055, %v3056
        %v3149 = vadd.f32 %v3148, %v3057
        %v3150 = vadd.f32 %v3149, %v3058
        %v3151 = vsel %vm3128, %v3059, 0.0
        %v3152 = vadd.f32 %v3150, %v3151
        %v3153 = vrot.slane %v3152, 4
        %v3154 = vadd.f32 %v3152, %v3153
        %v3155 = vrot.slane %v3154, 2
        %v3156 = vadd.f32 %v3154, %v3155
        %v3157 = vrot.slane %v3156, 1
        %v3158 = vadd.f32 %v3156, %v3157
        %v3159 = vadd.f32 %v3060, %v3061
        %v3160 = vadd.f32 %v3159, %v3062
        %v3161 = vadd.f32 %v3160, %v3063
        %v3162 = vsel %vm3128, %v3064, 0.0
        %v3163 = vadd.f32 %v3161, %v3162
        %v3164 = vrot.slane %v3163, 4
        %v3165 = vadd.f32 %v3163, %v3164
        %v3166 = vrot.slane %v3165, 2
        %v3167 = vadd.f32 %v3165, %v3166
        %v3168 = vrot.slane %v3167, 1
        %v3169 = vadd.f32 %v3167, %v3168
        %v3170 = vadd.f32 %v3065, %v3066
        %v3171 = vadd.f32 %v3170, %v3067
        %v3172 = vadd.f32 %v3171, %v3068
        %v3173 = vsel %vm3128, %v3069, 0.0
        %v3174 = vadd.f32 %v3172, %v3173
        %v3175 = vrot.slane %v3174, 4
        %v3176 = vadd.f32 %v3174, %v3175
        %v3177 = vrot.slane %v3176, 2
        %v3178 = vadd.f32 %v3176, %v3177
        %v3179 = vrot.slane %v3178, 1
        %v3180 = vadd.f32 %v3178, %v3179
        %v3181 = vadd.f32 %v3070, %v3071
        %v3182 = vadd.f32 %v3181, %v3072
        %v3183 = vadd.f32 %v3182, %v3073
        %v3184 = vsel %vm3128, %v3074, 0.0
        %v3185 = vadd.f32 %v3183, %v3184
        %v3186 = vrot.slane %v3185, 4
        %v3187 = vadd.f32 %v3185, %v3186
        %v3188 = vrot.slane %v3187, 2
        %v3189 = vadd.f32 %v3187, %v3188
        %v3190 = vrot.slane %v3189, 1
        %v3191 = vadd.f32 %v3189, %v3190
        %v3192 = vadd.f32 %v3075, %v3076
        %v3193 = vadd.f32 %v3192, %v3077
        %v3194 = vadd.f32 %v3193, %v3078
        %v3195 = vsel %vm3128, %v3079, 0.0
        %v3196 = vadd.f32 %v3194, %v3195
        %v3197 = vrot.slane %v3196, 4
        %v3198 = vadd.f32 %v3196, %v3197
        %v3199 = vrot.slane %v3198, 2
        %v3200 = vadd.f32 %v3198, %v3199
        %v3201 = vrot.slane %v3200, 1
        %v3202 = vadd.f32 %v3200, %v3201
        %v3203 = vadd.f32 %v3080, %v3081
        %v3204 = vadd.f32 %v3203, %v3082
        %v3205 = vadd.f32 %v3204, %v3083
        %v3206 = vsel %vm3128, %v3084, 0.0
        %v3207 = vadd.f32 %v3205, %v3206
        %v3208 = vrot.slane %v3207, 4
        %v3209 = vadd.f32 %v3207, %v3208
        %v3210 = vrot.slane %v3209, 2
        %v3211 = vadd.f32 %v3209, %v3210
        %v3212 = vrot.slane %v3211, 1
        %v3213 = vadd.f32 %v3211, %v3212
        %v3214 = vadd.f32 %v3085, %v3086
        %v3215 = vadd.f32 %v3214, %v3087
        %v3216 = vadd.f32 %v3215, %v3088
        %v3217 = vsel %vm3128, %v3089, 0.0
        %v3218 = vadd.f32 %v3216, %v3217
        %v3219 = vrot.slane %v3218, 4
        %v3220 = vadd.f32 %v3218, %v3219
        %v3221 = vrot.slane %v3220, 2
        %v3222 = vadd.f32 %v3220, %v3221
        %v3223 = vrot.slane %v3222, 1
        %v3224 = vadd.f32 %v3222, %v3223
        %v3225 = vadd.f32 %v3090, %v3091
        %v3226 = vadd.f32 %v3225, %v3092
        %v3227 = vadd.f32 %v3226, %v3093
        %v3228 = vsel %vm3128, %v3094, 0.0
        %v3229 = vadd.f32 %v3227, %v3228
        %v3230 = vrot.slane %v3229, 4
        %v3231 = vadd.f32 %v3229, %v3230
        %v3232 = vrot.slane %v3231, 2
        %v3233 = vadd.f32 %v3231, %v3232
        %v3234 = vrot.slane %v3233, 1
        %v3235 = vadd.f32 %v3233, %v3234
        %v3236 = vadd.f32 %v3095, %v3096
        %v3237 = vadd.f32 %v3236, %v3097
        %v3238 = vadd.f32 %v3237, %v3098
        %v3239 = vsel %vm3128, %v3099, 0.0
        %v3240 = vadd.f32 %v3238, %v3239
        %v3241 = vrot.slane %v3240, 4
        %v3242 = vadd.f32 %v3240, %v3241
        %v3243 = vrot.slane %v3242, 2
        %v3244 = vadd.f32 %v3242, %v3243
        %v3245 = vrot.slane %v3244, 1
        %v3246 = vadd.f32 %v3244, %v3245
        %v3247 = vadd.f32 %v3100, %v3101
        %v3248 = vadd.f32 %v3247, %v3102
        %v3249 = vadd.f32 %v3248, %v3103
        %v3250 = vsel %vm3128, %v3104, 0.0
        %v3251 = vadd.f32 %v3249, %v3250
        %v3252 = vrot.slane %v3251, 4
        %v3253 = vadd.f32 %v3251, %v3252
        %v3254 = vrot.slane %v3253, 2
        %v3255 = vadd.f32 %v3253, %v3254
        %v3256 = vrot.slane %v3255, 1
        %v3257 = vadd.f32 %v3255, %v3256
        %v3258 = vadd.f32 %v3105, %v3106
        %v3259 = vadd.f32 %v3258, %v3107
        %v3260 = vadd.f32 %v3259, %v3108
        %v3261 = vsel %vm3128, %v3109, 0.0
        %v3262 = vadd.f32 %v3260, %v3261
        %v3263 = vrot.slane %v3262, 4
        %v3264 = vadd.f32 %v3262, %v3263
        %v3265 = vrot.slane %v3264, 2
        %v3266 = vadd.f32 %v3264, %v3265
        %v3267 = vrot.slane %v3266, 1
        %v3268 = vadd.f32 %v3266, %v3267
        %v3269 = vadd.f32 %v3110, %v3111
        %v3270 = vadd.f32 %v3269, %v3112
        %v3271 = vadd.f32 %v3270, %v3113
        %v3272 = vsel %vm3128, %v3114, 0.0
        %v3273 = vadd.f32 %v3271, %v3272
        %v3274 = vrot.slane %v3273, 4
        %v3275 = vadd.f32 %v3273, %v3274
        %v3276 = vrot.slane %v3275, 2
        %v3277 = vadd.f32 %v3275, %v3276
        %v3278 = vrot.slane %v3277, 1
        %v3279 = vadd.f32 %v3277, %v3278
        %v3280 = vadd.f32 %v3115, %v3116
        %v3281 = vadd.f32 %v3280, %v3117
        %v3282 = vadd.f32 %v3281, %v3118
        %v3283 = vsel %vm3128, %v3119, 0.0
        %v3284 = vadd.f32 %v3282, %v3283
        %v3285 = vrot.slane %v3284, 4
        %v3286 = vadd.f32 %v3284, %v3285
        %v3287 = vrot.slane %v3286, 2
        %v3288 = vadd.f32 %v3286, %v3287
        %v3289 = vrot.slane %v3288, 1
        %v3290 = vadd.f32 %v3288, %v3289
        %v3291 = vadd.f32 %v3120, %v3121
        %v3292 = vadd.f32 %v3291, %v3122
        %v3293 = vadd.f32 %v3292, %v3123
        %v3294 = vsel %vm3128, %v3124, 0.0
        %v3295 = vadd.f32 %v3293, %v3294
        %v3296 = vrot.slane %v3295, 4
        %v3297 = vadd.f32 %v3295, %v3296
        %v3298 = vrot.slane %v3297, 2
        %v3299 = vadd.f32 %v3297, %v3298
        %v3300 = vrot.slane %v3299, 1
        %v3301 = vadd.f32 %v3299, %v3300
        %v3302 = vrcp.pop %v2545
        %v3303 = vrcp.pop %v2548
        %v3306 = vrot.slane %v3302, 1
        %v3307 = vrot.slane %v3302, 2
        %v3308 = vrot.slane %v3302, 3
        %v3309 = vrot.slane %v3302, 4
        %v3310 = vrot.slane %v3302, 5
        %v3311 = vrot.slane %v3302, 6
        %v3312 = vrot.slane %v3302, 7
        %v3313 = vrot.slane %v3303, 1
        %v3314 = vrot.slane %v3303, 2
        %v3315 = vrot.slane %v3303, 3
        %v3316 = vrot.slane %v3303, 4
        %v3317 = vrot.slane %v3303, 5
        %v3318 = vrot.slane %v3303, 6
        %v3319 = vrot.slane %v3303, 7
        %v3336 = vmul.f32 %v3136, %v3302
        %v3337 = vmul.f32 %v3147, %v3306
        %v3338 = vmul.f32 %v3158, %v3307
        %v3339 = vmul.f32 %v3169, %v3308
        %v3340 = vmul.f32 %v3180, %v3309
        %v3341 = vmul.f32 %v3191, %v3310
        %v3342 = vmul.f32 %v3202, %v3311
        %v3343 = vmul.f32 %v3213, %v3312
        %v3344 = vmul.f32 %v3224, %v3303
        %v3345 = vmul.f32 %v3235, %v3313
        %v3346 = vmul.f32 %v3246, %v3314
        %v3347 = vmul.f32 %v3257, %v3315
        %v3348 = vmul.f32 %v3268, %v3316
        %v3349 = vmul.f32 %v3279, %v3317
        %v3350 = vmul.f32 %v3290, %v3318
        %v3351 = vmul.f32 %v3301, %v3319
        %v3368 = vrot.slane %v3337, 7
        %v3369 = vsel %vm2505, %v3368, %v3336
        %v3370 = vrot.slane %v3338, 6
        %v3371 = vsel %vm2507, %v3370, %v3369
        %v3372 = vrot.slane %v3339, 5
        %v3373 = vsel %vm2509, %v3372, %v3371
        %v3374 = vrot.slane %v3340, 4
        %v3375 = vsel %vm2511, %v3374, %v3373
        %v3376 = vrot.slane %v3341, 3
        %v3377 = vsel %vm2513, %v3376, %v3375
        %v3378 = vrot.slane %v3342, 2
        %v3379 = vsel %vm2515, %v3378, %v3377
        %v3380 = vrot.slane %v3343, 1
        %v3381 = vsel %vm2517, %v3380, %v3379
        %v3382 = vrot.slane %v3345, 7
        %v3383 = vsel %vm2505, %v3382, %v3344
        %v3384 = vrot.slane %v3346, 6
        %v3385 = vsel %vm2507, %v3384, %v3383
        %v3386 = vrot.slane %v3347, 5
        %v3387 = vsel %vm2509, %v3386, %v3385
        %v3388 = vrot.slane %v3348, 4
        %v3389 = vsel %vm2511, %v3388, %v3387
        %v3390 = vrot.slane %v3349, 3
        %v3391 = vsel %vm2513, %v3390, %v3389
        %v3392 = vrot.slane %v3350, 2
        %v3393 = vsel %vm2515, %v3392, %v3391
        %v3394 = vrot.slane %v3351, 1
        %v3395 = vsel %vm2517, %v3394, %v3393
        %3398 = vst [vmem:[%s236] sm:$0xff] %v3381
        %3399 = vst [vmem:[%s236 + $0x8] sm:$0xff] %v3395
        %s3400 = sand.u32 %s142, 1
        %s3401 = scalar_lea.sflag [#allocation4], %s3400
        %s3402 = sand.u32 %s142, 1
        %s3403 = smul.addr %s3402, 16
        %s3404 = scalar_lea.vmem [#allocation3], %s3403
        // Predicated region
        $region41: #{tpu_custom_call.1} parent=39 // pred_check
          %p3405 = pneg %p152
        $region42: #{tpu_custom_call.1} parent=39 // pred_check_branch
          %3407 = sbr.rel (%p3405) target = $region44
        $region43: #{tpu_custom_call.1} parent=39 // pred_region
          %s3408 = smul.u32 2, %s19
          %3410 = vsyncadd %s3401, 0
          %s3411 = smul.addr %s3408, 8
          %s3412 = scalar_lea.hbm %s5, %s3411
          %s3413 = sshll.u32 %s3404, 4
          %s3414 = int_to_ptr.vmem [resolvable:$true] %s3413
          %s3415 = sshll.u32 %s3412, 4
          %s3416 = int_to_ptr.hbm [resolvable:$true] %s3415
          %3421 = dma.vmem_to_hbm [thread:$0]  %s3414, 256, %s3416, %s3401, 128, 128, 8
        $region44: #{tpu_custom_call.1} parent=39 // pred_fallthru
          _
      $region40: #{tpu_custom_call.1} parent=5 // pred_fallthru
        _
      %p3422 = scmp.le.s32.totalorder 2, %s14
      // Predicated region
      $region45: #{tpu_custom_call.1} parent=5 // pred_check
        %p3423 = pneg %p3422
      $region46: #{tpu_custom_call.1} parent=5 // pred_check_branch
        %3425 = sbr.rel (%p3423) target = $region48
      $region47: #{tpu_custom_call.1} parent=5 // pred_region
        %s3426 = ssub.s32 %s14, 2
        // Predicated region
        $region49: #{tpu_custom_call.1} parent=47 // pred_check
          %p3427 = pneg %p158
        $region50: #{tpu_custom_call.1} parent=47 // pred_check_branch
          %3429 = sbr.rel (%p3427) target = $region52
        $region51: #{tpu_custom_call.1} parent=47 // pred_region
          %s3430 = sand.u32 %s143, 1
          %s3431 = scalar_lea.sflag [#allocation4], %s3430
          %s3432 = sand.u32 %s143, 1
          %s3433 = smul.addr %s3432, 16
          %s3434 = scalar_lea.vmem [#allocation3], %s3433
          %3436 = dma.done %s3431, 256
        $region52: #{tpu_custom_call.1} parent=47 // pred_fallthru
          _
      $region48: #{tpu_custom_call.1} parent=5 // pred_fallthru
        _
    $region6: #{tpu_custom_call.1} parent=1 // loop_footer
      %s18 = sadd.s32 1, %s14
    $region7: #{tpu_custom_call.1} parent=1 // loop_footer_branch
      %13 = sbr.rel target = $region3
    $region8: #{tpu_custom_call.1} parent=1 // loop_exit
      _
    %3437 = vsyncpa [#allocation4], 1
    %s3438 = scalar_lea.sflag [#allocation4], 1
    %3439 = vsyncpa %s3438, 1

</llo_original>
